<compile_context>
chip_gen: v7x
topology: tpu7x:2x2x1
jax: 0.10.0
libtpu: 0.0.40
codegen_flags: <defaults>
</compile_context>

<pallas_src>
import jax
import jax.numpy as jnp
from jax import lax
from jax.experimental import pallas as pl
from jax.experimental.pallas import tpu as pltpu


def _lstm_disc_kernel(x_ref, wih_ref, whh_ref, b_ref, wl_ref, bl_ref,
                      out_ref, xp_scr, h_hist, h_scr, c_scr):
    """LSTM recurrence + batched Linear->Sigmoid head, in one kernel.

    x_ref   : (T*B_pad, D)        time-major, batch-padded, flattened input
    wih_ref : (D, 4*H_pad)        input->gates weights (gate order i, f, g, o)
    whh_ref : (H_pad, 4*H_pad)    hidden->gates weights
    b_ref   : (1, 4*H_pad)        combined gate bias (b_ih + b_hh)
    wl_ref  : (1, 1, H_pad)       linear head weight (row vector)
    bl_ref  : (1,)  SMEM          linear head bias (scalar)
    out_ref : (T, B_pad)          per-timestep sigmoid probability (lane-dense)
    xp_scr  : (T*B_pad, 4*H_pad)  hoisted input-projection scratch
    h_hist  : (T, B_pad, H_pad)   hidden-state history scratch
    h_scr   : (B_pad, H_pad)      hidden state
    c_scr   : (B_pad, H_pad)      cell state
    """
    T, B = out_ref.shape          # T, B_pad  (static)
    H = h_scr.shape[1]            # H_pad     (static, multiple of 128)

    # --- Hoisted input projection: one big GEMM, bias folded in. -------------
    xp_scr[...] = (
        jnp.dot(x_ref[...], wih_ref[...], preferred_element_type=jnp.float32)
        + b_ref[...]
    )

    # h_0 = c_0 = 0 (matches torch.zeros in the module's forward).
    h_scr[...] = jnp.zeros_like(h_scr)
    c_scr[...] = jnp.zeros_like(c_scr)

    # --- Recurrence: only h @ W_hh + gate elementwise math per step. ---------
    def step(t, _):
        row = pl.multiple_of(t * B, B)          # sublane-aligned (B multiple of 8)
        gates = xp_scr[pl.ds(row, B), :] + jnp.dot(
            h_scr[...], whh_ref[...], preferred_element_type=jnp.float32
        )                                        # (B_pad, 4*H_pad)

        # H is a multiple of 128, so these slices are vreg-boundary aligned.
        i = jax.nn.sigmoid(gates[:, 0 * H:1 * H])
        f = jax.nn.sigmoid(gates[:, 1 * H:2 * H])
        g = jnp.tanh(gates[:, 2 * H:3 * H])
        o = jax.nn.sigmoid(gates[:, 3 * H:4 * H])

        c_new = f * c_scr[...] + i * g
        h_new = o * jnp.tanh(c_new)
        c_scr[...] = c_new
        h_scr[...] = h_new
        h_hist[t] = h_new                        # store history for batched head
        return 0

    lax.fori_loop(0, T, step, 0, unroll=True)

    # --- Batched Linear(H -> 1) + Sigmoid head, lane-dense (T, B_pad) store. -
    logits = jnp.sum(h_hist[...] * wl_ref[...], axis=-1) + bl_ref[0]   # (T, B_pad)
    out_ref[...] = jax.nn.sigmoid(logits).astype(out_ref.dtype)


def _round_up(n, m):
    return ((n + m - 1) // m) * m


def lstm_discriminator_forward(x, w_ih, w_hh, b_gates, w_lin, b_lin, hid_dim):
    """x: (B, T, D) float32 -> (B, T, 1) float32."""
    B, T, D = x.shape
    H = hid_dim
    B_pad = max(8, _round_up(B, 8))        # f32 sublane multiple
    H_pad = max(128, _round_up(H, 128))    # lane / vreg-boundary aligned gates

    # Zero-pad each gate block of the weights/bias from H to H_pad columns and
    # (for W_hh) from H to H_pad rows. Padded hidden units stay exactly zero
    # through the recurrence (zero pre-activation -> c stays 0, h = 0.5*tanh(0)
    # = 0) and have zero head weight, so results are unchanged.
    def pad_gate_cols(w, rows_pad):
        rows = w.shape[0]
        w4 = w.reshape(rows, 4, H)
        w4 = jnp.pad(w4, ((0, rows_pad - rows), (0, 0), (0, H_pad - H)))
        return w4.reshape(rows_pad, 4 * H_pad)

    wih_p = pad_gate_cols(w_ih, D)                              # (D, 4*H_pad)
    whh_p = pad_gate_cols(w_hh, H_pad)                          # (H_pad, 4*H_pad)
    b_p = pad_gate_cols(b_gates.reshape(1, 4 * H), 1)           # (1, 4*H_pad)
    wl_p = jnp.pad(w_lin.reshape(1, 1, H),
                   ((0, 0), (0, 0), (0, H_pad - H)))            # (1, 1, H_pad)
    bl = b_lin.reshape(1).astype(jnp.float32)                   # (1,) scalar in SMEM

    # Time-major, batch-padded, flattened so the input projection is one GEMM.
    x_tm = jnp.transpose(x, (1, 0, 2))                          # (T, B, D)
    x_tm = jnp.pad(x_tm, ((0, 0), (0, B_pad - B), (0, 0)))      # (T, B_pad, D)
    x_flat = x_tm.reshape(T * B_pad, D)

    vmem = pl.BlockSpec(memory_space=pltpu.MemorySpace.VMEM)
    smem = pl.BlockSpec(memory_space=pltpu.MemorySpace.SMEM)

    out_tb = pl.pallas_call(
        _lstm_disc_kernel,
        out_shape=jax.ShapeDtypeStruct((T, B_pad), jnp.float32),
        in_specs=[vmem, vmem, vmem, vmem, vmem, smem],
        out_specs=vmem,
        scratch_shapes=[
            pltpu.VMEM((T * B_pad, 4 * H_pad), jnp.float32),   # x_proj
            pltpu.VMEM((T, B_pad, H_pad), jnp.float32),        # hidden history
            pltpu.VMEM((B_pad, H_pad), jnp.float32),           # h state
            pltpu.VMEM((B_pad, H_pad), jnp.float32),           # c state
        ],
    )(x_flat, wih_p, whh_p, b_p, wl_p, bl)

    # (T, B_pad) -> (B, T, 1), dropping batch padding, in the wrapper.
    return jnp.transpose(out_tb[:, :B], (1, 0))[..., None]


def _reference_forward(x, w_ih, w_hh, b_gates, w_lin, b_lin, hid_dim):
    """Pure-JAX reference for validation (matches torch LSTM gate order i,f,g,o)."""
    B, T, D = x.shape
    H = hid_dim

    def step(carry, x_t):
        h, c = carry
        gates = x_t @ w_ih + h @ w_hh + b_gates
        i = jax.nn.sigmoid(gates[:, 0 * H:1 * H])
        f = jax.nn.sigmoid(gates[:, 1 * H:2 * H])
        g = jnp.tanh(gates[:, 2 * H:3 * H])
        o = jax.nn.sigmoid(gates[:, 3 * H:4 * H])
        c = f * c + i * g
        h = o * jnp.tanh(c)
        y = jax.nn.sigmoid(h @ w_lin + b_lin.reshape(1, 1))
        return (h, c), y

    init = (jnp.zeros((B, H), jnp.float32), jnp.zeros((B, H), jnp.float32))
    _, ys = lax.scan(step, init, jnp.transpose(x, (1, 0, 2)))
    return jnp.transpose(ys, (1, 0, 2))


if __name__ == "__main__":
    # Small shapes consistent with the module: input (batch, seq_len, in_dim).
    B, T, D, H = 2, 8, 4, 32   # batch=2, seq=8, in_dim=4, hid_dim=32, out_dim=1

    key = jax.random.PRNGKey(0)
    k_x, k_wih, k_whh, k_b, k_wl, k_bl = jax.random.split(key, 6)

    x = jax.random.normal(k_x, (B, T, D), jnp.float32)

    # Deterministic parameter init (uniform, torch-LSTM-style scale 1/sqrt(H)).
    scale = 1.0 / jnp.sqrt(jnp.float32(H))
    w_ih = jax.random.uniform(k_wih, (D, 4 * H), jnp.float32, -scale, scale)
    w_hh = jax.random.uniform(k_whh, (H, 4 * H), jnp.float32, -scale, scale)
    b_gates = jax.random.uniform(k_b, (4 * H,), jnp.float32, -scale, scale)  # b_ih + b_hh
    w_lin = jax.random.uniform(k_wl, (H, 1), jnp.float32, -scale, scale)
    b_lin = jax.random.uniform(k_bl, (1,), jnp.float32, -scale, scale)

    out = lstm_discriminator_forward(x, w_ih, w_hh, b_gates, w_lin, b_lin, H)
    out = jax.block_until_ready(out)

    ref = _reference_forward(x, w_ih, w_hh, b_gates, w_lin, b_lin, H)
    assert out.shape == (B, T, 1), out.shape
    assert jnp.allclose(out, ref, atol=1e-5, rtol=1e-5), "kernel / reference mismatch"

    print("KERNEL_OK")
</pallas_src>

<mosaic_0001>
module attributes {stable_mosaic.version = 11 : i64} {
  func.func @_lstm_disc_kernel(%arg0: memref<64x4xf32, #tpu.memory_space<vmem>>, %arg1: memref<4x512xf32, #tpu.memory_space<vmem>>, %arg2: memref<128x512xf32, #tpu.memory_space<vmem>>, %arg3: memref<1x512xf32, #tpu.memory_space<vmem>>, %arg4: memref<1x1x128xf32, #tpu.memory_space<vmem>>, %arg5: memref<1xf32, #tpu.memory_space<smem>>, %arg6: memref<8x8xf32, #tpu.memory_space<vmem>>, %arg7: memref<64x512xf32, #tpu.memory_space<vmem>>, %arg8: memref<8x8x128xf32, #tpu.memory_space<vmem>>, %arg9: memref<8x128xf32, #tpu.memory_space<vmem>>, %arg10: memref<8x128xf32, #tpu.memory_space<vmem>>) attributes {dimension_semantics = [], scalar_prefetch = 0 : i64, scratch_operands = 4 : i64, tpu.core_type = #tpu.core_type<tc>} {
    %c0 = arith.constant 0 : index
    %c0_0 = arith.constant 0 : index
    %0 = vector.load %arg0[%c0, %c0_0] : memref<64x4xf32, #tpu.memory_space<vmem>>, vector<64x4xf32>
    %c0_1 = arith.constant 0 : index
    %c0_2 = arith.constant 0 : index
    %1 = vector.load %arg1[%c0_1, %c0_2] : memref<4x512xf32, #tpu.memory_space<vmem>>, vector<4x512xf32>
    %cst = arith.constant dense<0.000000e+00> : vector<64x512xf32>
    %2 = tpu.matmul %0, %1, %cst {dimension_numbers = #tpu.dot_dimension_numbers<[1], [0], [0], [1], [0, 0, 1, 1], [], []>} : vector<64x4xf32>, vector<4x512xf32>, vector<64x512xf32> -> vector<64x512xf32>
    %c0_3 = arith.constant 0 : index
    %c0_4 = arith.constant 0 : index
    %3 = vector.load %arg3[%c0_3, %c0_4] : memref<1x512xf32, #tpu.memory_space<vmem>>, vector<1x512xf32>
    %4 = vector.broadcast %3 : vector<1x512xf32> to vector<64x512xf32>
    %5 = arith.addf %2, %4 : vector<64x512xf32>
    %c0_5 = arith.constant 0 : index
    %c0_6 = arith.constant 0 : index
    %6 = vector.load %arg7[%c0_5, %c0_6] : memref<64x512xf32, #tpu.memory_space<vmem>>, vector<64x512xf32>
    tpu.vector_store %arg7[%c0_5, %c0_6], %5 {strides = array<i32>} : memref<64x512xf32, #tpu.memory_space<vmem>>, vector<64x512xf32>,
    %cst_7 = arith.constant 0.000000e+00 : f32
    %7 = vector.broadcast %cst_7 : f32 to vector<8x128xf32>
    %c0_8 = arith.constant 0 : index
    %c0_9 = arith.constant 0 : index
    %8 = vector.load %arg9[%c0_8, %c0_9] : memref<8x128xf32, #tpu.memory_space<vmem>>, vector<8x128xf32>
    tpu.vector_store %arg9[%c0_8, %c0_9], %7 {strides = array<i32>} : memref<8x128xf32, #tpu.memory_space<vmem>>, vector<8x128xf32>,
    %cst_10 = arith.constant 0.000000e+00 : f32
    %9 = vector.broadcast %cst_10 : f32 to vector<8x128xf32>
    %c0_11 = arith.constant 0 : index
    %c0_12 = arith.constant 0 : index
    %10 = vector.load %arg10[%c0_11, %c0_12] : memref<8x128xf32, #tpu.memory_space<vmem>>, vector<8x128xf32>
    tpu.vector_store %arg10[%c0_11, %c0_12], %9 {strides = array<i32>} : memref<8x128xf32, #tpu.memory_space<vmem>>, vector<8x128xf32>,
    %c0_i32 = arith.constant 0 : i32
    %c8_i32 = arith.constant 8 : i32
    %11 = arith.muli %c0_i32, %c8_i32 : i32
    %12 = tpu.assume_multiple %11, 8 : i32
    %13 = arith.index_cast %12 : i32 to index
    %c0_13 = arith.constant 0 : index
    %14 = vector.load %arg7[%13, %c0_13] : memref<64x512xf32, #tpu.memory_space<vmem>>, vector<8x512xf32>
    %c0_14 = arith.constant 0 : index
    %c0_15 = arith.constant 0 : index
    %15 = vector.load %arg9[%c0_14, %c0_15] : memref<8x128xf32, #tpu.memory_space<vmem>>, vector<8x128xf32>
    %c0_16 = arith.constant 0 : index
    %c0_17 = arith.constant 0 : index
    %16 = vector.load %arg2[%c0_16, %c0_17] : memref<128x512xf32, #tpu.memory_space<vmem>>, vector<128x512xf32>
    %cst_18 = arith.constant dense<0.000000e+00> : vector<8x512xf32>
    %17 = tpu.matmul %15, %16, %cst_18 {dimension_numbers = #tpu.dot_dimension_numbers<[1], [0], [0], [1], [0, 0, 1, 1], [], []>} : vector<8x128xf32>, vector<128x512xf32>, vector<8x512xf32> -> vector<8x512xf32>
    %18 = arith.addf %14, %17 : vector<8x512xf32>
    %19 = vector.extract_strided_slice %18 {offsets = [0, 0], sizes = [8, 128], strides = [1, 1]} : vector<8x512xf32> to vector<8x128xf32>
    %20 = arith.negf %19 : vector<8x128xf32>
    %21 = math.exp %20 : vector<8x128xf32>
    %cst_19 = arith.constant 1.000000e+00 : f32
    %22 = vector.broadcast %cst_19 : f32 to vector<8x128xf32>
    %23 = arith.addf %22, %21 : vector<8x128xf32>
    %24 = arith.divf %22, %23 : vector<8x128xf32>
    %25 = vector.extract_strided_slice %18 {offsets = [0, 128], sizes = [8, 128], strides = [1, 1]} : vector<8x512xf32> to vector<8x128xf32>
    %26 = arith.negf %25 : vector<8x128xf32>
    %27 = math.exp %26 : vector<8x128xf32>
    %cst_20 = arith.constant 1.000000e+00 : f32
    %28 = vector.broadcast %cst_20 : f32 to vector<8x128xf32>
    %29 = arith.addf %28, %27 : vector<8x128xf32>
    %30 = arith.divf %28, %29 : vector<8x128xf32>
    %31 = vector.extract_strided_slice %18 {offsets = [0, 256], sizes = [8, 128], strides = [1, 1]} : vector<8x512xf32> to vector<8x128xf32>
    %32 = math.tanh %31 : vector<8x128xf32>
    %33 = vector.extract_strided_slice %18 {offsets = [0, 384], sizes = [8, 128], strides = [1, 1]} : vector<8x512xf32> to vector<8x128xf32>
    %34 = arith.negf %33 : vector<8x128xf32>
    %35 = math.exp %34 : vector<8x128xf32>
    %cst_21 = arith.constant 1.000000e+00 : f32
    %36 = vector.broadcast %cst_21 : f32 to vector<8x128xf32>
    %37 = arith.addf %36, %35 : vector<8x128xf32>
    %38 = arith.divf %36, %37 : vector<8x128xf32>
    %c0_22 = arith.constant 0 : index
    %c0_23 = arith.constant 0 : index
    %39 = vector.load %arg10[%c0_22, %c0_23] : memref<8x128xf32, #tpu.memory_space<vmem>>, vector<8x128xf32>
    %40 = arith.mulf %30, %39 : vector<8x128xf32>
    %41 = arith.mulf %24, %32 : vector<8x128xf32>
    %42 = arith.addf %40, %41 : vector<8x128xf32>
    %43 = math.tanh %42 : vector<8x128xf32>
    %44 = arith.mulf %38, %43 : vector<8x128xf32>
    %c0_24 = arith.constant 0 : index
    %c0_25 = arith.constant 0 : index
    %45 = vector.load %arg10[%c0_24, %c0_25] : memref<8x128xf32, #tpu.memory_space<vmem>>, vector<8x128xf32>
    tpu.vector_store %arg10[%c0_24, %c0_25], %42 {strides = array<i32>} : memref<8x128xf32, #tpu.memory_space<vmem>>, vector<8x128xf32>,
    %c0_26 = arith.constant 0 : index
    %c0_27 = arith.constant 0 : index
    %46 = vector.load %arg9[%c0_26, %c0_27] : memref<8x128xf32, #tpu.memory_space<vmem>>, vector<8x128xf32>
    tpu.vector_store %arg9[%c0_26, %c0_27], %44 {strides = array<i32>} : memref<8x128xf32, #tpu.memory_space<vmem>>, vector<8x128xf32>,
    %47 = arith.index_cast %c0_i32 : i32 to index
    %c0_28 = arith.constant 0 : index
    %c0_29 = arith.constant 0 : index
    %48 = vector.load %arg8[%47, %c0_28, %c0_29] : memref<8x8x128xf32, #tpu.memory_space<vmem>>, vector<1x8x128xf32>
    %49 = vector.shape_cast %48 : vector<1x8x128xf32> to vector<8x128xf32>
    %50 = vector.shape_cast %44 : vector<8x128xf32> to vector<1x8x128xf32>
    tpu.vector_store %arg8[%47, %c0_28, %c0_29], %50 {strides = array<i32>} : memref<8x8x128xf32, #tpu.memory_space<vmem>>, vector<1x8x128xf32>,
    %c1_i32 = arith.constant 1 : i32
    %c8_i32_30 = arith.constant 8 : i32
    %51 = arith.muli %c1_i32, %c8_i32_30 : i32
    %52 = tpu.assume_multiple %51, 8 : i32
    %53 = arith.index_cast %52 : i32 to index
    %c0_31 = arith.constant 0 : index
    %54 = vector.load %arg7[%53, %c0_31] : memref<64x512xf32, #tpu.memory_space<vmem>>, vector<8x512xf32>
    %c0_32 = arith.constant 0 : index
    %c0_33 = arith.constant 0 : index
    %55 = vector.load %arg9[%c0_32, %c0_33] : memref<8x128xf32, #tpu.memory_space<vmem>>, vector<8x128xf32>
    %c0_34 = arith.constant 0 : index
    %c0_35 = arith.constant 0 : index
    %56 = vector.load %arg2[%c0_34, %c0_35] : memref<128x512xf32, #tpu.memory_space<vmem>>, vector<128x512xf32>
    %cst_36 = arith.constant dense<0.000000e+00> : vector<8x512xf32>
    %57 = tpu.matmul %55, %56, %cst_36 {dimension_numbers = #tpu.dot_dimension_numbers<[1], [0], [0], [1], [0, 0, 1, 1], [], []>} : vector<8x128xf32>, vector<128x512xf32>, vector<8x512xf32> -> vector<8x512xf32>
    %58 = arith.addf %54, %57 : vector<8x512xf32>
    %59 = vector.extract_strided_slice %58 {offsets = [0, 0], sizes = [8, 128], strides = [1, 1]} : vector<8x512xf32> to vector<8x128xf32>
    %60 = arith.negf %59 : vector<8x128xf32>
    %61 = math.exp %60 : vector<8x128xf32>
    %cst_37 = arith.constant 1.000000e+00 : f32
    %62 = vector.broadcast %cst_37 : f32 to vector<8x128xf32>
    %63 = arith.addf %62, %61 : vector<8x128xf32>
    %64 = arith.divf %62, %63 : vector<8x128xf32>
    %65 = vector.extract_strided_slice %58 {offsets = [0, 128], sizes = [8, 128], strides = [1, 1]} : vector<8x512xf32> to vector<8x128xf32>
    %66 = arith.negf %65 : vector<8x128xf32>
    %67 = math.exp %66 : vector<8x128xf32>
    %cst_38 = arith.constant 1.000000e+00 : f32
    %68 = vector.broadcast %cst_38 : f32 to vector<8x128xf32>
    %69 = arith.addf %68, %67 : vector<8x128xf32>
    %70 = arith.divf %68, %69 : vector<8x128xf32>
    %71 = vector.extract_strided_slice %58 {offsets = [0, 256], sizes = [8, 128], strides = [1, 1]} : vector<8x512xf32> to vector<8x128xf32>
    %72 = math.tanh %71 : vector<8x128xf32>
    %73 = vector.extract_strided_slice %58 {offsets = [0, 384], sizes = [8, 128], strides = [1, 1]} : vector<8x512xf32> to vector<8x128xf32>
    %74 = arith.negf %73 : vector<8x128xf32>
    %75 = math.exp %74 : vector<8x128xf32>
    %cst_39 = arith.constant 1.000000e+00 : f32
    %76 = vector.broadcast %cst_39 : f32 to vector<8x128xf32>
    %77 = arith.addf %76, %75 : vector<8x128xf32>
    %78 = arith.divf %76, %77 : vector<8x128xf32>
    %c0_40 = arith.constant 0 : index
    %c0_41 = arith.constant 0 : index
    %79 = vector.load %arg10[%c0_40, %c0_41] : memref<8x128xf32, #tpu.memory_space<vmem>>, vector<8x128xf32>
    %80 = arith.mulf %70, %79 : vector<8x128xf32>
    %81 = arith.mulf %64, %72 : vector<8x128xf32>
    %82 = arith.addf %80, %81 : vector<8x128xf32>
    %83 = math.tanh %82 : vector<8x128xf32>
    %84 = arith.mulf %78, %83 : vector<8x128xf32>
    %c0_42 = arith.constant 0 : index
    %c0_43 = arith.constant 0 : index
    %85 = vector.load %arg10[%c0_42, %c0_43] : memref<8x128xf32, #tpu.memory_space<vmem>>, vector<8x128xf32>
    tpu.vector_store %arg10[%c0_42, %c0_43], %82 {strides = array<i32>} : memref<8x128xf32, #tpu.memory_space<vmem>>, vector<8x128xf32>,
    %c0_44 = arith.constant 0 : index
    %c0_45 = arith.constant 0 : index
    %86 = vector.load %arg9[%c0_44, %c0_45] : memref<8x128xf32, #tpu.memory_space<vmem>>, vector<8x128xf32>
    tpu.vector_store %arg9[%c0_44, %c0_45], %84 {strides = array<i32>} : memref<8x128xf32, #tpu.memory_space<vmem>>, vector<8x128xf32>,
    %87 = arith.index_cast %c1_i32 : i32 to index
    %c0_46 = arith.constant 0 : index
    %c0_47 = arith.constant 0 : index
    %88 = vector.load %arg8[%87, %c0_46, %c0_47] : memref<8x8x128xf32, #tpu.memory_space<vmem>>, vector<1x8x128xf32>
    %89 = vector.shape_cast %88 : vector<1x8x128xf32> to vector<8x128xf32>
    %90 = vector.shape_cast %84 : vector<8x128xf32> to vector<1x8x128xf32>
    tpu.vector_store %arg8[%87, %c0_46, %c0_47], %90 {strides = array<i32>} : memref<8x8x128xf32, #tpu.memory_space<vmem>>, vector<1x8x128xf32>,
    %c2_i32 = arith.constant 2 : i32
    %c8_i32_48 = arith.constant 8 : i32
    %91 = arith.muli %c2_i32, %c8_i32_48 : i32
    %92 = tpu.assume_multiple %91, 8 : i32
    %93 = arith.index_cast %92 : i32 to index
    %c0_49 = arith.constant 0 : index
    %94 = vector.load %arg7[%93, %c0_49] : memref<64x512xf32, #tpu.memory_space<vmem>>, vector<8x512xf32>
    %c0_50 = arith.constant 0 : index
    %c0_51 = arith.constant 0 : index
    %95 = vector.load %arg9[%c0_50, %c0_51] : memref<8x128xf32, #tpu.memory_space<vmem>>, vector<8x128xf32>
    %c0_52 = arith.constant 0 : index
    %c0_53 = arith.constant 0 : index
    %96 = vector.load %arg2[%c0_52, %c0_53] : memref<128x512xf32, #tpu.memory_space<vmem>>, vector<128x512xf32>
    %cst_54 = arith.constant dense<0.000000e+00> : vector<8x512xf32>
    %97 = tpu.matmul %95, %96, %cst_54 {dimension_numbers = #tpu.dot_dimension_numbers<[1], [0], [0], [1], [0, 0, 1, 1], [], []>} : vector<8x128xf32>, vector<128x512xf32>, vector<8x512xf32> -> vector<8x512xf32>
    %98 = arith.addf %94, %97 : vector<8x512xf32>
    %99 = vector.extract_strided_slice %98 {offsets = [0, 0], sizes = [8, 128], strides = [1, 1]} : vector<8x512xf32> to vector<8x128xf32>
    %100 = arith.negf %99 : vector<8x128xf32>
    %101 = math.exp %100 : vector<8x128xf32>
    %cst_55 = arith.constant 1.000000e+00 : f32
    %102 = vector.broadcast %cst_55 : f32 to vector<8x128xf32>
    %103 = arith.addf %102, %101 : vector<8x128xf32>
    %104 = arith.divf %102, %103 : vector<8x128xf32>
    %105 = vector.extract_strided_slice %98 {offsets = [0, 128], sizes = [8, 128], strides = [1, 1]} : vector<8x512xf32> to vector<8x128xf32>
    %106 = arith.negf %105 : vector<8x128xf32>
    %107 = math.exp %106 : vector<8x128xf32>
    %cst_56 = arith.constant 1.000000e+00 : f32
    %108 = vector.broadcast %cst_56 : f32 to vector<8x128xf32>
    %109 = arith.addf %108, %107 : vector<8x128xf32>
    %110 = arith.divf %108, %109 : vector<8x128xf32>
    %111 = vector.extract_strided_slice %98 {offsets = [0, 256], sizes = [8, 128], strides = [1, 1]} : vector<8x512xf32> to vector<8x128xf32>
    %112 = math.tanh %111 : vector<8x128xf32>
    %113 = vector.extract_strided_slice %98 {offsets = [0, 384], sizes = [8, 128], strides = [1, 1]} : vector<8x512xf32> to vector<8x128xf32>
    %114 = arith.negf %113 : vector<8x128xf32>
    %115 = math.exp %114 : vector<8x128xf32>
    %cst_57 = arith.constant 1.000000e+00 : f32
    %116 = vector.broadcast %cst_57 : f32 to vector<8x128xf32>
    %117 = arith.addf %116, %115 : vector<8x128xf32>
    %118 = arith.divf %116, %117 : vector<8x128xf32>
    %c0_58 = arith.constant 0 : index
    %c0_59 = arith.constant 0 : index
    %119 = vector.load %arg10[%c0_58, %c0_59] : memref<8x128xf32, #tpu.memory_space<vmem>>, vector<8x128xf32>
    %120 = arith.mulf %110, %119 : vector<8x128xf32>
    %121 = arith.mulf %104, %112 : vector<8x128xf32>
    %122 = arith.addf %120, %121 : vector<8x128xf32>
    %123 = math.tanh %122 : vector<8x128xf32>
    %124 = arith.mulf %118, %123 : vector<8x128xf32>
    %c0_60 = arith.constant 0 : index
    %c0_61 = arith.constant 0 : index
    %125 = vector.load %arg10[%c0_60, %c0_61] : memref<8x128xf32, #tpu.memory_space<vmem>>, vector<8x128xf32>
    tpu.vector_store %arg10[%c0_60, %c0_61], %122 {strides = array<i32>} : memref<8x128xf32, #tpu.memory_space<vmem>>, vector<8x128xf32>,
    %c0_62 = arith.constant 0 : index
    %c0_63 = arith.constant 0 : index
    %126 = vector.load %arg9[%c0_62, %c0_63] : memref<8x128xf32, #tpu.memory_space<vmem>>, vector<8x128xf32>
    tpu.vector_store %arg9[%c0_62, %c0_63], %124 {strides = array<i32>} : memref<8x128xf32, #tpu.memory_space<vmem>>, vector<8x128xf32>,
    %127 = arith.index_cast %c2_i32 : i32 to index
    %c0_64 = arith.constant 0 : index
    %c0_65 = arith.constant 0 : index
    %128 = vector.load %arg8[%127, %c0_64, %c0_65] : memref<8x8x128xf32, #tpu.memory_space<vmem>>, vector<1x8x128xf32>
    %129 = vector.shape_cast %128 : vector<1x8x128xf32> to vector<8x128xf32>
    %130 = vector.shape_cast %124 : vector<8x128xf32> to vector<1x8x128xf32>
    tpu.vector_store %arg8[%127, %c0_64, %c0_65], %130 {strides = array<i32>} : memref<8x8x128xf32, #tpu.memory_space<vmem>>, vector<1x8x128xf32>,
    %c3_i32 = arith.constant 3 : i32
    %c8_i32_66 = arith.constant 8 : i32
    %131 = arith.muli %c3_i32, %c8_i32_66 : i32
    %132 = tpu.assume_multiple %131, 8 : i32
    %133 = arith.index_cast %132 : i32 to index
    %c0_67 = arith.constant 0 : index
    %134 = vector.load %arg7[%133, %c0_67] : memref<64x512xf32, #tpu.memory_space<vmem>>, vector<8x512xf32>
    %c0_68 = arith.constant 0 : index
    %c0_69 = arith.constant 0 : index
    %135 = vector.load %arg9[%c0_68, %c0_69] : memref<8x128xf32, #tpu.memory_space<vmem>>, vector<8x128xf32>
    %c0_70 = arith.constant 0 : index
    %c0_71 = arith.constant 0 : index
    %136 = vector.load %arg2[%c0_70, %c0_71] : memref<128x512xf32, #tpu.memory_space<vmem>>, vector<128x512xf32>
    %cst_72 = arith.constant dense<0.000000e+00> : vector<8x512xf32>
    %137 = tpu.matmul %135, %136, %cst_72 {dimension_numbers = #tpu.dot_dimension_numbers<[1], [0], [0], [1], [0, 0, 1, 1], [], []>} : vector<8x128xf32>, vector<128x512xf32>, vector<8x512xf32> -> vector<8x512xf32>
    %138 = arith.addf %134, %137 : vector<8x512xf32>
    %139 = vector.extract_strided_slice %138 {offsets = [0, 0], sizes = [8, 128], strides = [1, 1]} : vector<8x512xf32> to vector<8x128xf32>
    %140 = arith.negf %139 : vector<8x128xf32>
    %141 = math.exp %140 : vector<8x128xf32>
    %cst_73 = arith.constant 1.000000e+00 : f32
    %142 = vector.broadcast %cst_73 : f32 to vector<8x128xf32>
    %143 = arith.addf %142, %141 : vector<8x128xf32>
    %144 = arith.divf %142, %143 : vector<8x128xf32>
    %145 = vector.extract_strided_slice %138 {offsets = [0, 128], sizes = [8, 128], strides = [1, 1]} : vector<8x512xf32> to vector<8x128xf32>
    %146 = arith.negf %145 : vector<8x128xf32>
    %147 = math.exp %146 : vector<8x128xf32>
    %cst_74 = arith.constant 1.000000e+00 : f32
    %148 = vector.broadcast %cst_74 : f32 to vector<8x128xf32>
    %149 = arith.addf %148, %147 : vector<8x128xf32>
    %150 = arith.divf %148, %149 : vector<8x128xf32>
    %151 = vector.extract_strided_slice %138 {offsets = [0, 256], sizes = [8, 128], strides = [1, 1]} : vector<8x512xf32> to vector<8x128xf32>
    %152 = math.tanh %151 : vector<8x128xf32>
    %153 = vector.extract_strided_slice %138 {offsets = [0, 384], sizes = [8, 128], strides = [1, 1]} : vector<8x512xf32> to vector<8x128xf32>
    %154 = arith.negf %153 : vector<8x128xf32>
    %155 = math.exp %154 : vector<8x128xf32>
    %cst_75 = arith.constant 1.000000e+00 : f32
    %156 = vector.broadcast %cst_75 : f32 to vector<8x128xf32>
    %157 = arith.addf %156, %155 : vector<8x128xf32>
    %158 = arith.divf %156, %157 : vector<8x128xf32>
    %c0_76 = arith.constant 0 : index
    %c0_77 = arith.constant 0 : index
    %159 = vector.load %arg10[%c0_76, %c0_77] : memref<8x128xf32, #tpu.memory_space<vmem>>, vector<8x128xf32>
    %160 = arith.mulf %150, %159 : vector<8x128xf32>
    %161 = arith.mulf %144, %152 : vector<8x128xf32>
    %162 = arith.addf %160, %161 : vector<8x128xf32>
    %163 = math.tanh %162 : vector<8x128xf32>
    %164 = arith.mulf %158, %163 : vector<8x128xf32>
    %c0_78 = arith.constant 0 : index
    %c0_79 = arith.constant 0 : index
    %165 = vector.load %arg10[%c0_78, %c0_79] : memref<8x128xf32, #tpu.memory_space<vmem>>, vector<8x128xf32>
    tpu.vector_store %arg10[%c0_78, %c0_79], %162 {strides = array<i32>} : memref<8x128xf32, #tpu.memory_space<vmem>>, vector<8x128xf32>,
    %c0_80 = arith.constant 0 : index
    %c0_81 = arith.constant 0 : index
    %166 = vector.load %arg9[%c0_80, %c0_81] : memref<8x128xf32, #tpu.memory_space<vmem>>, vector<8x128xf32>
    tpu.vector_store %arg9[%c0_80, %c0_81], %164 {strides = array<i32>} : memref<8x128xf32, #tpu.memory_space<vmem>>, vector<8x128xf32>,
    %167 = arith.index_cast %c3_i32 : i32 to index
    %c0_82 = arith.constant 0 : index
    %c0_83 = arith.constant 0 : index
    %168 = vector.load %arg8[%167, %c0_82, %c0_83] : memref<8x8x128xf32, #tpu.memory_space<vmem>>, vector<1x8x128xf32>
    %169 = vector.shape_cast %168 : vector<1x8x128xf32> to vector<8x128xf32>
    %170 = vector.shape_cast %164 : vector<8x128xf32> to vector<1x8x128xf32>
    tpu.vector_store %arg8[%167, %c0_82, %c0_83], %170 {strides = array<i32>} : memref<8x8x128xf32, #tpu.memory_space<vmem>>, vector<1x8x128xf32>,
    %c4_i32 = arith.constant 4 : i32
    %c8_i32_84 = arith.constant 8 : i32
    %171 = arith.muli %c4_i32, %c8_i32_84 : i32
    %172 = tpu.assume_multiple %171, 8 : i32
    %173 = arith.index_cast %172 : i32 to index
    %c0_85 = arith.constant 0 : index
    %174 = vector.load %arg7[%173, %c0_85] : memref<64x512xf32, #tpu.memory_space<vmem>>, vector<8x512xf32>
    %c0_86 = arith.constant 0 : index
    %c0_87 = arith.constant 0 : index
    %175 = vector.load %arg9[%c0_86, %c0_87] : memref<8x128xf32, #tpu.memory_space<vmem>>, vector<8x128xf32>
    %c0_88 = arith.constant 0 : index
    %c0_89 = arith.constant 0 : index
    %176 = vector.load %arg2[%c0_88, %c0_89] : memref<128x512xf32, #tpu.memory_space<vmem>>, vector<128x512xf32>
    %cst_90 = arith.constant dense<0.000000e+00> : vector<8x512xf32>
    %177 = tpu.matmul %175, %176, %cst_90 {dimension_numbers = #tpu.dot_dimension_numbers<[1], [0], [0], [1], [0, 0, 1, 1], [], []>} : vector<8x128xf32>, vector<128x512xf32>, vector<8x512xf32> -> vector<8x512xf32>
    %178 = arith.addf %174, %177 : vector<8x512xf32>
    %179 = vector.extract_strided_slice %178 {offsets = [0, 0], sizes = [8, 128], strides = [1, 1]} : vector<8x512xf32> to vector<8x128xf32>
    %180 = arith.negf %179 : vector<8x128xf32>
    %181 = math.exp %180 : vector<8x128xf32>
    %cst_91 = arith.constant 1.000000e+00 : f32
    %182 = vector.broadcast %cst_91 : f32 to vector<8x128xf32>
    %183 = arith.addf %182, %181 : vector<8x128xf32>
    %184 = arith.divf %182, %183 : vector<8x128xf32>
    %185 = vector.extract_strided_slice %178 {offsets = [0, 128], sizes = [8, 128], strides = [1, 1]} : vector<8x512xf32> to vector<8x128xf32>
    %186 = arith.negf %185 : vector<8x128xf32>
    %187 = math.exp %186 : vector<8x128xf32>
    %cst_92 = arith.constant 1.000000e+00 : f32
    %188 = vector.broadcast %cst_92 : f32 to vector<8x128xf32>
    %189 = arith.addf %188, %187 : vector<8x128xf32>
    %190 = arith.divf %188, %189 : vector<8x128xf32>
    %191 = vector.extract_strided_slice %178 {offsets = [0, 256], sizes = [8, 128], strides = [1, 1]} : vector<8x512xf32> to vector<8x128xf32>
    %192 = math.tanh %191 : vector<8x128xf32>
    %193 = vector.extract_strided_slice %178 {offsets = [0, 384], sizes = [8, 128], strides = [1, 1]} : vector<8x512xf32> to vector<8x128xf32>
    %194 = arith.negf %193 : vector<8x128xf32>
    %195 = math.exp %194 : vector<8x128xf32>
    %cst_93 = arith.constant 1.000000e+00 : f32
    %196 = vector.broadcast %cst_93 : f32 to vector<8x128xf32>
    %197 = arith.addf %196, %195 : vector<8x128xf32>
    %198 = arith.divf %196, %197 : vector<8x128xf32>
    %c0_94 = arith.constant 0 : index
    %c0_95 = arith.constant 0 : index
    %199 = vector.load %arg10[%c0_94, %c0_95] : memref<8x128xf32, #tpu.memory_space<vmem>>, vector<8x128xf32>
    %200 = arith.mulf %190, %199 : vector<8x128xf32>
    %201 = arith.mulf %184, %192 : vector<8x128xf32>
    %202 = arith.addf %200, %201 : vector<8x128xf32>
    %203 = math.tanh %202 : vector<8x128xf32>
    %204 = arith.mulf %198, %203 : vector<8x128xf32>
    %c0_96 = arith.constant 0 : index
    %c0_97 = arith.constant 0 : index
    %205 = vector.load %arg10[%c0_96, %c0_97] : memref<8x128xf32, #tpu.memory_space<vmem>>, vector<8x128xf32>
    tpu.vector_store %arg10[%c0_96, %c0_97], %202 {strides = array<i32>} : memref<8x128xf32, #tpu.memory_space<vmem>>, vector<8x128xf32>,
    %c0_98 = arith.constant 0 : index
    %c0_99 = arith.constant 0 : index
    %206 = vector.load %arg9[%c0_98, %c0_99] : memref<8x128xf32, #tpu.memory_space<vmem>>, vector<8x128xf32>
    tpu.vector_store %arg9[%c0_98, %c0_99], %204 {strides = array<i32>} : memref<8x128xf32, #tpu.memory_space<vmem>>, vector<8x128xf32>,
    %207 = arith.index_cast %c4_i32 : i32 to index
    %c0_100 = arith.constant 0 : index
    %c0_101 = arith.constant 0 : index
    %208 = vector.load %arg8[%207, %c0_100, %c0_101] : memref<8x8x128xf32, #tpu.memory_space<vmem>>, vector<1x8x128xf32>
    %209 = vector.shape_cast %208 : vector<1x8x128xf32> to vector<8x128xf32>
    %210 = vector.shape_cast %204 : vector<8x128xf32> to vector<1x8x128xf32>
    tpu.vector_store %arg8[%207, %c0_100, %c0_101], %210 {strides = array<i32>} : memref<8x8x128xf32, #tpu.memory_space<vmem>>, vector<1x8x128xf32>,
    %c5_i32 = arith.constant 5 : i32
    %c8_i32_102 = arith.constant 8 : i32
    %211 = arith.muli %c5_i32, %c8_i32_102 : i32
    %212 = tpu.assume_multiple %211, 8 : i32
    %213 = arith.index_cast %212 : i32 to index
    %c0_103 = arith.constant 0 : index
    %214 = vector.load %arg7[%213, %c0_103] : memref<64x512xf32, #tpu.memory_space<vmem>>, vector<8x512xf32>
    %c0_104 = arith.constant 0 : index
    %c0_105 = arith.constant 0 : index
    %215 = vector.load %arg9[%c0_104, %c0_105] : memref<8x128xf32, #tpu.memory_space<vmem>>, vector<8x128xf32>
    %c0_106 = arith.constant 0 : index
    %c0_107 = arith.constant 0 : index
    %216 = vector.load %arg2[%c0_106, %c0_107] : memref<128x512xf32, #tpu.memory_space<vmem>>, vector<128x512xf32>
    %cst_108 = arith.constant dense<0.000000e+00> : vector<8x512xf32>
    %217 = tpu.matmul %215, %216, %cst_108 {dimension_numbers = #tpu.dot_dimension_numbers<[1], [0], [0], [1], [0, 0, 1, 1], [], []>} : vector<8x128xf32>, vector<128x512xf32>, vector<8x512xf32> -> vector<8x512xf32>
    %218 = arith.addf %214, %217 : vector<8x512xf32>
    %219 = vector.extract_strided_slice %218 {offsets = [0, 0], sizes = [8, 128], strides = [1, 1]} : vector<8x512xf32> to vector<8x128xf32>
    %220 = arith.negf %219 : vector<8x128xf32>
    %221 = math.exp %220 : vector<8x128xf32>
    %cst_109 = arith.constant 1.000000e+00 : f32
    %222 = vector.broadcast %cst_109 : f32 to vector<8x128xf32>
    %223 = arith.addf %222, %221 : vector<8x128xf32>
    %224 = arith.divf %222, %223 : vector<8x128xf32>
    %225 = vector.extract_strided_slice %218 {offsets = [0, 128], sizes = [8, 128], strides = [1, 1]} : vector<8x512xf32> to vector<8x128xf32>
    %226 = arith.negf %225 : vector<8x128xf32>
    %227 = math.exp %226 : vector<8x128xf32>
    %cst_110 = arith.constant 1.000000e+00 : f32
    %228 = vector.broadcast %cst_110 : f32 to vector<8x128xf32>
    %229 = arith.addf %228, %227 : vector<8x128xf32>
    %230 = arith.divf %228, %229 : vector<8x128xf32>
    %231 = vector.extract_strided_slice %218 {offsets = [0, 256], sizes = [8, 128], strides = [1, 1]} : vector<8x512xf32> to vector<8x128xf32>
    %232 = math.tanh %231 : vector<8x128xf32>
    %233 = vector.extract_strided_slice %218 {offsets = [0, 384], sizes = [8, 128], strides = [1, 1]} : vector<8x512xf32> to vector<8x128xf32>
    %234 = arith.negf %233 : vector<8x128xf32>
    %235 = math.exp %234 : vector<8x128xf32>
    %cst_111 = arith.constant 1.000000e+00 : f32
    %236 = vector.broadcast %cst_111 : f32 to vector<8x128xf32>
    %237 = arith.addf %236, %235 : vector<8x128xf32>
    %238 = arith.divf %236, %237 : vector<8x128xf32>
    %c0_112 = arith.constant 0 : index
    %c0_113 = arith.constant 0 : index
    %239 = vector.load %arg10[%c0_112, %c0_113] : memref<8x128xf32, #tpu.memory_space<vmem>>, vector<8x128xf32>
    %240 = arith.mulf %230, %239 : vector<8x128xf32>
    %241 = arith.mulf %224, %232 : vector<8x128xf32>
    %242 = arith.addf %240, %241 : vector<8x128xf32>
    %243 = math.tanh %242 : vector<8x128xf32>
    %244 = arith.mulf %238, %243 : vector<8x128xf32>
    %c0_114 = arith.constant 0 : index
    %c0_115 = arith.constant 0 : index
    %245 = vector.load %arg10[%c0_114, %c0_115] : memref<8x128xf32, #tpu.memory_space<vmem>>, vector<8x128xf32>
    tpu.vector_store %arg10[%c0_114, %c0_115], %242 {strides = array<i32>} : memref<8x128xf32, #tpu.memory_space<vmem>>, vector<8x128xf32>,
    %c0_116 = arith.constant 0 : index
    %c0_117 = arith.constant 0 : index
    %246 = vector.load %arg9[%c0_116, %c0_117] : memref<8x128xf32, #tpu.memory_space<vmem>>, vector<8x128xf32>
    tpu.vector_store %arg9[%c0_116, %c0_117], %244 {strides = array<i32>} : memref<8x128xf32, #tpu.memory_space<vmem>>, vector<8x128xf32>,
    %247 = arith.index_cast %c5_i32 : i32 to index
    %c0_118 = arith.constant 0 : index
    %c0_119 = arith.constant 0 : index
    %248 = vector.load %arg8[%247, %c0_118, %c0_119] : memref<8x8x128xf32, #tpu.memory_space<vmem>>, vector<1x8x128xf32>
    %249 = vector.shape_cast %248 : vector<1x8x128xf32> to vector<8x128xf32>
    %250 = vector.shape_cast %244 : vector<8x128xf32> to vector<1x8x128xf32>
    tpu.vector_store %arg8[%247, %c0_118, %c0_119], %250 {strides = array<i32>} : memref<8x8x128xf32, #tpu.memory_space<vmem>>, vector<1x8x128xf32>,
    %c6_i32 = arith.constant 6 : i32
    %c8_i32_120 = arith.constant 8 : i32
    %251 = arith.muli %c6_i32, %c8_i32_120 : i32
    %252 = tpu.assume_multiple %251, 8 : i32
    %253 = arith.index_cast %252 : i32 to index
    %c0_121 = arith.constant 0 : index
    %254 = vector.load %arg7[%253, %c0_121] : memref<64x512xf32, #tpu.memory_space<vmem>>, vector<8x512xf32>
    %c0_122 = arith.constant 0 : index
    %c0_123 = arith.constant 0 : index
    %255 = vector.load %arg9[%c0_122, %c0_123] : memref<8x128xf32, #tpu.memory_space<vmem>>, vector<8x128xf32>
    %c0_124 = arith.constant 0 : index
    %c0_125 = arith.constant 0 : index
    %256 = vector.load %arg2[%c0_124, %c0_125] : memref<128x512xf32, #tpu.memory_space<vmem>>, vector<128x512xf32>
    %cst_126 = arith.constant dense<0.000000e+00> : vector<8x512xf32>
    %257 = tpu.matmul %255, %256, %cst_126 {dimension_numbers = #tpu.dot_dimension_numbers<[1], [0], [0], [1], [0, 0, 1, 1], [], []>} : vector<8x128xf32>, vector<128x512xf32>, vector<8x512xf32> -> vector<8x512xf32>
    %258 = arith.addf %254, %257 : vector<8x512xf32>
    %259 = vector.extract_strided_slice %258 {offsets = [0, 0], sizes = [8, 128], strides = [1, 1]} : vector<8x512xf32> to vector<8x128xf32>
    %260 = arith.negf %259 : vector<8x128xf32>
    %261 = math.exp %260 : vector<8x128xf32>
    %cst_127 = arith.constant 1.000000e+00 : f32
    %262 = vector.broadcast %cst_127 : f32 to vector<8x128xf32>
    %263 = arith.addf %262, %261 : vector<8x128xf32>
    %264 = arith.divf %262, %263 : vector<8x128xf32>
    %265 = vector.extract_strided_slice %258 {offsets = [0, 128], sizes = [8, 128], strides = [1, 1]} : vector<8x512xf32> to vector<8x128xf32>
    %266 = arith.negf %265 : vector<8x128xf32>
    %267 = math.exp %266 : vector<8x128xf32>
    %cst_128 = arith.constant 1.000000e+00 : f32
    %268 = vector.broadcast %cst_128 : f32 to vector<8x128xf32>
    %269 = arith.addf %268, %267 : vector<8x128xf32>
    %270 = arith.divf %268, %269 : vector<8x128xf32>
    %271 = vector.extract_strided_slice %258 {offsets = [0, 256], sizes = [8, 128], strides = [1, 1]} : vector<8x512xf32> to vector<8x128xf32>
    %272 = math.tanh %271 : vector<8x128xf32>
    %273 = vector.extract_strided_slice %258 {offsets = [0, 384], sizes = [8, 128], strides = [1, 1]} : vector<8x512xf32> to vector<8x128xf32>
    %274 = arith.negf %273 : vector<8x128xf32>
    %275 = math.exp %274 : vector<8x128xf32>
    %cst_129 = arith.constant 1.000000e+00 : f32
    %276 = vector.broadcast %cst_129 : f32 to vector<8x128xf32>
    %277 = arith.addf %276, %275 : vector<8x128xf32>
    %278 = arith.divf %276, %277 : vector<8x128xf32>
    %c0_130 = arith.constant 0 : index
    %c0_131 = arith.constant 0 : index
    %279 = vector.load %arg10[%c0_130, %c0_131] : memref<8x128xf32, #tpu.memory_space<vmem>>, vector<8x128xf32>
    %280 = arith.mulf %270, %279 : vector<8x128xf32>
    %281 = arith.mulf %264, %272 : vector<8x128xf32>
    %282 = arith.addf %280, %281 : vector<8x128xf32>
    %283 = math.tanh %282 : vector<8x128xf32>
    %284 = arith.mulf %278, %283 : vector<8x128xf32>
    %c0_132 = arith.constant 0 : index
    %c0_133 = arith.constant 0 : index
    %285 = vector.load %arg10[%c0_132, %c0_133] : memref<8x128xf32, #tpu.memory_space<vmem>>, vector<8x128xf32>
    tpu.vector_store %arg10[%c0_132, %c0_133], %282 {strides = array<i32>} : memref<8x128xf32, #tpu.memory_space<vmem>>, vector<8x128xf32>,
    %c0_134 = arith.constant 0 : index
    %c0_135 = arith.constant 0 : index
    %286 = vector.load %arg9[%c0_134, %c0_135] : memref<8x128xf32, #tpu.memory_space<vmem>>, vector<8x128xf32>
    tpu.vector_store %arg9[%c0_134, %c0_135], %284 {strides = array<i32>} : memref<8x128xf32, #tpu.memory_space<vmem>>, vector<8x128xf32>,
    %287 = arith.index_cast %c6_i32 : i32 to index
    %c0_136 = arith.constant 0 : index
    %c0_137 = arith.constant 0 : index
    %288 = vector.load %arg8[%287, %c0_136, %c0_137] : memref<8x8x128xf32, #tpu.memory_space<vmem>>, vector<1x8x128xf32>
    %289 = vector.shape_cast %288 : vector<1x8x128xf32> to vector<8x128xf32>
    %290 = vector.shape_cast %284 : vector<8x128xf32> to vector<1x8x128xf32>
    tpu.vector_store %arg8[%287, %c0_136, %c0_137], %290 {strides = array<i32>} : memref<8x8x128xf32, #tpu.memory_space<vmem>>, vector<1x8x128xf32>,
    %c7_i32 = arith.constant 7 : i32
    %c8_i32_138 = arith.constant 8 : i32
    %291 = arith.muli %c7_i32, %c8_i32_138 : i32
    %292 = tpu.assume_multiple %291, 8 : i32
    %293 = arith.index_cast %292 : i32 to index
    %c0_139 = arith.constant 0 : index
    %294 = vector.load %arg7[%293, %c0_139] : memref<64x512xf32, #tpu.memory_space<vmem>>, vector<8x512xf32>
    %c0_140 = arith.constant 0 : index
    %c0_141 = arith.constant 0 : index
    %295 = vector.load %arg9[%c0_140, %c0_141] : memref<8x128xf32, #tpu.memory_space<vmem>>, vector<8x128xf32>
    %c0_142 = arith.constant 0 : index
    %c0_143 = arith.constant 0 : index
    %296 = vector.load %arg2[%c0_142, %c0_143] : memref<128x512xf32, #tpu.memory_space<vmem>>, vector<128x512xf32>
    %cst_144 = arith.constant dense<0.000000e+00> : vector<8x512xf32>
    %297 = tpu.matmul %295, %296, %cst_144 {dimension_numbers = #tpu.dot_dimension_numbers<[1], [0], [0], [1], [0, 0, 1, 1], [], []>} : vector<8x128xf32>, vector<128x512xf32>, vector<8x512xf32> -> vector<8x512xf32>
    %298 = arith.addf %294, %297 : vector<8x512xf32>
    %299 = vector.extract_strided_slice %298 {offsets = [0, 0], sizes = [8, 128], strides = [1, 1]} : vector<8x512xf32> to vector<8x128xf32>
    %300 = arith.negf %299 : vector<8x128xf32>
    %301 = math.exp %300 : vector<8x128xf32>
    %cst_145 = arith.constant 1.000000e+00 : f32
    %302 = vector.broadcast %cst_145 : f32 to vector<8x128xf32>
    %303 = arith.addf %302, %301 : vector<8x128xf32>
    %304 = arith.divf %302, %303 : vector<8x128xf32>
    %305 = vector.extract_strided_slice %298 {offsets = [0, 128], sizes = [8, 128], strides = [1, 1]} : vector<8x512xf32> to vector<8x128xf32>
    %306 = arith.negf %305 : vector<8x128xf32>
    %307 = math.exp %306 : vector<8x128xf32>
    %cst_146 = arith.constant 1.000000e+00 : f32
    %308 = vector.broadcast %cst_146 : f32 to vector<8x128xf32>
    %309 = arith.addf %308, %307 : vector<8x128xf32>
    %310 = arith.divf %308, %309 : vector<8x128xf32>
    %311 = vector.extract_strided_slice %298 {offsets = [0, 256], sizes = [8, 128], strides = [1, 1]} : vector<8x512xf32> to vector<8x128xf32>
    %312 = math.tanh %311 : vector<8x128xf32>
    %313 = vector.extract_strided_slice %298 {offsets = [0, 384], sizes = [8, 128], strides = [1, 1]} : vector<8x512xf32> to vector<8x128xf32>
    %314 = arith.negf %313 : vector<8x128xf32>
    %315 = math.exp %314 : vector<8x128xf32>
    %cst_147 = arith.constant 1.000000e+00 : f32
    %316 = vector.broadcast %cst_147 : f32 to vector<8x128xf32>
    %317 = arith.addf %316, %315 : vector<8x128xf32>
    %318 = arith.divf %316, %317 : vector<8x128xf32>
    %c0_148 = arith.constant 0 : index
    %c0_149 = arith.constant 0 : index
    %319 = vector.load %arg10[%c0_148, %c0_149] : memref<8x128xf32, #tpu.memory_space<vmem>>, vector<8x128xf32>
    %320 = arith.mulf %310, %319 : vector<8x128xf32>
    %321 = arith.mulf %304, %312 : vector<8x128xf32>
    %322 = arith.addf %320, %321 : vector<8x128xf32>
    %323 = math.tanh %322 : vector<8x128xf32>
    %324 = arith.mulf %318, %323 : vector<8x128xf32>
    %c0_150 = arith.constant 0 : index
    %c0_151 = arith.constant 0 : index
    %325 = vector.load %arg10[%c0_150, %c0_151] : memref<8x128xf32, #tpu.memory_space<vmem>>, vector<8x128xf32>
    tpu.vector_store %arg10[%c0_150, %c0_151], %322 {strides = array<i32>} : memref<8x128xf32, #tpu.memory_space<vmem>>, vector<8x128xf32>,
    %c0_152 = arith.constant 0 : index
    %c0_153 = arith.constant 0 : index
    %326 = vector.load %arg9[%c0_152, %c0_153] : memref<8x128xf32, #tpu.memory_space<vmem>>, vector<8x128xf32>
    tpu.vector_store %arg9[%c0_152, %c0_153], %324 {strides = array<i32>} : memref<8x128xf32, #tpu.memory_space<vmem>>, vector<8x128xf32>,
    %327 = arith.index_cast %c7_i32 : i32 to index
    %c0_154 = arith.constant 0 : index
    %c0_155 = arith.constant 0 : index
    %328 = vector.load %arg8[%327, %c0_154, %c0_155] : memref<8x8x128xf32, #tpu.memory_space<vmem>>, vector<1x8x128xf32>
    %329 = vector.shape_cast %328 : vector<1x8x128xf32> to vector<8x128xf32>
    %330 = vector.shape_cast %324 : vector<8x128xf32> to vector<1x8x128xf32>
    tpu.vector_store %arg8[%327, %c0_154, %c0_155], %330 {strides = array<i32>} : memref<8x8x128xf32, #tpu.memory_space<vmem>>, vector<1x8x128xf32>,
    %c8_i32_156 = arith.constant 8 : i32
    %c0_157 = arith.constant 0 : index
    %c0_158 = arith.constant 0 : index
    %c0_159 = arith.constant 0 : index
    %331 = vector.load %arg8[%c0_157, %c0_158, %c0_159] : memref<8x8x128xf32, #tpu.memory_space<vmem>>, vector<8x8x128xf32>
    %c0_160 = arith.constant 0 : index
    %c0_161 = arith.constant 0 : index
    %c0_162 = arith.constant 0 : index
    %332 = vector.load %arg4[%c0_160, %c0_161, %c0_162] : memref<1x1x128xf32, #tpu.memory_space<vmem>>, vector<1x1x128xf32>
    %333 = vector.broadcast %332 : vector<1x1x128xf32> to vector<8x8x128xf32>
    %334 = arith.mulf %331, %333 : vector<8x8x128xf32>
    %cst_163 = arith.constant dense<0.000000e+00> : vector<8x8xf32>
    %335 = vector.multi_reduction <add>, %334, %cst_163 [2] : vector<8x8x128xf32> to vector<8x8xf32>
    %c0_164 = arith.constant 0 : index
    %336 = memref.load %arg5[%c0_164] : memref<1xf32, #tpu.memory_space<smem>>
    %337 = vector.broadcast %336 : f32 to vector<8x8xf32>
    %338 = arith.addf %335, %337 : vector<8x8xf32>
    %339 = arith.negf %338 : vector<8x8xf32>
    %340 = math.exp %339 : vector<8x8xf32>
    %cst_165 = arith.constant 1.000000e+00 : f32
    %341 = vector.broadcast %cst_165 : f32 to vector<8x8xf32>
    %342 = arith.addf %341, %340 : vector<8x8xf32>
    %343 = arith.divf %341, %342 : vector<8x8xf32>
    %c0_166 = arith.constant 0 : index
    %c0_167 = arith.constant 0 : index
    %344 = vector.load %arg6[%c0_166, %c0_167] : memref<8x8xf32, #tpu.memory_space<vmem>>, vector<8x8xf32>
    tpu.vector_store %arg6[%c0_166, %c0_167], %343 {strides = array<i32>} : memref<8x8xf32, #tpu.memory_space<vmem>>, vector<8x8xf32>,
    return
  }
}

</mosaic_0001>

<llo_original>
// kernel: tpu_custom_call.1
$region0: #{tpu_custom_call.1}
  #allocation0 [shape = 'u32[]', space=smem, size = 0x4, offset = 0x4, fixed_abs, tag = 'smem constant byte address 0x4 - core index']
  #allocation1 [shape = 'u32[144,128]{1,0:T(1,128)}', space=vmem, size = 0x12000, scoped, tag = 'internal scratch']
  #allocation2 [shape = 'f32[64,512]{1,0:T(8,128)}', space=vmem, size = 0x20000, scoped, tag = 'scratch operand']
  #allocation3 [shape = 'f32[8,8,128]{2,1,0:T(8,128)}', space=vmem, size = 0x8000, scoped, tag = 'scratch operand']
  #allocation4 [shape = 'f32[8,128]{1,0:T(8,128)}', space=vmem, size = 0x1000, scoped, tag = 'scratch operand']
  #allocation5 [shape = 'f32[8,128]{1,0:T(8,128)}', space=vmem, size = 0x1000, scoped, tag = 'scratch operand']
  #allocation6 [shape = 'f32[1]{0:T(128)S(6)}', space=smem, size = 0x200, scoped, tag = 'scoped memory for tpu_custom_call.1']
  %s0 = inlined_call_operand.vmem [shape: f32[64,4], index: 0, kind: input, shape index: {}]
  %s1 = inlined_call_operand.vmem [shape: f32[4,512], index: 1, kind: input, shape index: {}]
  %s2 = inlined_call_operand.hbm [shape: f32[128,512], index: 2, kind: input, shape index: {}]
  %s3 = inlined_call_operand.vmem [shape: f32[1,512], index: 3, kind: input, shape index: {}]
  %s4 = inlined_call_operand.vmem [shape: f32[1,1,128], index: 4, kind: input, shape index: {}]
  %s5 = inlined_call_operand.<no memory space> [shape: f32[1], index: 5, kind: input, shape index: {}]
  %s6 = inlined_call_operand.hbm [shape: f32[8,8], index: 6, kind: output, shape index: {}]
  %s7 = sld [smem:[#allocation0]]
  $region38: #{tpu_custom_call.1} parent=0
    _
  %s9 = ssub.s32 1, %s7
  %s10 = scalar_select 0, %s9, %s7
  %11 = sst [smem:[#allocation6]] %s5
  $region1: #{tpu_custom_call.1} parent=0
    #allocation7 [shape = 'u8[262144]{0}', space=vmem, size = 0x40000, scoped, tag = 'input window, operand 2, single buffered']
    #allocation8 [shape = 's32[1]{0}', space=sflag, size = 0x4, scoped, tag = 'scoped memory for tpu_custom_call.1']
    #allocation9 [shape = 's32[1]{0}', space=sflag, size = 0x4, scoped, tag = 'scoped memory for tpu_custom_call.1']
    #allocation10 [shape = 'u8[4096]{0}', space=vmem, size = 0x1000, scoped, tag = 'output window, operand 0, single buffered']
    %12 = vsyncpa [#allocation8], 0
    %13 = vsyncpa [#allocation9], 0
    // Predicated region
    $region2: #{tpu_custom_call.1} parent=1 // pred_check
      _
    $region3: #{tpu_custom_call.1} parent=1 // pred_check_branch
      %15 = sbr.rel (0) target = $region5
    $region4: #{tpu_custom_call.1} parent=1 // pred_region
      _
    $region5: #{tpu_custom_call.1} parent=1 // pred_fallthru
      _
    // Predicated region
    $region6: #{tpu_custom_call.1} parent=1 // pred_check
      _
    $region7: #{tpu_custom_call.1} parent=1 // pred_check_branch
      %17 = sbr.rel (0) target = $region9
    $region8: #{tpu_custom_call.1} parent=1 // pred_region
      _
    $region9: #{tpu_custom_call.1} parent=1 // pred_fallthru
      _
    // Predicated region
    $region10: #{tpu_custom_call.1} parent=1 // pred_check
      _
    $region11: #{tpu_custom_call.1} parent=1 // pred_check_branch
      %19 = sbr.rel (0) target = $region13
    $region12: #{tpu_custom_call.1} parent=1 // pred_region
      %s21 = ssub.s32 8192, 8192
      %22 = vsyncadd [#allocation8], %s21
      %s23 = sshll.u32 [#allocation7], 4
      %s24 = int_to_ptr.vmem [resolvable:$true] %s23
      %29 = dma.hbm_to_vmem [thread:$0]  %s2, 8192, %s24, [#allocation8], 512, 512, 32
    $region13: #{tpu_custom_call.1} parent=1 // pred_fallthru
      _
    // Predicated region
    $region14: #{tpu_custom_call.1} parent=1 // pred_check
      _
    $region15: #{tpu_custom_call.1} parent=1 // pred_check_branch
      %31 = sbr.rel (0) target = $region17
    $region16: #{tpu_custom_call.1} parent=1 // pred_region
      _
    $region17: #{tpu_custom_call.1} parent=1 // pred_fallthru
      _
    // Predicated region
    $region18: #{tpu_custom_call.1} parent=1 // pred_check
      _
    $region19: #{tpu_custom_call.1} parent=1 // pred_check_branch
      %33 = sbr.rel (0) target = $region21
    $region20: #{tpu_custom_call.1} parent=1 // pred_region
      _
    $region21: #{tpu_custom_call.1} parent=1 // pred_fallthru
      _
    // Predicated region
    $region22: #{tpu_custom_call.1} parent=1 // pred_check
      _
    $region23: #{tpu_custom_call.1} parent=1 // pred_check_branch
      %35 = sbr.rel (0) target = $region25
    $region24: #{tpu_custom_call.1} parent=1 // pred_region
      _
    $region25: #{tpu_custom_call.1} parent=1 // pred_fallthru
      _
    // Predicated region
    $region26: #{tpu_custom_call.1} parent=1 // pred_check
      _
    $region27: #{tpu_custom_call.1} parent=1 // pred_check_branch
      %37 = sbr.rel (0) target = $region29
    $region28: #{tpu_custom_call.1} parent=1 // pred_region
      %38 = dma.done [#allocation8], 8192
    $region29: #{tpu_custom_call.1} parent=1 // pred_fallthru
      _
    %v39 = vld [vmem:[%s0] sm:$0xff]
    %v40 = vld [vmem:[%s0 + $0x8] sm:$0xff]
    %v41 = vld [vmem:[%s0 + $0x10] sm:$0xff]
    %v42 = vld [vmem:[%s0 + $0x18] sm:$0xff]
    %v43 = vld [vmem:[%s0 + $0x20] sm:$0xff]
    %v44 = vld [vmem:[%s0 + $0x28] sm:$0xff]
    %v45 = vld [vmem:[%s0 + $0x30] sm:$0xff]
    %v46 = vld [vmem:[%s0 + $0x38] sm:$0xff]
    %v47 = vld [vmem:[%s1] sm:$0xff]
    %v48 = vld [vmem:[%s1 + $0x8] sm:$0xff]
    %v49 = vld [vmem:[%s3] sm:$0xf]
    %v51 = vlaneseq
    %v52 = vshrl.u32 %v51, 7
    %v53 = vsub.s32 0, %v52
    %v54 = vrot.slane %v49, %v53
    %v55 = vlaneseq
    %v56 = vshrl.u32 %v55, 7
    %v57 = vsub.s32 1, %v56
    %v58 = vrot.slane %v49, %v57
    %v59 = vlaneseq
    %v60 = vshrl.u32 %v59, 7
    %v61 = vsub.s32 2, %v60
    %v62 = vrot.slane %v49, %v61
    %v63 = vlaneseq
    %v64 = vshrl.u32 %v63, 7
    %v65 = vsub.s32 3, %v64
    %v66 = vrot.slane %v49, %v65
    %v73 = vcombine.high %v47, %v47
    %v74 = vcombine.high %v48, %v48
    %vm75 = vcmask 31744
    %v77 = vsel %vm75, %v39, 0
    %v80 = vsel %vm75, %v40, 0
    %v83 = vsel %vm75, %v41, 0
    %v86 = vsel %vm75, %v42, 0
    %v89 = vsel %vm75, %v43, 0
    %v92 = vsel %vm75, %v44, 0
    %v95 = vsel %vm75, %v45, 0
    %v98 = vsel %vm75, %v46, 0
    %vm100 = vcmask 1043456
    %v101 = vsel %vm100, %v47, 0
    %v103 = vsel %vm100, %v73, 0
    %v105 = vsel %vm100, %v48, 0
    %v107 = vsel %vm100, %v74, 0
    %109 = vmatprep.subr.mxu0 %v103
    %110 = vmatpush1.msra.mxu0 %v101
    %111 = vmatprep.subr.mxu0 0.0
    %112 = vmatpush1.msra.mxu0 0.0
    %113 = vmatprep.subr.mxu0 0.0
    %114 = vmatpush1.msra.mxu0 0.0
    %115 = vmatprep.subr.mxu0 0.0
    %116 = vmatpush1.msra.mxu0 0.0
    %117 = vmatprep.subr.mxu0 0.0
    %118 = vmatpush1.msra.mxu0 0.0
    %119 = vmatprep.subr.mxu0 0.0
    %120 = vmatpush1.msra.mxu0 0.0
    %121 = vmatprep.subr.mxu0 0.0
    %122 = vmatpush1.msra.mxu0 0.0
    %123 = vmatprep.subr.mxu0 0.0
    %124 = vmatpush1.msra.mxu0 0.0
    %125 = vmatprep.subr.mxu0 0.0
    %126 = vmatpush1.msra.mxu0 0.0
    %127 = vmatprep.subr.mxu0 0.0
    %128 = vmatpush1.msra.mxu0 0.0
    %129 = vmatprep.subr.mxu0 0.0
    %130 = vmatpush1.msra.mxu0 0.0
    %131 = vmatprep.subr.mxu0 0.0
    %132 = vmatpush1.msra.mxu0 0.0
    %133 = vmatprep.subr.mxu0 0.0
    %134 = vmatpush1.msra.mxu0 0.0
    %135 = vmatprep.subr.mxu0 0.0
    %136 = vmatpush1.msra.mxu0 0.0
    %137 = vmatprep.subr.mxu0 0.0
    %138 = vmatpush1.msra.mxu0 0.0
    %139 = vmatprep.subr.mxu0 0.0
    %140 = vmatpush1.msra.mxu0 0.0
    %141 = vmatprep.subr.mxu0 0.0
    %142 = vmatpush1.msra.mxu0 0.0
    %143 = vmatprep.subr.mxu0 0.0
    %144 = vmatpush1.msra.mxu0 0.0
    %145 = vmatprep.subr.mxu0 0.0
    %146 = vmatpush1.msra.mxu0 0.0
    %147 = vmatprep.subr.mxu0 0.0
    %148 = vmatpush1.msra.mxu0 0.0
    %149 = vmatprep.subr.mxu0 0.0
    %150 = vmatpush1.msra.mxu0 0.0
    %151 = vmatprep.subr.mxu0 0.0
    %152 = vmatpush1.msra.mxu0 0.0
    %153 = vmatprep.subr.mxu0 0.0
    %154 = vmatpush1.msra.mxu0 0.0
    %155 = vmatprep.subr.mxu0 0.0
    %156 = vmatpush1.msra.mxu0 0.0
    %157 = vmatprep.subr.mxu0 0.0
    %158 = vmatpush1.msra.mxu0 0.0
    %159 = vmatprep.subr.mxu0 0.0
    %160 = vmatpush1.msra.mxu0 0.0
    %161 = vmatprep.subr.mxu0 0.0
    %162 = vmatpush1.msra.mxu0 0.0
    %163 = vmatprep.subr.mxu0 0.0
    %164 = vmatpush1.msra.mxu0 0.0
    %165 = vmatprep.subr.mxu0 0.0
    %166 = vmatpush1.msra.mxu0 0.0
    %167 = vmatprep.subr.mxu0 0.0
    %168 = vmatpush1.msra.mxu0 0.0
    %169 = vmatprep.subr.mxu0 0.0
    %170 = vmatpush1.msra.mxu0 0.0
    %171 = vmatprep.subr.mxu0 0.0
    %172 = vmatpush1.msra.mxu0 0.0
    %173 = vmatprep.mubr.f32.mxu0 0.0
    %174 = vmatmul.mubr.f32.gmra.mrb[0].mxu0 %v77
    %v175 = vpop.f32.mrb[0].mxu0
    %v176 = vadd.f32 %v54, %v175
    %v177 = vpop.f32.mrb[0].mxu0
    %v178 = vadd.f32 %v58, %v177
    %179 = vmatprep.mubr.f32.mxu0 0.0
    %180 = vmatmul.mubr.f32.gmra.mrb[0].mxu0 %v80
    %v181 = vpop.f32.mrb[0].mxu0
    %v182 = vadd.f32 %v54, %v181
    %v183 = vpop.f32.mrb[0].mxu0
    %v184 = vadd.f32 %v58, %v183
    %185 = vmatprep.mubr.f32.mxu0 0.0
    %186 = vmatmul.mubr.f32.gmra.mrb[0].mxu0 %v83
    %v187 = vpop.f32.mrb[0].mxu0
    %v188 = vadd.f32 %v54, %v187
    %v189 = vpop.f32.mrb[0].mxu0
    %v190 = vadd.f32 %v58, %v189
    %191 = vmatprep.mubr.f32.mxu0 0.0
    %192 = vmatmul.mubr.f32.gmra.mrb[0].mxu0 %v86
    %v193 = vpop.f32.mrb[0].mxu0
    %v194 = vadd.f32 %v54, %v193
    %v195 = vpop.f32.mrb[0].mxu0
    %v196 = vadd.f32 %v58, %v195
    %197 = vmatprep.mubr.f32.mxu0 0.0
    %198 = vmatmul.mubr.f32.gmra.mrb[0].mxu0 %v89
    %v199 = vpop.f32.mrb[0].mxu0
    %v200 = vadd.f32 %v54, %v199
    %v201 = vpop.f32.mrb[0].mxu0
    %v202 = vadd.f32 %v58, %v201
    %203 = vmatprep.mubr.f32.mxu0 0.0
    %204 = vmatmul.mubr.f32.gmra.mrb[0].mxu0 %v92
    %v205 = vpop.f32.mrb[0].mxu0
    %v206 = vadd.f32 %v54, %v205
    %v207 = vpop.f32.mrb[0].mxu0
    %v208 = vadd.f32 %v58, %v207
    %209 = vmatprep.mubr.f32.mxu0 0.0
    %210 = vmatmul.mubr.f32.gmra.mrb[0].mxu0 %v95
    %v211 = vpop.f32.mrb[0].mxu0
    %v212 = vadd.f32 %v54, %v211
    %v213 = vpop.f32.mrb[0].mxu0
    %v214 = vadd.f32 %v58, %v213
    %215 = vmatprep.mubr.f32.mxu0 0.0
    %216 = vmatmul.mubr.f32.gmra.mrb[0].mxu0 %v98
    %v217 = vpop.f32.mrb[0].mxu0
    %v218 = vadd.f32 %v54, %v217
    %v219 = vpop.f32.mrb[0].mxu0
    %v220 = vadd.f32 %v58, %v219
    %221 = vdwg.mxu0
    %222 = vmatprep.subr.mxu0 %v107
    %223 = vmatpush1.msra.mxu0 %v105
    %224 = vmatprep.subr.mxu0 0.0
    %225 = vmatpush1.msra.mxu0 0.0
    %226 = vmatprep.subr.mxu0 0.0
    %227 = vmatpush1.msra.mxu0 0.0
    %228 = vmatprep.subr.mxu0 0.0
    %229 = vmatpush1.msra.mxu0 0.0
    %230 = vmatprep.subr.mxu0 0.0
    %231 = vmatpush1.msra.mxu0 0.0
    %232 = vmatprep.subr.mxu0 0.0
    %233 = vmatpush1.msra.mxu0 0.0
    %234 = vmatprep.subr.mxu0 0.0
    %235 = vmatpush1.msra.mxu0 0.0
    %236 = vmatprep.subr.mxu0 0.0
    %237 = vmatpush1.msra.mxu0 0.0
    %238 = vmatprep.subr.mxu0 0.0
    %239 = vmatpush1.msra.mxu0 0.0
    %240 = vmatprep.subr.mxu0 0.0
    %241 = vmatpush1.msra.mxu0 0.0
    %242 = vmatprep.subr.mxu0 0.0
    %243 = vmatpush1.msra.mxu0 0.0
    %244 = vmatprep.subr.mxu0 0.0
    %245 = vmatpush1.msra.mxu0 0.0
    %246 = vmatprep.subr.mxu0 0.0
    %247 = vmatpush1.msra.mxu0 0.0
    %248 = vmatprep.subr.mxu0 0.0
    %249 = vmatpush1.msra.mxu0 0.0
    %250 = vmatprep.subr.mxu0 0.0
    %251 = vmatpush1.msra.mxu0 0.0
    %252 = vmatprep.subr.mxu0 0.0
    %253 = vmatpush1.msra.mxu0 0.0
    %254 = vmatprep.subr.mxu0 0.0
    %255 = vmatpush1.msra.mxu0 0.0
    %256 = vmatprep.subr.mxu0 0.0
    %257 = vmatpush1.msra.mxu0 0.0
    %258 = vmatprep.subr.mxu0 0.0
    %259 = vmatpush1.msra.mxu0 0.0
    %260 = vmatprep.subr.mxu0 0.0
    %261 = vmatpush1.msra.mxu0 0.0
    %262 = vmatprep.subr.mxu0 0.0
    %263 = vmatpush1.msra.mxu0 0.0
    %264 = vmatprep.subr.mxu0 0.0
    %265 = vmatpush1.msra.mxu0 0.0
    %266 = vmatprep.subr.mxu0 0.0
    %267 = vmatpush1.msra.mxu0 0.0
    %268 = vmatprep.subr.mxu0 0.0
    %269 = vmatpush1.msra.mxu0 0.0
    %270 = vmatprep.subr.mxu0 0.0
    %271 = vmatpush1.msra.mxu0 0.0
    %272 = vmatprep.subr.mxu0 0.0
    %273 = vmatpush1.msra.mxu0 0.0
    %274 = vmatprep.subr.mxu0 0.0
    %275 = vmatpush1.msra.mxu0 0.0
    %276 = vmatprep.subr.mxu0 0.0
    %277 = vmatpush1.msra.mxu0 0.0
    %278 = vmatprep.subr.mxu0 0.0
    %279 = vmatpush1.msra.mxu0 0.0
    %280 = vmatprep.subr.mxu0 0.0
    %281 = vmatpush1.msra.mxu0 0.0
    %282 = vmatprep.subr.mxu0 0.0
    %283 = vmatpush1.msra.mxu0 0.0
    %284 = vmatprep.subr.mxu0 0.0
    %285 = vmatpush1.msra.mxu0 0.0
    %286 = vmatprep.mubr.f32.mxu0 0.0
    %287 = vmatmul.mubr.f32.gmra.mrb[0].mxu0 %v77
    %v288 = vpop.f32.mrb[0].mxu0
    %v289 = vadd.f32 %v62, %v288
    %v290 = vpop.f32.mrb[0].mxu0
    %v291 = vadd.f32 %v66, %v290
    %292 = vmatprep.mubr.f32.mxu0 0.0
    %293 = vmatmul.mubr.f32.gmra.mrb[0].mxu0 %v80
    %v294 = vpop.f32.mrb[0].mxu0
    %v295 = vadd.f32 %v62, %v294
    %v296 = vpop.f32.mrb[0].mxu0
    %v297 = vadd.f32 %v66, %v296
    %298 = vmatprep.mubr.f32.mxu0 0.0
    %299 = vmatmul.mubr.f32.gmra.mrb[0].mxu0 %v83
    %v300 = vpop.f32.mrb[0].mxu0
    %v301 = vadd.f32 %v62, %v300
    %v302 = vpop.f32.mrb[0].mxu0
    %v303 = vadd.f32 %v66, %v302
    %304 = vmatprep.mubr.f32.mxu0 0.0
    %305 = vmatmul.mubr.f32.gmra.mrb[0].mxu0 %v86
    %v306 = vpop.f32.mrb[0].mxu0
    %v307 = vadd.f32 %v62, %v306
    %v308 = vpop.f32.mrb[0].mxu0
    %v309 = vadd.f32 %v66, %v308
    %310 = vmatprep.mubr.f32.mxu0 0.0
    %311 = vmatmul.mubr.f32.gmra.mrb[0].mxu0 %v89
    %v312 = vpop.f32.mrb[0].mxu0
    %v313 = vadd.f32 %v62, %v312
    %v314 = vpop.f32.mrb[0].mxu0
    %v315 = vadd.f32 %v66, %v314
    %316 = vmatprep.mubr.f32.mxu0 0.0
    %317 = vmatmul.mubr.f32.gmra.mrb[0].mxu0 %v92
    %v318 = vpop.f32.mrb[0].mxu0
    %v319 = vadd.f32 %v62, %v318
    %v320 = vpop.f32.mrb[0].mxu0
    %v321 = vadd.f32 %v66, %v320
    %322 = vmatprep.mubr.f32.mxu0 0.0
    %323 = vmatmul.mubr.f32.gmra.mrb[0].mxu0 %v95
    %v324 = vpop.f32.mrb[0].mxu0
    %v325 = vadd.f32 %v62, %v324
    %v326 = vpop.f32.mrb[0].mxu0
    %v327 = vadd.f32 %v66, %v326
    %328 = vmatprep.mubr.f32.mxu0 0.0
    %329 = vmatmul.mubr.f32.gmra.mrb[0].mxu0 %v98
    %v330 = vpop.f32.mrb[0].mxu0
    %v331 = vadd.f32 %v62, %v330
    %v332 = vpop.f32.mrb[0].mxu0
    %v333 = vadd.f32 %v66, %v332
    %334 = vdwg.mxu0
    %335 = vst [vmem:[#allocation2] sm:$0xff] %v176
    %336 = vst [vmem:[#allocation2 + $0x8] sm:$0xff] %v178
    %337 = vst [vmem:[#allocation2 + $0x10] sm:$0xff] %v289
    %338 = vst [vmem:[#allocation2 + $0x18] sm:$0xff] %v291
    %339 = vst [vmem:[#allocation2 + $0x20] sm:$0xff] %v182
    %340 = vst [vmem:[#allocation2 + $0x28] sm:$0xff] %v184
    %341 = vst [vmem:[#allocation2 + $0x30] sm:$0xff] %v295
    %342 = vst [vmem:[#allocation2 + $0x38] sm:$0xff] %v297
    %343 = vst [vmem:[#allocation2 + $0x40] sm:$0xff] %v188
    %344 = vst [vmem:[#allocation2 + $0x48] sm:$0xff] %v190
    %345 = vst [vmem:[#allocation2 + $0x50] sm:$0xff] %v301
    %346 = vst [vmem:[#allocation2 + $0x58] sm:$0xff] %v303
    %347 = vst [vmem:[#allocation2 + $0x60] sm:$0xff] %v194
    %348 = vst [vmem:[#allocation2 + $0x68] sm:$0xff] %v196
    %349 = vst [vmem:[#allocation2 + $0x70] sm:$0xff] %v307
    %350 = vst [vmem:[#allocation2 + $0x78] sm:$0xff] %v309
    %351 = vst [vmem:[#allocation2 + $0x80] sm:$0xff] %v200
    %352 = vst [vmem:[#allocation2 + $0x88] sm:$0xff] %v202
    %353 = vst [vmem:[#allocation2 + $0x90] sm:$0xff] %v313
    %354 = vst [vmem:[#allocation2 + $0x98] sm:$0xff] %v315
    %355 = vst [vmem:[#allocation2 + $0xa0] sm:$0xff] %v206
    %356 = vst [vmem:[#allocation2 + $0xa8] sm:$0xff] %v208
    %357 = vst [vmem:[#allocation2 + $0xb0] sm:$0xff] %v319
    %358 = vst [vmem:[#allocation2 + $0xb8] sm:$0xff] %v321
    %359 = vst [vmem:[#allocation2 + $0xc0] sm:$0xff] %v212
    %360 = vst [vmem:[#allocation2 + $0xc8] sm:$0xff] %v214
    %361 = vst [vmem:[#allocation2 + $0xd0] sm:$0xff] %v325
    %362 = vst [vmem:[#allocation2 + $0xd8] sm:$0xff] %v327
    %363 = vst [vmem:[#allocation2 + $0xe0] sm:$0xff] %v218
    %364 = vst [vmem:[#allocation2 + $0xe8] sm:$0xff] %v220
    %365 = vst [vmem:[#allocation2 + $0xf0] sm:$0xff] %v331
    %366 = vst [vmem:[#allocation2 + $0xf8] sm:$0xff] %v333
    %367 = vst [vmem:[#allocation4] sm:$0xff] 0.0
    %368 = vst [vmem:[#allocation5] sm:$0xff] 0.0
    %s369 = smul.u32 0, 4
    %s370 = smul.addr %s369, 8
    %s371 = scalar_lea.vmem [#allocation2], %s370
    %v372 = vld [vmem:[%s371] sm:$0xff]
    %v373 = vld [vmem:[%s371 + $0x8] sm:$0xff]
    %v374 = vld [vmem:[%s371 + $0x10] sm:$0xff]
    %v375 = vld [vmem:[%s371 + $0x18] sm:$0xff]
    %v376 = vld [vmem:[#allocation4] sm:$0xff]
    %v377 = vld [vmem:[#allocation7] sm:$0xff]
    %v378 = vld [vmem:[#allocation7 + $0x8] sm:$0xff]
    %v379 = vld [vmem:[#allocation7 + $0x10] sm:$0xff]
    %v380 = vld [vmem:[#allocation7 + $0x18] sm:$0xff]
    %v381 = vld [vmem:[#allocation7 + $0x20] sm:$0xff]
    %v382 = vld [vmem:[#allocation7 + $0x28] sm:$0xff]
    %v383 = vld [vmem:[#allocation7 + $0x30] sm:$0xff]
    %v384 = vld [vmem:[#allocation7 + $0x38] sm:$0xff]
    %v385 = vld [vmem:[#allocation7 + $0x40] sm:$0xff]
    %v386 = vld [vmem:[#allocation7 + $0x48] sm:$0xff]
    %v387 = vld [vmem:[#allocation7 + $0x50] sm:$0xff]
    %v388 = vld [vmem:[#allocation7 + $0x58] sm:$0xff]
    %v389 = vld [vmem:[#allocation7 + $0x60] sm:$0xff]
    %v390 = vld [vmem:[#allocation7 + $0x68] sm:$0xff]
    %v391 = vld [vmem:[#allocation7 + $0x70] sm:$0xff]
    %v392 = vld [vmem:[#allocation7 + $0x78] sm:$0xff]
    %v393 = vld [vmem:[#allocation7 + $0x80] sm:$0xff]
    %v394 = vld [vmem:[#allocation7 + $0x88] sm:$0xff]
    %v395 = vld [vmem:[#allocation7 + $0x90] sm:$0xff]
    %v396 = vld [vmem:[#allocation7 + $0x98] sm:$0xff]
    %v397 = vld [vmem:[#allocation7 + $0xa0] sm:$0xff]
    %v398 = vld [vmem:[#allocation7 + $0xa8] sm:$0xff]
    %v399 = vld [vmem:[#allocation7 + $0xb0] sm:$0xff]
    %v400 = vld [vmem:[#allocation7 + $0xb8] sm:$0xff]
    %v401 = vld [vmem:[#allocation7 + $0xc0] sm:$0xff]
    %v402 = vld [vmem:[#allocation7 + $0xc8] sm:$0xff]
    %v403 = vld [vmem:[#allocation7 + $0xd0] sm:$0xff]
    %v404 = vld [vmem:[#allocation7 + $0xd8] sm:$0xff]
    %v405 = vld [vmem:[#allocation7 + $0xe0] sm:$0xff]
    %v406 = vld [vmem:[#allocation7 + $0xe8] sm:$0xff]
    %v407 = vld [vmem:[#allocation7 + $0xf0] sm:$0xff]
    %v408 = vld [vmem:[#allocation7 + $0xf8] sm:$0xff]
    %v409 = vld [vmem:[#allocation7 + $0x100] sm:$0xff]
    %v410 = vld [vmem:[#allocation7 + $0x108] sm:$0xff]
    %v411 = vld [vmem:[#allocation7 + $0x110] sm:$0xff]
    %v412 = vld [vmem:[#allocation7 + $0x118] sm:$0xff]
    %v413 = vld [vmem:[#allocation7 + $0x120] sm:$0xff]
    %v414 = vld [vmem:[#allocation7 + $0x128] sm:$0xff]
    %v415 = vld [vmem:[#allocation7 + $0x130] sm:$0xff]
    %v416 = vld [vmem:[#allocation7 + $0x138] sm:$0xff]
    %v417 = vld [vmem:[#allocation7 + $0x140] sm:$0xff]
    %v418 = vld [vmem:[#allocation7 + $0x148] sm:$0xff]
    %v419 = vld [vmem:[#allocation7 + $0x150] sm:$0xff]
    %v420 = vld [vmem:[#allocation7 + $0x158] sm:$0xff]
    %v421 = vld [vmem:[#allocation7 + $0x160] sm:$0xff]
    %v422 = vld [vmem:[#allocation7 + $0x168] sm:$0xff]
    %v423 = vld [vmem:[#allocation7 + $0x170] sm:$0xff]
    %v424 = vld [vmem:[#allocation7 + $0x178] sm:$0xff]
    %v425 = vld [vmem:[#allocation7 + $0x180] sm:$0xff]
    %v426 = vld [vmem:[#allocation7 + $0x188] sm:$0xff]
    %v427 = vld [vmem:[#allocation7 + $0x190] sm:$0xff]
    %v428 = vld [vmem:[#allocation7 + $0x198] sm:$0xff]
    %v429 = vld [vmem:[#allocation7 + $0x1a0] sm:$0xff]
    %v430 = vld [vmem:[#allocation7 + $0x1a8] sm:$0xff]
    %v431 = vld [vmem:[#allocation7 + $0x1b0] sm:$0xff]
    %v432 = vld [vmem:[#allocation7 + $0x1b8] sm:$0xff]
    %v433 = vld [vmem:[#allocation7 + $0x1c0] sm:$0xff]
    %v434 = vld [vmem:[#allocation7 + $0x1c8] sm:$0xff]
    %v435 = vld [vmem:[#allocation7 + $0x1d0] sm:$0xff]
    %v436 = vld [vmem:[#allocation7 + $0x1d8] sm:$0xff]
    %v437 = vld [vmem:[#allocation7 + $0x1e0] sm:$0xff]
    %v438 = vld [vmem:[#allocation7 + $0x1e8] sm:$0xff]
    %v439 = vld [vmem:[#allocation7 + $0x1f0] sm:$0xff]
    %v440 = vld [vmem:[#allocation7 + $0x1f8] sm:$0xff]
    %441 = vmatprep.subr.mxu0 %v378
    %442 = vmatpush1.msra.mxu0 %v377
    %443 = vmatprep.subr.mxu0 %v382
    %444 = vmatpush1.msra.mxu0 %v381
    %445 = vmatprep.subr.mxu0 %v386
    %446 = vmatpush1.msra.mxu0 %v385
    %447 = vmatprep.subr.mxu0 %v390
    %448 = vmatpush1.msra.mxu0 %v389
    %449 = vmatprep.subr.mxu0 %v394
    %450 = vmatpush1.msra.mxu0 %v393
    %451 = vmatprep.subr.mxu0 %v398
    %452 = vmatpush1.msra.mxu0 %v397
    %453 = vmatprep.subr.mxu0 %v402
    %454 = vmatpush1.msra.mxu0 %v401
    %455 = vmatprep.subr.mxu0 %v406
    %456 = vmatpush1.msra.mxu0 %v405
    %457 = vmatprep.subr.mxu0 %v410
    %458 = vmatpush1.msra.mxu0 %v409
    %459 = vmatprep.subr.mxu0 %v414
    %460 = vmatpush1.msra.mxu0 %v413
    %461 = vmatprep.subr.mxu0 %v418
    %462 = vmatpush1.msra.mxu0 %v417
    %463 = vmatprep.subr.mxu0 %v422
    %464 = vmatpush1.msra.mxu0 %v421
    %465 = vmatprep.subr.mxu0 %v426
    %466 = vmatpush1.msra.mxu0 %v425
    %467 = vmatprep.subr.mxu0 %v430
    %468 = vmatpush1.msra.mxu0 %v429
    %469 = vmatprep.subr.mxu0 %v434
    %470 = vmatpush1.msra.mxu0 %v433
    %471 = vmatprep.subr.mxu0 %v438
    %472 = vmatpush1.msra.mxu0 %v437
    %473 = vmatprep.subr.mxu0 0.0
    %474 = vmatpush1.msra.mxu0 0.0
    %475 = vmatprep.subr.mxu0 0.0
    %476 = vmatpush1.msra.mxu0 0.0
    %477 = vmatprep.subr.mxu0 0.0
    %478 = vmatpush1.msra.mxu0 0.0
    %479 = vmatprep.subr.mxu0 0.0
    %480 = vmatpush1.msra.mxu0 0.0
    %481 = vmatprep.subr.mxu0 0.0
    %482 = vmatpush1.msra.mxu0 0.0
    %483 = vmatprep.subr.mxu0 0.0
    %484 = vmatpush1.msra.mxu0 0.0
    %485 = vmatprep.subr.mxu0 0.0
    %486 = vmatpush1.msra.mxu0 0.0
    %487 = vmatprep.subr.mxu0 0.0
    %488 = vmatpush1.msra.mxu0 0.0
    %489 = vmatprep.subr.mxu0 0.0
    %490 = vmatpush1.msra.mxu0 0.0
    %491 = vmatprep.subr.mxu0 0.0
    %492 = vmatpush1.msra.mxu0 0.0
    %493 = vmatprep.subr.mxu0 0.0
    %494 = vmatpush1.msra.mxu0 0.0
    %495 = vmatprep.subr.mxu0 0.0
    %496 = vmatpush1.msra.mxu0 0.0
    %497 = vmatprep.subr.mxu0 0.0
    %498 = vmatpush1.msra.mxu0 0.0
    %499 = vmatprep.subr.mxu0 0.0
    %500 = vmatpush1.msra.mxu0 0.0
    %501 = vmatprep.subr.mxu0 0.0
    %502 = vmatpush1.msra.mxu0 0.0
    %503 = vmatprep.subr.mxu0 0.0
    %504 = vmatpush1.msra.mxu0 0.0
    %505 = vmatprep.mubr.f32.mxu0 0.0
    %506 = vmatmul.mubr.f32.gmra.mrb[0].mxu0 %v376
    %v507 = vpop.f32.mrb[0].mxu0
    %v508 = vadd.f32 0.0, %v507
    %v509 = vpop.f32.mrb[0].mxu0
    %v510 = vadd.f32 0.0, %v509
    %511 = vdwg.mxu0
    %512 = vmatprep.subr.mxu0 %v380
    %513 = vmatpush1.msra.mxu0 %v379
    %514 = vmatprep.subr.mxu0 %v384
    %515 = vmatpush1.msra.mxu0 %v383
    %516 = vmatprep.subr.mxu0 %v388
    %517 = vmatpush1.msra.mxu0 %v387
    %518 = vmatprep.subr.mxu0 %v392
    %519 = vmatpush1.msra.mxu0 %v391
    %520 = vmatprep.subr.mxu0 %v396
    %521 = vmatpush1.msra.mxu0 %v395
    %522 = vmatprep.subr.mxu0 %v400
    %523 = vmatpush1.msra.mxu0 %v399
    %524 = vmatprep.subr.mxu0 %v404
    %525 = vmatpush1.msra.mxu0 %v403
    %526 = vmatprep.subr.mxu0 %v408
    %527 = vmatpush1.msra.mxu0 %v407
    %528 = vmatprep.subr.mxu0 %v412
    %529 = vmatpush1.msra.mxu0 %v411
    %530 = vmatprep.subr.mxu0 %v416
    %531 = vmatpush1.msra.mxu0 %v415
    %532 = vmatprep.subr.mxu0 %v420
    %533 = vmatpush1.msra.mxu0 %v419
    %534 = vmatprep.subr.mxu0 %v424
    %535 = vmatpush1.msra.mxu0 %v423
    %536 = vmatprep.subr.mxu0 %v428
    %537 = vmatpush1.msra.mxu0 %v427
    %538 = vmatprep.subr.mxu0 %v432
    %539 = vmatpush1.msra.mxu0 %v431
    %540 = vmatprep.subr.mxu0 %v436
    %541 = vmatpush1.msra.mxu0 %v435
    %542 = vmatprep.subr.mxu0 %v440
    %543 = vmatpush1.msra.mxu0 %v439
    %544 = vmatprep.subr.mxu0 0.0
    %545 = vmatpush1.msra.mxu0 0.0
    %546 = vmatprep.subr.mxu0 0.0
    %547 = vmatpush1.msra.mxu0 0.0
    %548 = vmatprep.subr.mxu0 0.0
    %549 = vmatpush1.msra.mxu0 0.0
    %550 = vmatprep.subr.mxu0 0.0
    %551 = vmatpush1.msra.mxu0 0.0
    %552 = vmatprep.subr.mxu0 0.0
    %553 = vmatpush1.msra.mxu0 0.0
    %554 = vmatprep.subr.mxu0 0.0
    %555 = vmatpush1.msra.mxu0 0.0
    %556 = vmatprep.subr.mxu0 0.0
    %557 = vmatpush1.msra.mxu0 0.0
    %558 = vmatprep.subr.mxu0 0.0
    %559 = vmatpush1.msra.mxu0 0.0
    %560 = vmatprep.subr.mxu0 0.0
    %561 = vmatpush1.msra.mxu0 0.0
    %562 = vmatprep.subr.mxu0 0.0
    %563 = vmatpush1.msra.mxu0 0.0
    %564 = vmatprep.subr.mxu0 0.0
    %565 = vmatpush1.msra.mxu0 0.0
    %566 = vmatprep.subr.mxu0 0.0
    %567 = vmatpush1.msra.mxu0 0.0
    %568 = vmatprep.subr.mxu0 0.0
    %569 = vmatpush1.msra.mxu0 0.0
    %570 = vmatprep.subr.mxu0 0.0
    %571 = vmatpush1.msra.mxu0 0.0
    %572 = vmatprep.subr.mxu0 0.0
    %573 = vmatpush1.msra.mxu0 0.0
    %574 = vmatprep.subr.mxu0 0.0
    %575 = vmatpush1.msra.mxu0 0.0
    %576 = vmatprep.mubr.f32.mxu0 0.0
    %577 = vmatmul.mubr.f32.gmra.mrb[0].mxu0 %v376
    %v578 = vpop.f32.mrb[0].mxu0
    %v579 = vadd.f32 0.0, %v578
    %v580 = vpop.f32.mrb[0].mxu0
    %v581 = vadd.f32 0.0, %v580
    %582 = vdwg.mxu0
    %v583 = vadd.f32 %v372, %v508
    %v584 = vadd.f32 %v373, %v510
    %v585 = vadd.f32 %v374, %v579
    %v586 = vadd.f32 %v375, %v581
    %v587 = vxor.u32 %v583, 2147483648
    %v588 = vmul.f32 %v587, 1.442695
    %v589 = vpow.pop %v588
    %v590 = vadd.f32 %v589, 1.0
    %v591 = vrcp.pop %v590
    %v592 = vmul.f32 1.0, %v591
    %v593 = vxor.u32 %v584, 2147483648
    %v594 = vmul.f32 %v593, 1.442695
    %v595 = vpow.pop %v594
    %v596 = vadd.f32 %v595, 1.0
    %v597 = vrcp.pop %v596
    %v598 = vmul.f32 1.0, %v597
    %v599 = vtanh.pop %v585
    %v600 = vxor.u32 %v586, 2147483648
    %v601 = vmul.f32 %v600, 1.442695
    %v602 = vpow.pop %v601
    %v603 = vadd.f32 %v602, 1.0
    %v604 = vrcp.pop %v603
    %v605 = vmul.f32 1.0, %v604
    %v606 = vld [vmem:[#allocation5] sm:$0xff]
    %v607 = vmul.f32 %v598, %v606
    %v608 = vmul.f32 %v592, %v599
    %v609 = vadd.f32 %v607, %v608
    %v610 = vtanh.pop %v609
    %v611 = vmul.f32 %v605, %v610
    %612 = vst [vmem:[#allocation5] sm:$0xff] %v609
    %613 = vst [vmem:[#allocation4] sm:$0xff] %v611
    %614 = vst [vmem:[#allocation3] sm:$0xff] %v611
    %s615 = smul.u32 1, 4
    %s616 = smul.addr %s615, 8
    %s617 = scalar_lea.vmem [#allocation2], %s616
    %v618 = vld [vmem:[%s617] sm:$0xff]
    %v619 = vld [vmem:[%s617 + $0x8] sm:$0xff]
    %v620 = vld [vmem:[%s617 + $0x10] sm:$0xff]
    %v621 = vld [vmem:[%s617 + $0x18] sm:$0xff]
    %v622 = vld [vmem:[#allocation4] sm:$0xff]
    %v623 = vld [vmem:[#allocation7] sm:$0xff]
    %v624 = vld [vmem:[#allocation7 + $0x8] sm:$0xff]
    %v625 = vld [vmem:[#allocation7 + $0x10] sm:$0xff]
    %v626 = vld [vmem:[#allocation7 + $0x18] sm:$0xff]
    %v627 = vld [vmem:[#allocation7 + $0x20] sm:$0xff]
    %v628 = vld [vmem:[#allocation7 + $0x28] sm:$0xff]
    %v629 = vld [vmem:[#allocation7 + $0x30] sm:$0xff]
    %v630 = vld [vmem:[#allocation7 + $0x38] sm:$0xff]
    %v631 = vld [vmem:[#allocation7 + $0x40] sm:$0xff]
    %v632 = vld [vmem:[#allocation7 + $0x48] sm:$0xff]
    %v633 = vld [vmem:[#allocation7 + $0x50] sm:$0xff]
    %v634 = vld [vmem:[#allocation7 + $0x58] sm:$0xff]
    %v635 = vld [vmem:[#allocation7 + $0x60] sm:$0xff]
    %v636 = vld [vmem:[#allocation7 + $0x68] sm:$0xff]
    %v637 = vld [vmem:[#allocation7 + $0x70] sm:$0xff]
    %v638 = vld [vmem:[#allocation7 + $0x78] sm:$0xff]
    %v639 = vld [vmem:[#allocation7 + $0x80] sm:$0xff]
    %v640 = vld [vmem:[#allocation7 + $0x88] sm:$0xff]
    %v641 = vld [vmem:[#allocation7 + $0x90] sm:$0xff]
    %v642 = vld [vmem:[#allocation7 + $0x98] sm:$0xff]
    %v643 = vld [vmem:[#allocation7 + $0xa0] sm:$0xff]
    %v644 = vld [vmem:[#allocation7 + $0xa8] sm:$0xff]
    %v645 = vld [vmem:[#allocation7 + $0xb0] sm:$0xff]
    %v646 = vld [vmem:[#allocation7 + $0xb8] sm:$0xff]
    %v647 = vld [vmem:[#allocation7 + $0xc0] sm:$0xff]
    %v648 = vld [vmem:[#allocation7 + $0xc8] sm:$0xff]
    %v649 = vld [vmem:[#allocation7 + $0xd0] sm:$0xff]
    %v650 = vld [vmem:[#allocation7 + $0xd8] sm:$0xff]
    %v651 = vld [vmem:[#allocation7 + $0xe0] sm:$0xff]
    %v652 = vld [vmem:[#allocation7 + $0xe8] sm:$0xff]
    %v653 = vld [vmem:[#allocation7 + $0xf0] sm:$0xff]
    %v654 = vld [vmem:[#allocation7 + $0xf8] sm:$0xff]
    %v655 = vld [vmem:[#allocation7 + $0x100] sm:$0xff]
    %v656 = vld [vmem:[#allocation7 + $0x108] sm:$0xff]
    %v657 = vld [vmem:[#allocation7 + $0x110] sm:$0xff]
    %v658 = vld [vmem:[#allocation7 + $0x118] sm:$0xff]
    %v659 = vld [vmem:[#allocation7 + $0x120] sm:$0xff]
    %v660 = vld [vmem:[#allocation7 + $0x128] sm:$0xff]
    %v661 = vld [vmem:[#allocation7 + $0x130] sm:$0xff]
    %v662 = vld [vmem:[#allocation7 + $0x138] sm:$0xff]
    %v663 = vld [vmem:[#allocation7 + $0x140] sm:$0xff]
    %v664 = vld [vmem:[#allocation7 + $0x148] sm:$0xff]
    %v665 = vld [vmem:[#allocation7 + $0x150] sm:$0xff]
    %v666 = vld [vmem:[#allocation7 + $0x158] sm:$0xff]
    %v667 = vld [vmem:[#allocation7 + $0x160] sm:$0xff]
    %v668 = vld [vmem:[#allocation7 + $0x168] sm:$0xff]
    %v669 = vld [vmem:[#allocation7 + $0x170] sm:$0xff]
    %v670 = vld [vmem:[#allocation7 + $0x178] sm:$0xff]
    %v671 = vld [vmem:[#allocation7 + $0x180] sm:$0xff]
    %v672 = vld [vmem:[#allocation7 + $0x188] sm:$0xff]
    %v673 = vld [vmem:[#allocation7 + $0x190] sm:$0xff]
    %v674 = vld [vmem:[#allocation7 + $0x198] sm:$0xff]
    %v675 = vld [vmem:[#allocation7 + $0x1a0] sm:$0xff]
    %v676 = vld [vmem:[#allocation7 + $0x1a8] sm:$0xff]
    %v677 = vld [vmem:[#allocation7 + $0x1b0] sm:$0xff]
    %v678 = vld [vmem:[#allocation7 + $0x1b8] sm:$0xff]
    %v679 = vld [vmem:[#allocation7 + $0x1c0] sm:$0xff]
    %v680 = vld [vmem:[#allocation7 + $0x1c8] sm:$0xff]
    %v681 = vld [vmem:[#allocation7 + $0x1d0] sm:$0xff]
    %v682 = vld [vmem:[#allocation7 + $0x1d8] sm:$0xff]
    %v683 = vld [vmem:[#allocation7 + $0x1e0] sm:$0xff]
    %v684 = vld [vmem:[#allocation7 + $0x1e8] sm:$0xff]
    %v685 = vld [vmem:[#allocation7 + $0x1f0] sm:$0xff]
    %v686 = vld [vmem:[#allocation7 + $0x1f8] sm:$0xff]
    %687 = vmatprep.subr.mxu0 %v624
    %688 = vmatpush1.msra.mxu0 %v623
    %689 = vmatprep.subr.mxu0 %v628
    %690 = vmatpush1.msra.mxu0 %v627
    %691 = vmatprep.subr.mxu0 %v632
    %692 = vmatpush1.msra.mxu0 %v631
    %693 = vmatprep.subr.mxu0 %v636
    %694 = vmatpush1.msra.mxu0 %v635
    %695 = vmatprep.subr.mxu0 %v640
    %696 = vmatpush1.msra.mxu0 %v639
    %697 = vmatprep.subr.mxu0 %v644
    %698 = vmatpush1.msra.mxu0 %v643
    %699 = vmatprep.subr.mxu0 %v648
    %700 = vmatpush1.msra.mxu0 %v647
    %701 = vmatprep.subr.mxu0 %v652
    %702 = vmatpush1.msra.mxu0 %v651
    %703 = vmatprep.subr.mxu0 %v656
    %704 = vmatpush1.msra.mxu0 %v655
    %705 = vmatprep.subr.mxu0 %v660
    %706 = vmatpush1.msra.mxu0 %v659
    %707 = vmatprep.subr.mxu0 %v664
    %708 = vmatpush1.msra.mxu0 %v663
    %709 = vmatprep.subr.mxu0 %v668
    %710 = vmatpush1.msra.mxu0 %v667
    %711 = vmatprep.subr.mxu0 %v672
    %712 = vmatpush1.msra.mxu0 %v671
    %713 = vmatprep.subr.mxu0 %v676
    %714 = vmatpush1.msra.mxu0 %v675
    %715 = vmatprep.subr.mxu0 %v680
    %716 = vmatpush1.msra.mxu0 %v679
    %717 = vmatprep.subr.mxu0 %v684
    %718 = vmatpush1.msra.mxu0 %v683
    %719 = vmatprep.subr.mxu0 0.0
    %720 = vmatpush1.msra.mxu0 0.0
    %721 = vmatprep.subr.mxu0 0.0
    %722 = vmatpush1.msra.mxu0 0.0
    %723 = vmatprep.subr.mxu0 0.0
    %724 = vmatpush1.msra.mxu0 0.0
    %725 = vmatprep.subr.mxu0 0.0
    %726 = vmatpush1.msra.mxu0 0.0
    %727 = vmatprep.subr.mxu0 0.0
    %728 = vmatpush1.msra.mxu0 0.0
    %729 = vmatprep.subr.mxu0 0.0
    %730 = vmatpush1.msra.mxu0 0.0
    %731 = vmatprep.subr.mxu0 0.0
    %732 = vmatpush1.msra.mxu0 0.0
    %733 = vmatprep.subr.mxu0 0.0
    %734 = vmatpush1.msra.mxu0 0.0
    %735 = vmatprep.subr.mxu0 0.0
    %736 = vmatpush1.msra.mxu0 0.0
    %737 = vmatprep.subr.mxu0 0.0
    %738 = vmatpush1.msra.mxu0 0.0
    %739 = vmatprep.subr.mxu0 0.0
    %740 = vmatpush1.msra.mxu0 0.0
    %741 = vmatprep.subr.mxu0 0.0
    %742 = vmatpush1.msra.mxu0 0.0
    %743 = vmatprep.subr.mxu0 0.0
    %744 = vmatpush1.msra.mxu0 0.0
    %745 = vmatprep.subr.mxu0 0.0
    %746 = vmatpush1.msra.mxu0 0.0
    %747 = vmatprep.subr.mxu0 0.0
    %748 = vmatpush1.msra.mxu0 0.0
    %749 = vmatprep.subr.mxu0 0.0
    %750 = vmatpush1.msra.mxu0 0.0
    %751 = vmatprep.mubr.f32.mxu0 0.0
    %752 = vmatmul.mubr.f32.gmra.mrb[0].mxu0 %v622
    %v753 = vpop.f32.mrb[0].mxu0
    %v754 = vadd.f32 0.0, %v753
    %v755 = vpop.f32.mrb[0].mxu0
    %v756 = vadd.f32 0.0, %v755
    %757 = vdwg.mxu0
    %758 = vmatprep.subr.mxu0 %v626
    %759 = vmatpush1.msra.mxu0 %v625
    %760 = vmatprep.subr.mxu0 %v630
    %761 = vmatpush1.msra.mxu0 %v629
    %762 = vmatprep.subr.mxu0 %v634
    %763 = vmatpush1.msra.mxu0 %v633
    %764 = vmatprep.subr.mxu0 %v638
    %765 = vmatpush1.msra.mxu0 %v637
    %766 = vmatprep.subr.mxu0 %v642
    %767 = vmatpush1.msra.mxu0 %v641
    %768 = vmatprep.subr.mxu0 %v646
    %769 = vmatpush1.msra.mxu0 %v645
    %770 = vmatprep.subr.mxu0 %v650
    %771 = vmatpush1.msra.mxu0 %v649
    %772 = vmatprep.subr.mxu0 %v654
    %773 = vmatpush1.msra.mxu0 %v653
    %774 = vmatprep.subr.mxu0 %v658
    %775 = vmatpush1.msra.mxu0 %v657
    %776 = vmatprep.subr.mxu0 %v662
    %777 = vmatpush1.msra.mxu0 %v661
    %778 = vmatprep.subr.mxu0 %v666
    %779 = vmatpush1.msra.mxu0 %v665
    %780 = vmatprep.subr.mxu0 %v670
    %781 = vmatpush1.msra.mxu0 %v669
    %782 = vmatprep.subr.mxu0 %v674
    %783 = vmatpush1.msra.mxu0 %v673
    %784 = vmatprep.subr.mxu0 %v678
    %785 = vmatpush1.msra.mxu0 %v677
    %786 = vmatprep.subr.mxu0 %v682
    %787 = vmatpush1.msra.mxu0 %v681
    %788 = vmatprep.subr.mxu0 %v686
    %789 = vmatpush1.msra.mxu0 %v685
    %790 = vmatprep.subr.mxu0 0.0
    %791 = vmatpush1.msra.mxu0 0.0
    %792 = vmatprep.subr.mxu0 0.0
    %793 = vmatpush1.msra.mxu0 0.0
    %794 = vmatprep.subr.mxu0 0.0
    %795 = vmatpush1.msra.mxu0 0.0
    %796 = vmatprep.subr.mxu0 0.0
    %797 = vmatpush1.msra.mxu0 0.0
    %798 = vmatprep.subr.mxu0 0.0
    %799 = vmatpush1.msra.mxu0 0.0
    %800 = vmatprep.subr.mxu0 0.0
    %801 = vmatpush1.msra.mxu0 0.0
    %802 = vmatprep.subr.mxu0 0.0
    %803 = vmatpush1.msra.mxu0 0.0
    %804 = vmatprep.subr.mxu0 0.0
    %805 = vmatpush1.msra.mxu0 0.0
    %806 = vmatprep.subr.mxu0 0.0
    %807 = vmatpush1.msra.mxu0 0.0
    %808 = vmatprep.subr.mxu0 0.0
    %809 = vmatpush1.msra.mxu0 0.0
    %810 = vmatprep.subr.mxu0 0.0
    %811 = vmatpush1.msra.mxu0 0.0
    %812 = vmatprep.subr.mxu0 0.0
    %813 = vmatpush1.msra.mxu0 0.0
    %814 = vmatprep.subr.mxu0 0.0
    %815 = vmatpush1.msra.mxu0 0.0
    %816 = vmatprep.subr.mxu0 0.0
    %817 = vmatpush1.msra.mxu0 0.0
    %818 = vmatprep.subr.mxu0 0.0
    %819 = vmatpush1.msra.mxu0 0.0
    %820 = vmatprep.subr.mxu0 0.0
    %821 = vmatpush1.msra.mxu0 0.0
    %822 = vmatprep.mubr.f32.mxu0 0.0
    %823 = vmatmul.mubr.f32.gmra.mrb[0].mxu0 %v622
    %v824 = vpop.f32.mrb[0].mxu0
    %v825 = vadd.f32 0.0, %v824
    %v826 = vpop.f32.mrb[0].mxu0
    %v827 = vadd.f32 0.0, %v826
    %828 = vdwg.mxu0
    %v829 = vadd.f32 %v618, %v754
    %v830 = vadd.f32 %v619, %v756
    %v831 = vadd.f32 %v620, %v825
    %v832 = vadd.f32 %v621, %v827
    %v833 = vxor.u32 %v829, 2147483648
    %v834 = vmul.f32 %v833, 1.442695
    %v835 = vpow.pop %v834
    %v836 = vadd.f32 %v835, 1.0
    %v837 = vrcp.pop %v836
    %v838 = vmul.f32 1.0, %v837
    %v839 = vxor.u32 %v830, 2147483648
    %v840 = vmul.f32 %v839, 1.442695
    %v841 = vpow.pop %v840
    %v842 = vadd.f32 %v841, 1.0
    %v843 = vrcp.pop %v842
    %v844 = vmul.f32 1.0, %v843
    %v845 = vtanh.pop %v831
    %v846 = vxor.u32 %v832, 2147483648
    %v847 = vmul.f32 %v846, 1.442695
    %v848 = vpow.pop %v847
    %v849 = vadd.f32 %v848, 1.0
    %v850 = vrcp.pop %v849
    %v851 = vmul.f32 1.0, %v850
    %v852 = vld [vmem:[#allocation5] sm:$0xff]
    %v853 = vmul.f32 %v844, %v852
    %v854 = vmul.f32 %v838, %v845
    %v855 = vadd.f32 %v853, %v854
    %v856 = vtanh.pop %v855
    %v857 = vmul.f32 %v851, %v856
    %858 = vst [vmem:[#allocation5] sm:$0xff] %v855
    %859 = vst [vmem:[#allocation4] sm:$0xff] %v857
    %s860 = scalar_lea.vmem [#allocation3], 8
    %861 = vst [vmem:[%s860] sm:$0xff] %v857
    %s862 = smul.u32 2, 4
    %s863 = smul.addr %s862, 8
    %s864 = scalar_lea.vmem [#allocation2], %s863
    %v865 = vld [vmem:[%s864] sm:$0xff]
    %v866 = vld [vmem:[%s864 + $0x8] sm:$0xff]
    %v867 = vld [vmem:[%s864 + $0x10] sm:$0xff]
    %v868 = vld [vmem:[%s864 + $0x18] sm:$0xff]
    %v869 = vld [vmem:[#allocation4] sm:$0xff]
    %v870 = vld [vmem:[#allocation7] sm:$0xff]
    %v871 = vld [vmem:[#allocation7 + $0x8] sm:$0xff]
    %v872 = vld [vmem:[#allocation7 + $0x10] sm:$0xff]
    %v873 = vld [vmem:[#allocation7 + $0x18] sm:$0xff]
    %v874 = vld [vmem:[#allocation7 + $0x20] sm:$0xff]
    %v875 = vld [vmem:[#allocation7 + $0x28] sm:$0xff]
    %v876 = vld [vmem:[#allocation7 + $0x30] sm:$0xff]
    %v877 = vld [vmem:[#allocation7 + $0x38] sm:$0xff]
    %v878 = vld [vmem:[#allocation7 + $0x40] sm:$0xff]
    %v879 = vld [vmem:[#allocation7 + $0x48] sm:$0xff]
    %v880 = vld [vmem:[#allocation7 + $0x50] sm:$0xff]
    %v881 = vld [vmem:[#allocation7 + $0x58] sm:$0xff]
    %v882 = vld [vmem:[#allocation7 + $0x60] sm:$0xff]
    %v883 = vld [vmem:[#allocation7 + $0x68] sm:$0xff]
    %v884 = vld [vmem:[#allocation7 + $0x70] sm:$0xff]
    %v885 = vld [vmem:[#allocation7 + $0x78] sm:$0xff]
    %v886 = vld [vmem:[#allocation7 + $0x80] sm:$0xff]
    %v887 = vld [vmem:[#allocation7 + $0x88] sm:$0xff]
    %v888 = vld [vmem:[#allocation7 + $0x90] sm:$0xff]
    %v889 = vld [vmem:[#allocation7 + $0x98] sm:$0xff]
    %v890 = vld [vmem:[#allocation7 + $0xa0] sm:$0xff]
    %v891 = vld [vmem:[#allocation7 + $0xa8] sm:$0xff]
    %v892 = vld [vmem:[#allocation7 + $0xb0] sm:$0xff]
    %v893 = vld [vmem:[#allocation7 + $0xb8] sm:$0xff]
    %v894 = vld [vmem:[#allocation7 + $0xc0] sm:$0xff]
    %v895 = vld [vmem:[#allocation7 + $0xc8] sm:$0xff]
    %v896 = vld [vmem:[#allocation7 + $0xd0] sm:$0xff]
    %v897 = vld [vmem:[#allocation7 + $0xd8] sm:$0xff]
    %v898 = vld [vmem:[#allocation7 + $0xe0] sm:$0xff]
    %v899 = vld [vmem:[#allocation7 + $0xe8] sm:$0xff]
    %v900 = vld [vmem:[#allocation7 + $0xf0] sm:$0xff]
    %v901 = vld [vmem:[#allocation7 + $0xf8] sm:$0xff]
    %v902 = vld [vmem:[#allocation7 + $0x100] sm:$0xff]
    %v903 = vld [vmem:[#allocation7 + $0x108] sm:$0xff]
    %v904 = vld [vmem:[#allocation7 + $0x110] sm:$0xff]
    %v905 = vld [vmem:[#allocation7 + $0x118] sm:$0xff]
    %v906 = vld [vmem:[#allocation7 + $0x120] sm:$0xff]
    %v907 = vld [vmem:[#allocation7 + $0x128] sm:$0xff]
    %v908 = vld [vmem:[#allocation7 + $0x130] sm:$0xff]
    %v909 = vld [vmem:[#allocation7 + $0x138] sm:$0xff]
    %v910 = vld [vmem:[#allocation7 + $0x140] sm:$0xff]
    %v911 = vld [vmem:[#allocation7 + $0x148] sm:$0xff]
    %v912 = vld [vmem:[#allocation7 + $0x150] sm:$0xff]
    %v913 = vld [vmem:[#allocation7 + $0x158] sm:$0xff]
    %v914 = vld [vmem:[#allocation7 + $0x160] sm:$0xff]
    %v915 = vld [vmem:[#allocation7 + $0x168] sm:$0xff]
    %v916 = vld [vmem:[#allocation7 + $0x170] sm:$0xff]
    %v917 = vld [vmem:[#allocation7 + $0x178] sm:$0xff]
    %v918 = vld [vmem:[#allocation7 + $0x180] sm:$0xff]
    %v919 = vld [vmem:[#allocation7 + $0x188] sm:$0xff]
    %v920 = vld [vmem:[#allocation7 + $0x190] sm:$0xff]
    %v921 = vld [vmem:[#allocation7 + $0x198] sm:$0xff]
    %v922 = vld [vmem:[#allocation7 + $0x1a0] sm:$0xff]
    %v923 = vld [vmem:[#allocation7 + $0x1a8] sm:$0xff]
    %v924 = vld [vmem:[#allocation7 + $0x1b0] sm:$0xff]
    %v925 = vld [vmem:[#allocation7 + $0x1b8] sm:$0xff]
    %v926 = vld [vmem:[#allocation7 + $0x1c0] sm:$0xff]
    %v927 = vld [vmem:[#allocation7 + $0x1c8] sm:$0xff]
    %v928 = vld [vmem:[#allocation7 + $0x1d0] sm:$0xff]
    %v929 = vld [vmem:[#allocation7 + $0x1d8] sm:$0xff]
    %v930 = vld [vmem:[#allocation7 + $0x1e0] sm:$0xff]
    %v931 = vld [vmem:[#allocation7 + $0x1e8] sm:$0xff]
    %v932 = vld [vmem:[#allocation7 + $0x1f0] sm:$0xff]
    %v933 = vld [vmem:[#allocation7 + $0x1f8] sm:$0xff]
    %934 = vmatprep.subr.mxu0 %v871
    %935 = vmatpush1.msra.mxu0 %v870
    %936 = vmatprep.subr.mxu0 %v875
    %937 = vmatpush1.msra.mxu0 %v874
    %938 = vmatprep.subr.mxu0 %v879
    %939 = vmatpush1.msra.mxu0 %v878
    %940 = vmatprep.subr.mxu0 %v883
    %941 = vmatpush1.msra.mxu0 %v882
    %942 = vmatprep.subr.mxu0 %v887
    %943 = vmatpush1.msra.mxu0 %v886
    %944 = vmatprep.subr.mxu0 %v891
    %945 = vmatpush1.msra.mxu0 %v890
    %946 = vmatprep.subr.mxu0 %v895
    %947 = vmatpush1.msra.mxu0 %v894
    %948 = vmatprep.subr.mxu0 %v899
    %949 = vmatpush1.msra.mxu0 %v898
    %950 = vmatprep.subr.mxu0 %v903
    %951 = vmatpush1.msra.mxu0 %v902
    %952 = vmatprep.subr.mxu0 %v907
    %953 = vmatpush1.msra.mxu0 %v906
    %954 = vmatprep.subr.mxu0 %v911
    %955 = vmatpush1.msra.mxu0 %v910
    %956 = vmatprep.subr.mxu0 %v915
    %957 = vmatpush1.msra.mxu0 %v914
    %958 = vmatprep.subr.mxu0 %v919
    %959 = vmatpush1.msra.mxu0 %v918
    %960 = vmatprep.subr.mxu0 %v923
    %961 = vmatpush1.msra.mxu0 %v922
    %962 = vmatprep.subr.mxu0 %v927
    %963 = vmatpush1.msra.mxu0 %v926
    %964 = vmatprep.subr.mxu0 %v931
    %965 = vmatpush1.msra.mxu0 %v930
    %966 = vmatprep.subr.mxu0 0.0
    %967 = vmatpush1.msra.mxu0 0.0
    %968 = vmatprep.subr.mxu0 0.0
    %969 = vmatpush1.msra.mxu0 0.0
    %970 = vmatprep.subr.mxu0 0.0
    %971 = vmatpush1.msra.mxu0 0.0
    %972 = vmatprep.subr.mxu0 0.0
    %973 = vmatpush1.msra.mxu0 0.0
    %974 = vmatprep.subr.mxu0 0.0
    %975 = vmatpush1.msra.mxu0 0.0
    %976 = vmatprep.subr.mxu0 0.0
    %977 = vmatpush1.msra.mxu0 0.0
    %978 = vmatprep.subr.mxu0 0.0
    %979 = vmatpush1.msra.mxu0 0.0
    %980 = vmatprep.subr.mxu0 0.0
    %981 = vmatpush1.msra.mxu0 0.0
    %982 = vmatprep.subr.mxu0 0.0
    %983 = vmatpush1.msra.mxu0 0.0
    %984 = vmatprep.subr.mxu0 0.0
    %985 = vmatpush1.msra.mxu0 0.0
    %986 = vmatprep.subr.mxu0 0.0
    %987 = vmatpush1.msra.mxu0 0.0
    %988 = vmatprep.subr.mxu0 0.0
    %989 = vmatpush1.msra.mxu0 0.0
    %990 = vmatprep.subr.mxu0 0.0
    %991 = vmatpush1.msra.mxu0 0.0
    %992 = vmatprep.subr.mxu0 0.0
    %993 = vmatpush1.msra.mxu0 0.0
    %994 = vmatprep.subr.mxu0 0.0
    %995 = vmatpush1.msra.mxu0 0.0
    %996 = vmatprep.subr.mxu0 0.0
    %997 = vmatpush1.msra.mxu0 0.0
    %998 = vmatprep.mubr.f32.mxu0 0.0
    %999 = vmatmul.mubr.f32.gmra.mrb[0].mxu0 %v869
    %v1000 = vpop.f32.mrb[0].mxu0
    %v1001 = vadd.f32 0.0, %v1000
    %v1002 = vpop.f32.mrb[0].mxu0
    %v1003 = vadd.f32 0.0, %v1002
    %1004 = vdwg.mxu0
    %1005 = vmatprep.subr.mxu0 %v873
    %1006 = vmatpush1.msra.mxu0 %v872
    %1007 = vmatprep.subr.mxu0 %v877
    %1008 = vmatpush1.msra.mxu0 %v876
    %1009 = vmatprep.subr.mxu0 %v881
    %1010 = vmatpush1.msra.mxu0 %v880
    %1011 = vmatprep.subr.mxu0 %v885
    %1012 = vmatpush1.msra.mxu0 %v884
    %1013 = vmatprep.subr.mxu0 %v889
    %1014 = vmatpush1.msra.mxu0 %v888
    %1015 = vmatprep.subr.mxu0 %v893
    %1016 = vmatpush1.msra.mxu0 %v892
    %1017 = vmatprep.subr.mxu0 %v897
    %1018 = vmatpush1.msra.mxu0 %v896
    %1019 = vmatprep.subr.mxu0 %v901
    %1020 = vmatpush1.msra.mxu0 %v900
    %1021 = vmatprep.subr.mxu0 %v905
    %1022 = vmatpush1.msra.mxu0 %v904
    %1023 = vmatprep.subr.mxu0 %v909
    %1024 = vmatpush1.msra.mxu0 %v908
    %1025 = vmatprep.subr.mxu0 %v913
    %1026 = vmatpush1.msra.mxu0 %v912
    %1027 = vmatprep.subr.mxu0 %v917
    %1028 = vmatpush1.msra.mxu0 %v916
    %1029 = vmatprep.subr.mxu0 %v921
    %1030 = vmatpush1.msra.mxu0 %v920
    %1031 = vmatprep.subr.mxu0 %v925
    %1032 = vmatpush1.msra.mxu0 %v924
    %1033 = vmatprep.subr.mxu0 %v929
    %1034 = vmatpush1.msra.mxu0 %v928
    %1035 = vmatprep.subr.mxu0 %v933
    %1036 = vmatpush1.msra.mxu0 %v932
    %1037 = vmatprep.subr.mxu0 0.0
    %1038 = vmatpush1.msra.mxu0 0.0
    %1039 = vmatprep.subr.mxu0 0.0
    %1040 = vmatpush1.msra.mxu0 0.0
    %1041 = vmatprep.subr.mxu0 0.0
    %1042 = vmatpush1.msra.mxu0 0.0
    %1043 = vmatprep.subr.mxu0 0.0
    %1044 = vmatpush1.msra.mxu0 0.0
    %1045 = vmatprep.subr.mxu0 0.0
    %1046 = vmatpush1.msra.mxu0 0.0
    %1047 = vmatprep.subr.mxu0 0.0
    %1048 = vmatpush1.msra.mxu0 0.0
    %1049 = vmatprep.subr.mxu0 0.0
    %1050 = vmatpush1.msra.mxu0 0.0
    %1051 = vmatprep.subr.mxu0 0.0
    %1052 = vmatpush1.msra.mxu0 0.0
    %1053 = vmatprep.subr.mxu0 0.0
    %1054 = vmatpush1.msra.mxu0 0.0
    %1055 = vmatprep.subr.mxu0 0.0
    %1056 = vmatpush1.msra.mxu0 0.0
    %1057 = vmatprep.subr.mxu0 0.0
    %1058 = vmatpush1.msra.mxu0 0.0
    %1059 = vmatprep.subr.mxu0 0.0
    %1060 = vmatpush1.msra.mxu0 0.0
    %1061 = vmatprep.subr.mxu0 0.0
    %1062 = vmatpush1.msra.mxu0 0.0
    %1063 = vmatprep.subr.mxu0 0.0
    %1064 = vmatpush1.msra.mxu0 0.0
    %1065 = vmatprep.subr.mxu0 0.0
    %1066 = vmatpush1.msra.mxu0 0.0
    %1067 = vmatprep.subr.mxu0 0.0
    %1068 = vmatpush1.msra.mxu0 0.0
    %1069 = vmatprep.mubr.f32.mxu0 0.0
    %1070 = vmatmul.mubr.f32.gmra.mrb[0].mxu0 %v869
    %v1071 = vpop.f32.mrb[0].mxu0
    %v1072 = vadd.f32 0.0, %v1071
    %v1073 = vpop.f32.mrb[0].mxu0
    %v1074 = vadd.f32 0.0, %v1073
    %1075 = vdwg.mxu0
    %v1076 = vadd.f32 %v865, %v1001
    %v1077 = vadd.f32 %v866, %v1003
    %v1078 = vadd.f32 %v867, %v1072
    %v1079 = vadd.f32 %v868, %v1074
    %v1080 = vxor.u32 %v1076, 2147483648
    %v1081 = vmul.f32 %v1080, 1.442695
    %v1082 = vpow.pop %v1081
    %v1083 = vadd.f32 %v1082, 1.0
    %v1084 = vrcp.pop %v1083
    %v1085 = vmul.f32 1.0, %v1084
    %v1086 = vxor.u32 %v1077, 2147483648
    %v1087 = vmul.f32 %v1086, 1.442695
    %v1088 = vpow.pop %v1087
    %v1089 = vadd.f32 %v1088, 1.0
    %v1090 = vrcp.pop %v1089
    %v1091 = vmul.f32 1.0, %v1090
    %v1092 = vtanh.pop %v1078
    %v1093 = vxor.u32 %v1079, 2147483648
    %v1094 = vmul.f32 %v1093, 1.442695
    %v1095 = vpow.pop %v1094
    %v1096 = vadd.f32 %v1095, 1.0
    %v1097 = vrcp.pop %v1096
    %v1098 = vmul.f32 1.0, %v1097
    %v1099 = vld [vmem:[#allocation5] sm:$0xff]
    %v1100 = vmul.f32 %v1091, %v1099
    %v1101 = vmul.f32 %v1085, %v1092
    %v1102 = vadd.f32 %v1100, %v1101
    %v1103 = vtanh.pop %v1102
    %v1104 = vmul.f32 %v1098, %v1103
    %1105 = vst [vmem:[#allocation5] sm:$0xff] %v1102
    %1106 = vst [vmem:[#allocation4] sm:$0xff] %v1104
    %s1107 = scalar_lea.vmem [#allocation3], 16
    %1108 = vst [vmem:[%s1107] sm:$0xff] %v1104
    %s1109 = smul.u32 3, 4
    %s1110 = smul.addr %s1109, 8
    %s1111 = scalar_lea.vmem [#allocation2], %s1110
    %v1112 = vld [vmem:[%s1111] sm:$0xff]
    %v1113 = vld [vmem:[%s1111 + $0x8] sm:$0xff]
    %v1114 = vld [vmem:[%s1111 + $0x10] sm:$0xff]
    %v1115 = vld [vmem:[%s1111 + $0x18] sm:$0xff]
    %v1116 = vld [vmem:[#allocation4] sm:$0xff]
    %v1117 = vld [vmem:[#allocation7] sm:$0xff]
    %v1118 = vld [vmem:[#allocation7 + $0x8] sm:$0xff]
    %v1119 = vld [vmem:[#allocation7 + $0x10] sm:$0xff]
    %v1120 = vld [vmem:[#allocation7 + $0x18] sm:$0xff]
    %v1121 = vld [vmem:[#allocation7 + $0x20] sm:$0xff]
    %v1122 = vld [vmem:[#allocation7 + $0x28] sm:$0xff]
    %v1123 = vld [vmem:[#allocation7 + $0x30] sm:$0xff]
    %v1124 = vld [vmem:[#allocation7 + $0x38] sm:$0xff]
    %v1125 = vld [vmem:[#allocation7 + $0x40] sm:$0xff]
    %v1126 = vld [vmem:[#allocation7 + $0x48] sm:$0xff]
    %v1127 = vld [vmem:[#allocation7 + $0x50] sm:$0xff]
    %v1128 = vld [vmem:[#allocation7 + $0x58] sm:$0xff]
    %v1129 = vld [vmem:[#allocation7 + $0x60] sm:$0xff]
    %v1130 = vld [vmem:[#allocation7 + $0x68] sm:$0xff]
    %v1131 = vld [vmem:[#allocation7 + $0x70] sm:$0xff]
    %v1132 = vld [vmem:[#allocation7 + $0x78] sm:$0xff]
    %v1133 = vld [vmem:[#allocation7 + $0x80] sm:$0xff]
    %v1134 = vld [vmem:[#allocation7 + $0x88] sm:$0xff]
    %v1135 = vld [vmem:[#allocation7 + $0x90] sm:$0xff]
    %v1136 = vld [vmem:[#allocation7 + $0x98] sm:$0xff]
    %v1137 = vld [vmem:[#allocation7 + $0xa0] sm:$0xff]
    %v1138 = vld [vmem:[#allocation7 + $0xa8] sm:$0xff]
    %v1139 = vld [vmem:[#allocation7 + $0xb0] sm:$0xff]
    %v1140 = vld [vmem:[#allocation7 + $0xb8] sm:$0xff]
    %v1141 = vld [vmem:[#allocation7 + $0xc0] sm:$0xff]
    %v1142 = vld [vmem:[#allocation7 + $0xc8] sm:$0xff]
    %v1143 = vld [vmem:[#allocation7 + $0xd0] sm:$0xff]
    %v1144 = vld [vmem:[#allocation7 + $0xd8] sm:$0xff]
    %v1145 = vld [vmem:[#allocation7 + $0xe0] sm:$0xff]
    %v1146 = vld [vmem:[#allocation7 + $0xe8] sm:$0xff]
    %v1147 = vld [vmem:[#allocation7 + $0xf0] sm:$0xff]
    %v1148 = vld [vmem:[#allocation7 + $0xf8] sm:$0xff]
    %v1149 = vld [vmem:[#allocation7 + $0x100] sm:$0xff]
    %v1150 = vld [vmem:[#allocation7 + $0x108] sm:$0xff]
    %v1151 = vld [vmem:[#allocation7 + $0x110] sm:$0xff]
    %v1152 = vld [vmem:[#allocation7 + $0x118] sm:$0xff]
    %v1153 = vld [vmem:[#allocation7 + $0x120] sm:$0xff]
    %v1154 = vld [vmem:[#allocation7 + $0x128] sm:$0xff]
    %v1155 = vld [vmem:[#allocation7 + $0x130] sm:$0xff]
    %v1156 = vld [vmem:[#allocation7 + $0x138] sm:$0xff]
    %v1157 = vld [vmem:[#allocation7 + $0x140] sm:$0xff]
    %v1158 = vld [vmem:[#allocation7 + $0x148] sm:$0xff]
    %v1159 = vld [vmem:[#allocation7 + $0x150] sm:$0xff]
    %v1160 = vld [vmem:[#allocation7 + $0x158] sm:$0xff]
    %v1161 = vld [vmem:[#allocation7 + $0x160] sm:$0xff]
    %v1162 = vld [vmem:[#allocation7 + $0x168] sm:$0xff]
    %v1163 = vld [vmem:[#allocation7 + $0x170] sm:$0xff]
    %v1164 = vld [vmem:[#allocation7 + $0x178] sm:$0xff]
    %v1165 = vld [vmem:[#allocation7 + $0x180] sm:$0xff]
    %v1166 = vld [vmem:[#allocation7 + $0x188] sm:$0xff]
    %v1167 = vld [vmem:[#allocation7 + $0x190] sm:$0xff]
    %v1168 = vld [vmem:[#allocation7 + $0x198] sm:$0xff]
    %v1169 = vld [vmem:[#allocation7 + $0x1a0] sm:$0xff]
    %v1170 = vld [vmem:[#allocation7 + $0x1a8] sm:$0xff]
    %v1171 = vld [vmem:[#allocation7 + $0x1b0] sm:$0xff]
    %v1172 = vld [vmem:[#allocation7 + $0x1b8] sm:$0xff]
    %v1173 = vld [vmem:[#allocation7 + $0x1c0] sm:$0xff]
    %v1174 = vld [vmem:[#allocation7 + $0x1c8] sm:$0xff]
    %v1175 = vld [vmem:[#allocation7 + $0x1d0] sm:$0xff]
    %v1176 = vld [vmem:[#allocation7 + $0x1d8] sm:$0xff]
    %v1177 = vld [vmem:[#allocation7 + $0x1e0] sm:$0xff]
    %v1178 = vld [vmem:[#allocation7 + $0x1e8] sm:$0xff]
    %v1179 = vld [vmem:[#allocation7 + $0x1f0] sm:$0xff]
    %v1180 = vld [vmem:[#allocation7 + $0x1f8] sm:$0xff]
    %1181 = vmatprep.subr.mxu0 %v1118
    %1182 = vmatpush1.msra.mxu0 %v1117
    %1183 = vmatprep.subr.mxu0 %v1122
    %1184 = vmatpush1.msra.mxu0 %v1121
    %1185 = vmatprep.subr.mxu0 %v1126
    %1186 = vmatpush1.msra.mxu0 %v1125
    %1187 = vmatprep.subr.mxu0 %v1130
    %1188 = vmatpush1.msra.mxu0 %v1129
    %1189 = vmatprep.subr.mxu0 %v1134
    %1190 = vmatpush1.msra.mxu0 %v1133
    %1191 = vmatprep.subr.mxu0 %v1138
    %1192 = vmatpush1.msra.mxu0 %v1137
    %1193 = vmatprep.subr.mxu0 %v1142
    %1194 = vmatpush1.msra.mxu0 %v1141
    %1195 = vmatprep.subr.mxu0 %v1146
    %1196 = vmatpush1.msra.mxu0 %v1145
    %1197 = vmatprep.subr.mxu0 %v1150
    %1198 = vmatpush1.msra.mxu0 %v1149
    %1199 = vmatprep.subr.mxu0 %v1154
    %1200 = vmatpush1.msra.mxu0 %v1153
    %1201 = vmatprep.subr.mxu0 %v1158
    %1202 = vmatpush1.msra.mxu0 %v1157
    %1203 = vmatprep.subr.mxu0 %v1162
    %1204 = vmatpush1.msra.mxu0 %v1161
    %1205 = vmatprep.subr.mxu0 %v1166
    %1206 = vmatpush1.msra.mxu0 %v1165
    %1207 = vmatprep.subr.mxu0 %v1170
    %1208 = vmatpush1.msra.mxu0 %v1169
    %1209 = vmatprep.subr.mxu0 %v1174
    %1210 = vmatpush1.msra.mxu0 %v1173
    %1211 = vmatprep.subr.mxu0 %v1178
    %1212 = vmatpush1.msra.mxu0 %v1177
    %1213 = vmatprep.subr.mxu0 0.0
    %1214 = vmatpush1.msra.mxu0 0.0
    %1215 = vmatprep.subr.mxu0 0.0
    %1216 = vmatpush1.msra.mxu0 0.0
    %1217 = vmatprep.subr.mxu0 0.0
    %1218 = vmatpush1.msra.mxu0 0.0
    %1219 = vmatprep.subr.mxu0 0.0
    %1220 = vmatpush1.msra.mxu0 0.0
    %1221 = vmatprep.subr.mxu0 0.0
    %1222 = vmatpush1.msra.mxu0 0.0
    %1223 = vmatprep.subr.mxu0 0.0
    %1224 = vmatpush1.msra.mxu0 0.0
    %1225 = vmatprep.subr.mxu0 0.0
    %1226 = vmatpush1.msra.mxu0 0.0
    %1227 = vmatprep.subr.mxu0 0.0
    %1228 = vmatpush1.msra.mxu0 0.0
    %1229 = vmatprep.subr.mxu0 0.0
    %1230 = vmatpush1.msra.mxu0 0.0
    %1231 = vmatprep.subr.mxu0 0.0
    %1232 = vmatpush1.msra.mxu0 0.0
    %1233 = vmatprep.subr.mxu0 0.0
    %1234 = vmatpush1.msra.mxu0 0.0
    %1235 = vmatprep.subr.mxu0 0.0
    %1236 = vmatpush1.msra.mxu0 0.0
    %1237 = vmatprep.subr.mxu0 0.0
    %1238 = vmatpush1.msra.mxu0 0.0
    %1239 = vmatprep.subr.mxu0 0.0
    %1240 = vmatpush1.msra.mxu0 0.0
    %1241 = vmatprep.subr.mxu0 0.0
    %1242 = vmatpush1.msra.mxu0 0.0
    %1243 = vmatprep.subr.mxu0 0.0
    %1244 = vmatpush1.msra.mxu0 0.0
    %1245 = vmatprep.mubr.f32.mxu0 0.0
    %1246 = vmatmul.mubr.f32.gmra.mrb[0].mxu0 %v1116
    %v1247 = vpop.f32.mrb[0].mxu0
    %v1248 = vadd.f32 0.0, %v1247
    %v1249 = vpop.f32.mrb[0].mxu0
    %v1250 = vadd.f32 0.0, %v1249
    %1251 = vdwg.mxu0
    %1252 = vmatprep.subr.mxu0 %v1120
    %1253 = vmatpush1.msra.mxu0 %v1119
    %1254 = vmatprep.subr.mxu0 %v1124
    %1255 = vmatpush1.msra.mxu0 %v1123
    %1256 = vmatprep.subr.mxu0 %v1128
    %1257 = vmatpush1.msra.mxu0 %v1127
    %1258 = vmatprep.subr.mxu0 %v1132
    %1259 = vmatpush1.msra.mxu0 %v1131
    %1260 = vmatprep.subr.mxu0 %v1136
    %1261 = vmatpush1.msra.mxu0 %v1135
    %1262 = vmatprep.subr.mxu0 %v1140
    %1263 = vmatpush1.msra.mxu0 %v1139
    %1264 = vmatprep.subr.mxu0 %v1144
    %1265 = vmatpush1.msra.mxu0 %v1143
    %1266 = vmatprep.subr.mxu0 %v1148
    %1267 = vmatpush1.msra.mxu0 %v1147
    %1268 = vmatprep.subr.mxu0 %v1152
    %1269 = vmatpush1.msra.mxu0 %v1151
    %1270 = vmatprep.subr.mxu0 %v1156
    %1271 = vmatpush1.msra.mxu0 %v1155
    %1272 = vmatprep.subr.mxu0 %v1160
    %1273 = vmatpush1.msra.mxu0 %v1159
    %1274 = vmatprep.subr.mxu0 %v1164
    %1275 = vmatpush1.msra.mxu0 %v1163
    %1276 = vmatprep.subr.mxu0 %v1168
    %1277 = vmatpush1.msra.mxu0 %v1167
    %1278 = vmatprep.subr.mxu0 %v1172
    %1279 = vmatpush1.msra.mxu0 %v1171
    %1280 = vmatprep.subr.mxu0 %v1176
    %1281 = vmatpush1.msra.mxu0 %v1175
    %1282 = vmatprep.subr.mxu0 %v1180
    %1283 = vmatpush1.msra.mxu0 %v1179
    %1284 = vmatprep.subr.mxu0 0.0
    %1285 = vmatpush1.msra.mxu0 0.0
    %1286 = vmatprep.subr.mxu0 0.0
    %1287 = vmatpush1.msra.mxu0 0.0
    %1288 = vmatprep.subr.mxu0 0.0
    %1289 = vmatpush1.msra.mxu0 0.0
    %1290 = vmatprep.subr.mxu0 0.0
    %1291 = vmatpush1.msra.mxu0 0.0
    %1292 = vmatprep.subr.mxu0 0.0
    %1293 = vmatpush1.msra.mxu0 0.0
    %1294 = vmatprep.subr.mxu0 0.0
    %1295 = vmatpush1.msra.mxu0 0.0
    %1296 = vmatprep.subr.mxu0 0.0
    %1297 = vmatpush1.msra.mxu0 0.0
    %1298 = vmatprep.subr.mxu0 0.0
    %1299 = vmatpush1.msra.mxu0 0.0
    %1300 = vmatprep.subr.mxu0 0.0
    %1301 = vmatpush1.msra.mxu0 0.0
    %1302 = vmatprep.subr.mxu0 0.0
    %1303 = vmatpush1.msra.mxu0 0.0
    %1304 = vmatprep.subr.mxu0 0.0
    %1305 = vmatpush1.msra.mxu0 0.0
    %1306 = vmatprep.subr.mxu0 0.0
    %1307 = vmatpush1.msra.mxu0 0.0
    %1308 = vmatprep.subr.mxu0 0.0
    %1309 = vmatpush1.msra.mxu0 0.0
    %1310 = vmatprep.subr.mxu0 0.0
    %1311 = vmatpush1.msra.mxu0 0.0
    %1312 = vmatprep.subr.mxu0 0.0
    %1313 = vmatpush1.msra.mxu0 0.0
    %1314 = vmatprep.subr.mxu0 0.0
    %1315 = vmatpush1.msra.mxu0 0.0
    %1316 = vmatprep.mubr.f32.mxu0 0.0
    %1317 = vmatmul.mubr.f32.gmra.mrb[0].mxu0 %v1116
    %v1318 = vpop.f32.mrb[0].mxu0
    %v1319 = vadd.f32 0.0, %v1318
    %v1320 = vpop.f32.mrb[0].mxu0
    %v1321 = vadd.f32 0.0, %v1320
    %1322 = vdwg.mxu0
    %v1323 = vadd.f32 %v1112, %v1248
    %v1324 = vadd.f32 %v1113, %v1250
    %v1325 = vadd.f32 %v1114, %v1319
    %v1326 = vadd.f32 %v1115, %v1321
    %v1327 = vxor.u32 %v1323, 2147483648
    %v1328 = vmul.f32 %v1327, 1.442695
    %v1329 = vpow.pop %v1328
    %v1330 = vadd.f32 %v1329, 1.0
    %v1331 = vrcp.pop %v1330
    %v1332 = vmul.f32 1.0, %v1331
    %v1333 = vxor.u32 %v1324, 2147483648
    %v1334 = vmul.f32 %v1333, 1.442695
    %v1335 = vpow.pop %v1334
    %v1336 = vadd.f32 %v1335, 1.0
    %v1337 = vrcp.pop %v1336
    %v1338 = vmul.f32 1.0, %v1337
    %v1339 = vtanh.pop %v1325
    %v1340 = vxor.u32 %v1326, 2147483648
    %v1341 = vmul.f32 %v1340, 1.442695
    %v1342 = vpow.pop %v1341
    %v1343 = vadd.f32 %v1342, 1.0
    %v1344 = vrcp.pop %v1343
    %v1345 = vmul.f32 1.0, %v1344
    %v1346 = vld [vmem:[#allocation5] sm:$0xff]
    %v1347 = vmul.f32 %v1338, %v1346
    %v1348 = vmul.f32 %v1332, %v1339
    %v1349 = vadd.f32 %v1347, %v1348
    %v1350 = vtanh.pop %v1349
    %v1351 = vmul.f32 %v1345, %v1350
    %1352 = vst [vmem:[#allocation5] sm:$0xff] %v1349
    %1353 = vst [vmem:[#allocation4] sm:$0xff] %v1351
    %s1354 = scalar_lea.vmem [#allocation3], 24
    %1355 = vst [vmem:[%s1354] sm:$0xff] %v1351
    %s1356 = smul.u32 4, 4
    %s1357 = smul.addr %s1356, 8
    %s1358 = scalar_lea.vmem [#allocation2], %s1357
    %v1359 = vld [vmem:[%s1358] sm:$0xff]
    %v1360 = vld [vmem:[%s1358 + $0x8] sm:$0xff]
    %v1361 = vld [vmem:[%s1358 + $0x10] sm:$0xff]
    %v1362 = vld [vmem:[%s1358 + $0x18] sm:$0xff]
    %v1363 = vld [vmem:[#allocation4] sm:$0xff]
    %v1364 = vld [vmem:[#allocation7] sm:$0xff]
    %v1365 = vld [vmem:[#allocation7 + $0x8] sm:$0xff]
    %v1366 = vld [vmem:[#allocation7 + $0x10] sm:$0xff]
    %v1367 = vld [vmem:[#allocation7 + $0x18] sm:$0xff]
    %v1368 = vld [vmem:[#allocation7 + $0x20] sm:$0xff]
    %v1369 = vld [vmem:[#allocation7 + $0x28] sm:$0xff]
    %v1370 = vld [vmem:[#allocation7 + $0x30] sm:$0xff]
    %v1371 = vld [vmem:[#allocation7 + $0x38] sm:$0xff]
    %v1372 = vld [vmem:[#allocation7 + $0x40] sm:$0xff]
    %v1373 = vld [vmem:[#allocation7 + $0x48] sm:$0xff]
    %v1374 = vld [vmem:[#allocation7 + $0x50] sm:$0xff]
    %v1375 = vld [vmem:[#allocation7 + $0x58] sm:$0xff]
    %v1376 = vld [vmem:[#allocation7 + $0x60] sm:$0xff]
    %v1377 = vld [vmem:[#allocation7 + $0x68] sm:$0xff]
    %v1378 = vld [vmem:[#allocation7 + $0x70] sm:$0xff]
    %v1379 = vld [vmem:[#allocation7 + $0x78] sm:$0xff]
    %v1380 = vld [vmem:[#allocation7 + $0x80] sm:$0xff]
    %v1381 = vld [vmem:[#allocation7 + $0x88] sm:$0xff]
    %v1382 = vld [vmem:[#allocation7 + $0x90] sm:$0xff]
    %v1383 = vld [vmem:[#allocation7 + $0x98] sm:$0xff]
    %v1384 = vld [vmem:[#allocation7 + $0xa0] sm:$0xff]
    %v1385 = vld [vmem:[#allocation7 + $0xa8] sm:$0xff]
    %v1386 = vld [vmem:[#allocation7 + $0xb0] sm:$0xff]
    %v1387 = vld [vmem:[#allocation7 + $0xb8] sm:$0xff]
    %v1388 = vld [vmem:[#allocation7 + $0xc0] sm:$0xff]
    %v1389 = vld [vmem:[#allocation7 + $0xc8] sm:$0xff]
    %v1390 = vld [vmem:[#allocation7 + $0xd0] sm:$0xff]
    %v1391 = vld [vmem:[#allocation7 + $0xd8] sm:$0xff]
    %v1392 = vld [vmem:[#allocation7 + $0xe0] sm:$0xff]
    %v1393 = vld [vmem:[#allocation7 + $0xe8] sm:$0xff]
    %v1394 = vld [vmem:[#allocation7 + $0xf0] sm:$0xff]
    %v1395 = vld [vmem:[#allocation7 + $0xf8] sm:$0xff]
    %v1396 = vld [vmem:[#allocation7 + $0x100] sm:$0xff]
    %v1397 = vld [vmem:[#allocation7 + $0x108] sm:$0xff]
    %v1398 = vld [vmem:[#allocation7 + $0x110] sm:$0xff]
    %v1399 = vld [vmem:[#allocation7 + $0x118] sm:$0xff]
    %v1400 = vld [vmem:[#allocation7 + $0x120] sm:$0xff]
    %v1401 = vld [vmem:[#allocation7 + $0x128] sm:$0xff]
    %v1402 = vld [vmem:[#allocation7 + $0x130] sm:$0xff]
    %v1403 = vld [vmem:[#allocation7 + $0x138] sm:$0xff]
    %v1404 = vld [vmem:[#allocation7 + $0x140] sm:$0xff]
    %v1405 = vld [vmem:[#allocation7 + $0x148] sm:$0xff]
    %v1406 = vld [vmem:[#allocation7 + $0x150] sm:$0xff]
    %v1407 = vld [vmem:[#allocation7 + $0x158] sm:$0xff]
    %v1408 = vld [vmem:[#allocation7 + $0x160] sm:$0xff]
    %v1409 = vld [vmem:[#allocation7 + $0x168] sm:$0xff]
    %v1410 = vld [vmem:[#allocation7 + $0x170] sm:$0xff]
    %v1411 = vld [vmem:[#allocation7 + $0x178] sm:$0xff]
    %v1412 = vld [vmem:[#allocation7 + $0x180] sm:$0xff]
    %v1413 = vld [vmem:[#allocation7 + $0x188] sm:$0xff]
    %v1414 = vld [vmem:[#allocation7 + $0x190] sm:$0xff]
    %v1415 = vld [vmem:[#allocation7 + $0x198] sm:$0xff]
    %v1416 = vld [vmem:[#allocation7 + $0x1a0] sm:$0xff]
    %v1417 = vld [vmem:[#allocation7 + $0x1a8] sm:$0xff]
    %v1418 = vld [vmem:[#allocation7 + $0x1b0] sm:$0xff]
    %v1419 = vld [vmem:[#allocation7 + $0x1b8] sm:$0xff]
    %v1420 = vld [vmem:[#allocation7 + $0x1c0] sm:$0xff]
    %v1421 = vld [vmem:[#allocation7 + $0x1c8] sm:$0xff]
    %v1422 = vld [vmem:[#allocation7 + $0x1d0] sm:$0xff]
    %v1423 = vld [vmem:[#allocation7 + $0x1d8] sm:$0xff]
    %v1424 = vld [vmem:[#allocation7 + $0x1e0] sm:$0xff]
    %v1425 = vld [vmem:[#allocation7 + $0x1e8] sm:$0xff]
    %v1426 = vld [vmem:[#allocation7 + $0x1f0] sm:$0xff]
    %v1427 = vld [vmem:[#allocation7 + $0x1f8] sm:$0xff]
    %1428 = vmatprep.subr.mxu0 %v1365
    %1429 = vmatpush1.msra.mxu0 %v1364
    %1430 = vmatprep.subr.mxu0 %v1369
    %1431 = vmatpush1.msra.mxu0 %v1368
    %1432 = vmatprep.subr.mxu0 %v1373
    %1433 = vmatpush1.msra.mxu0 %v1372
    %1434 = vmatprep.subr.mxu0 %v1377
    %1435 = vmatpush1.msra.mxu0 %v1376
    %1436 = vmatprep.subr.mxu0 %v1381
    %1437 = vmatpush1.msra.mxu0 %v1380
    %1438 = vmatprep.subr.mxu0 %v1385
    %1439 = vmatpush1.msra.mxu0 %v1384
    %1440 = vmatprep.subr.mxu0 %v1389
    %1441 = vmatpush1.msra.mxu0 %v1388
    %1442 = vmatprep.subr.mxu0 %v1393
    %1443 = vmatpush1.msra.mxu0 %v1392
    %1444 = vmatprep.subr.mxu0 %v1397
    %1445 = vmatpush1.msra.mxu0 %v1396
    %1446 = vmatprep.subr.mxu0 %v1401
    %1447 = vmatpush1.msra.mxu0 %v1400
    %1448 = vmatprep.subr.mxu0 %v1405
    %1449 = vmatpush1.msra.mxu0 %v1404
    %1450 = vmatprep.subr.mxu0 %v1409
    %1451 = vmatpush1.msra.mxu0 %v1408
    %1452 = vmatprep.subr.mxu0 %v1413
    %1453 = vmatpush1.msra.mxu0 %v1412
    %1454 = vmatprep.subr.mxu0 %v1417
    %1455 = vmatpush1.msra.mxu0 %v1416
    %1456 = vmatprep.subr.mxu0 %v1421
    %1457 = vmatpush1.msra.mxu0 %v1420
    %1458 = vmatprep.subr.mxu0 %v1425
    %1459 = vmatpush1.msra.mxu0 %v1424
    %1460 = vmatprep.subr.mxu0 0.0
    %1461 = vmatpush1.msra.mxu0 0.0
    %1462 = vmatprep.subr.mxu0 0.0
    %1463 = vmatpush1.msra.mxu0 0.0
    %1464 = vmatprep.subr.mxu0 0.0
    %1465 = vmatpush1.msra.mxu0 0.0
    %1466 = vmatprep.subr.mxu0 0.0
    %1467 = vmatpush1.msra.mxu0 0.0
    %1468 = vmatprep.subr.mxu0 0.0
    %1469 = vmatpush1.msra.mxu0 0.0
    %1470 = vmatprep.subr.mxu0 0.0
    %1471 = vmatpush1.msra.mxu0 0.0
    %1472 = vmatprep.subr.mxu0 0.0
    %1473 = vmatpush1.msra.mxu0 0.0
    %1474 = vmatprep.subr.mxu0 0.0
    %1475 = vmatpush1.msra.mxu0 0.0
    %1476 = vmatprep.subr.mxu0 0.0
    %1477 = vmatpush1.msra.mxu0 0.0
    %1478 = vmatprep.subr.mxu0 0.0
    %1479 = vmatpush1.msra.mxu0 0.0
    %1480 = vmatprep.subr.mxu0 0.0
    %1481 = vmatpush1.msra.mxu0 0.0
    %1482 = vmatprep.subr.mxu0 0.0
    %1483 = vmatpush1.msra.mxu0 0.0
    %1484 = vmatprep.subr.mxu0 0.0
    %1485 = vmatpush1.msra.mxu0 0.0
    %1486 = vmatprep.subr.mxu0 0.0
    %1487 = vmatpush1.msra.mxu0 0.0
    %1488 = vmatprep.subr.mxu0 0.0
    %1489 = vmatpush1.msra.mxu0 0.0
    %1490 = vmatprep.subr.mxu0 0.0
    %1491 = vmatpush1.msra.mxu0 0.0
    %1492 = vmatprep.mubr.f32.mxu0 0.0
    %1493 = vmatmul.mubr.f32.gmra.mrb[0].mxu0 %v1363
    %v1494 = vpop.f32.mrb[0].mxu0
    %v1495 = vadd.f32 0.0, %v1494
    %v1496 = vpop.f32.mrb[0].mxu0
    %v1497 = vadd.f32 0.0, %v1496
    %1498 = vdwg.mxu0
    %1499 = vmatprep.subr.mxu0 %v1367
    %1500 = vmatpush1.msra.mxu0 %v1366
    %1501 = vmatprep.subr.mxu0 %v1371
    %1502 = vmatpush1.msra.mxu0 %v1370
    %1503 = vmatprep.subr.mxu0 %v1375
    %1504 = vmatpush1.msra.mxu0 %v1374
    %1505 = vmatprep.subr.mxu0 %v1379
    %1506 = vmatpush1.msra.mxu0 %v1378
    %1507 = vmatprep.subr.mxu0 %v1383
    %1508 = vmatpush1.msra.mxu0 %v1382
    %1509 = vmatprep.subr.mxu0 %v1387
    %1510 = vmatpush1.msra.mxu0 %v1386
    %1511 = vmatprep.subr.mxu0 %v1391
    %1512 = vmatpush1.msra.mxu0 %v1390
    %1513 = vmatprep.subr.mxu0 %v1395
    %1514 = vmatpush1.msra.mxu0 %v1394
    %1515 = vmatprep.subr.mxu0 %v1399
    %1516 = vmatpush1.msra.mxu0 %v1398
    %1517 = vmatprep.subr.mxu0 %v1403
    %1518 = vmatpush1.msra.mxu0 %v1402
    %1519 = vmatprep.subr.mxu0 %v1407
    %1520 = vmatpush1.msra.mxu0 %v1406
    %1521 = vmatprep.subr.mxu0 %v1411
    %1522 = vmatpush1.msra.mxu0 %v1410
    %1523 = vmatprep.subr.mxu0 %v1415
    %1524 = vmatpush1.msra.mxu0 %v1414
    %1525 = vmatprep.subr.mxu0 %v1419
    %1526 = vmatpush1.msra.mxu0 %v1418
    %1527 = vmatprep.subr.mxu0 %v1423
    %1528 = vmatpush1.msra.mxu0 %v1422
    %1529 = vmatprep.subr.mxu0 %v1427
    %1530 = vmatpush1.msra.mxu0 %v1426
    %1531 = vmatprep.subr.mxu0 0.0
    %1532 = vmatpush1.msra.mxu0 0.0
    %1533 = vmatprep.subr.mxu0 0.0
    %1534 = vmatpush1.msra.mxu0 0.0
    %1535 = vmatprep.subr.mxu0 0.0
    %1536 = vmatpush1.msra.mxu0 0.0
    %1537 = vmatprep.subr.mxu0 0.0
    %1538 = vmatpush1.msra.mxu0 0.0
    %1539 = vmatprep.subr.mxu0 0.0
    %1540 = vmatpush1.msra.mxu0 0.0
    %1541 = vmatprep.subr.mxu0 0.0
    %1542 = vmatpush1.msra.mxu0 0.0
    %1543 = vmatprep.subr.mxu0 0.0
    %1544 = vmatpush1.msra.mxu0 0.0
    %1545 = vmatprep.subr.mxu0 0.0
    %1546 = vmatpush1.msra.mxu0 0.0
    %1547 = vmatprep.subr.mxu0 0.0
    %1548 = vmatpush1.msra.mxu0 0.0
    %1549 = vmatprep.subr.mxu0 0.0
    %1550 = vmatpush1.msra.mxu0 0.0
    %1551 = vmatprep.subr.mxu0 0.0
    %1552 = vmatpush1.msra.mxu0 0.0
    %1553 = vmatprep.subr.mxu0 0.0
    %1554 = vmatpush1.msra.mxu0 0.0
    %1555 = vmatprep.subr.mxu0 0.0
    %1556 = vmatpush1.msra.mxu0 0.0
    %1557 = vmatprep.subr.mxu0 0.0
    %1558 = vmatpush1.msra.mxu0 0.0
    %1559 = vmatprep.subr.mxu0 0.0
    %1560 = vmatpush1.msra.mxu0 0.0
    %1561 = vmatprep.subr.mxu0 0.0
    %1562 = vmatpush1.msra.mxu0 0.0
    %1563 = vmatprep.mubr.f32.mxu0 0.0
    %1564 = vmatmul.mubr.f32.gmra.mrb[0].mxu0 %v1363
    %v1565 = vpop.f32.mrb[0].mxu0
    %v1566 = vadd.f32 0.0, %v1565
    %v1567 = vpop.f32.mrb[0].mxu0
    %v1568 = vadd.f32 0.0, %v1567
    %1569 = vdwg.mxu0
    %v1570 = vadd.f32 %v1359, %v1495
    %v1571 = vadd.f32 %v1360, %v1497
    %v1572 = vadd.f32 %v1361, %v1566
    %v1573 = vadd.f32 %v1362, %v1568
    %v1574 = vxor.u32 %v1570, 2147483648
    %v1575 = vmul.f32 %v1574, 1.442695
    %v1576 = vpow.pop %v1575
    %v1577 = vadd.f32 %v1576, 1.0
    %v1578 = vrcp.pop %v1577
    %v1579 = vmul.f32 1.0, %v1578
    %v1580 = vxor.u32 %v1571, 2147483648
    %v1581 = vmul.f32 %v1580, 1.442695
    %v1582 = vpow.pop %v1581
    %v1583 = vadd.f32 %v1582, 1.0
    %v1584 = vrcp.pop %v1583
    %v1585 = vmul.f32 1.0, %v1584
    %v1586 = vtanh.pop %v1572
    %v1587 = vxor.u32 %v1573, 2147483648
    %v1588 = vmul.f32 %v1587, 1.442695
    %v1589 = vpow.pop %v1588
    %v1590 = vadd.f32 %v1589, 1.0
    %v1591 = vrcp.pop %v1590
    %v1592 = vmul.f32 1.0, %v1591
    %v1593 = vld [vmem:[#allocation5] sm:$0xff]
    %v1594 = vmul.f32 %v1585, %v1593
    %v1595 = vmul.f32 %v1579, %v1586
    %v1596 = vadd.f32 %v1594, %v1595
    %v1597 = vtanh.pop %v1596
    %v1598 = vmul.f32 %v1592, %v1597
    %1599 = vst [vmem:[#allocation5] sm:$0xff] %v1596
    %1600 = vst [vmem:[#allocation4] sm:$0xff] %v1598
    %s1601 = scalar_lea.vmem [#allocation3], 32
    %1602 = vst [vmem:[%s1601] sm:$0xff] %v1598
    %s1603 = smul.u32 5, 4
    %s1604 = smul.addr %s1603, 8
    %s1605 = scalar_lea.vmem [#allocation2], %s1604
    %v1606 = vld [vmem:[%s1605] sm:$0xff]
    %v1607 = vld [vmem:[%s1605 + $0x8] sm:$0xff]
    %v1608 = vld [vmem:[%s1605 + $0x10] sm:$0xff]
    %v1609 = vld [vmem:[%s1605 + $0x18] sm:$0xff]
    %v1610 = vld [vmem:[#allocation4] sm:$0xff]
    %v1611 = vld [vmem:[#allocation7] sm:$0xff]
    %v1612 = vld [vmem:[#allocation7 + $0x8] sm:$0xff]
    %v1613 = vld [vmem:[#allocation7 + $0x10] sm:$0xff]
    %v1614 = vld [vmem:[#allocation7 + $0x18] sm:$0xff]
    %v1615 = vld [vmem:[#allocation7 + $0x20] sm:$0xff]
    %v1616 = vld [vmem:[#allocation7 + $0x28] sm:$0xff]
    %v1617 = vld [vmem:[#allocation7 + $0x30] sm:$0xff]
    %v1618 = vld [vmem:[#allocation7 + $0x38] sm:$0xff]
    %v1619 = vld [vmem:[#allocation7 + $0x40] sm:$0xff]
    %v1620 = vld [vmem:[#allocation7 + $0x48] sm:$0xff]
    %v1621 = vld [vmem:[#allocation7 + $0x50] sm:$0xff]
    %v1622 = vld [vmem:[#allocation7 + $0x58] sm:$0xff]
    %v1623 = vld [vmem:[#allocation7 + $0x60] sm:$0xff]
    %v1624 = vld [vmem:[#allocation7 + $0x68] sm:$0xff]
    %v1625 = vld [vmem:[#allocation7 + $0x70] sm:$0xff]
    %v1626 = vld [vmem:[#allocation7 + $0x78] sm:$0xff]
    %v1627 = vld [vmem:[#allocation7 + $0x80] sm:$0xff]
    %v1628 = vld [vmem:[#allocation7 + $0x88] sm:$0xff]
    %v1629 = vld [vmem:[#allocation7 + $0x90] sm:$0xff]
    %v1630 = vld [vmem:[#allocation7 + $0x98] sm:$0xff]
    %v1631 = vld [vmem:[#allocation7 + $0xa0] sm:$0xff]
    %v1632 = vld [vmem:[#allocation7 + $0xa8] sm:$0xff]
    %v1633 = vld [vmem:[#allocation7 + $0xb0] sm:$0xff]
    %v1634 = vld [vmem:[#allocation7 + $0xb8] sm:$0xff]
    %v1635 = vld [vmem:[#allocation7 + $0xc0] sm:$0xff]
    %v1636 = vld [vmem:[#allocation7 + $0xc8] sm:$0xff]
    %v1637 = vld [vmem:[#allocation7 + $0xd0] sm:$0xff]
    %v1638 = vld [vmem:[#allocation7 + $0xd8] sm:$0xff]
    %v1639 = vld [vmem:[#allocation7 + $0xe0] sm:$0xff]
    %v1640 = vld [vmem:[#allocation7 + $0xe8] sm:$0xff]
    %v1641 = vld [vmem:[#allocation7 + $0xf0] sm:$0xff]
    %v1642 = vld [vmem:[#allocation7 + $0xf8] sm:$0xff]
    %v1643 = vld [vmem:[#allocation7 + $0x100] sm:$0xff]
    %v1644 = vld [vmem:[#allocation7 + $0x108] sm:$0xff]
    %v1645 = vld [vmem:[#allocation7 + $0x110] sm:$0xff]
    %v1646 = vld [vmem:[#allocation7 + $0x118] sm:$0xff]
    %v1647 = vld [vmem:[#allocation7 + $0x120] sm:$0xff]
    %v1648 = vld [vmem:[#allocation7 + $0x128] sm:$0xff]
    %v1649 = vld [vmem:[#allocation7 + $0x130] sm:$0xff]
    %v1650 = vld [vmem:[#allocation7 + $0x138] sm:$0xff]
    %v1651 = vld [vmem:[#allocation7 + $0x140] sm:$0xff]
    %v1652 = vld [vmem:[#allocation7 + $0x148] sm:$0xff]
    %v1653 = vld [vmem:[#allocation7 + $0x150] sm:$0xff]
    %v1654 = vld [vmem:[#allocation7 + $0x158] sm:$0xff]
    %v1655 = vld [vmem:[#allocation7 + $0x160] sm:$0xff]
    %v1656 = vld [vmem:[#allocation7 + $0x168] sm:$0xff]
    %v1657 = vld [vmem:[#allocation7 + $0x170] sm:$0xff]
    %v1658 = vld [vmem:[#allocation7 + $0x178] sm:$0xff]
    %v1659 = vld [vmem:[#allocation7 + $0x180] sm:$0xff]
    %v1660 = vld [vmem:[#allocation7 + $0x188] sm:$0xff]
    %v1661 = vld [vmem:[#allocation7 + $0x190] sm:$0xff]
    %v1662 = vld [vmem:[#allocation7 + $0x198] sm:$0xff]
    %v1663 = vld [vmem:[#allocation7 + $0x1a0] sm:$0xff]
    %v1664 = vld [vmem:[#allocation7 + $0x1a8] sm:$0xff]
    %v1665 = vld [vmem:[#allocation7 + $0x1b0] sm:$0xff]
    %v1666 = vld [vmem:[#allocation7 + $0x1b8] sm:$0xff]
    %v1667 = vld [vmem:[#allocation7 + $0x1c0] sm:$0xff]
    %v1668 = vld [vmem:[#allocation7 + $0x1c8] sm:$0xff]
    %v1669 = vld [vmem:[#allocation7 + $0x1d0] sm:$0xff]
    %v1670 = vld [vmem:[#allocation7 + $0x1d8] sm:$0xff]
    %v1671 = vld [vmem:[#allocation7 + $0x1e0] sm:$0xff]
    %v1672 = vld [vmem:[#allocation7 + $0x1e8] sm:$0xff]
    %v1673 = vld [vmem:[#allocation7 + $0x1f0] sm:$0xff]
    %v1674 = vld [vmem:[#allocation7 + $0x1f8] sm:$0xff]
    %1675 = vmatprep.subr.mxu0 %v1612
    %1676 = vmatpush1.msra.mxu0 %v1611
    %1677 = vmatprep.subr.mxu0 %v1616
    %1678 = vmatpush1.msra.mxu0 %v1615
    %1679 = vmatprep.subr.mxu0 %v1620
    %1680 = vmatpush1.msra.mxu0 %v1619
    %1681 = vmatprep.subr.mxu0 %v1624
    %1682 = vmatpush1.msra.mxu0 %v1623
    %1683 = vmatprep.subr.mxu0 %v1628
    %1684 = vmatpush1.msra.mxu0 %v1627
    %1685 = vmatprep.subr.mxu0 %v1632
    %1686 = vmatpush1.msra.mxu0 %v1631
    %1687 = vmatprep.subr.mxu0 %v1636
    %1688 = vmatpush1.msra.mxu0 %v1635
    %1689 = vmatprep.subr.mxu0 %v1640
    %1690 = vmatpush1.msra.mxu0 %v1639
    %1691 = vmatprep.subr.mxu0 %v1644
    %1692 = vmatpush1.msra.mxu0 %v1643
    %1693 = vmatprep.subr.mxu0 %v1648
    %1694 = vmatpush1.msra.mxu0 %v1647
    %1695 = vmatprep.subr.mxu0 %v1652
    %1696 = vmatpush1.msra.mxu0 %v1651
    %1697 = vmatprep.subr.mxu0 %v1656
    %1698 = vmatpush1.msra.mxu0 %v1655
    %1699 = vmatprep.subr.mxu0 %v1660
    %1700 = vmatpush1.msra.mxu0 %v1659
    %1701 = vmatprep.subr.mxu0 %v1664
    %1702 = vmatpush1.msra.mxu0 %v1663
    %1703 = vmatprep.subr.mxu0 %v1668
    %1704 = vmatpush1.msra.mxu0 %v1667
    %1705 = vmatprep.subr.mxu0 %v1672
    %1706 = vmatpush1.msra.mxu0 %v1671
    %1707 = vmatprep.subr.mxu0 0.0
    %1708 = vmatpush1.msra.mxu0 0.0
    %1709 = vmatprep.subr.mxu0 0.0
    %1710 = vmatpush1.msra.mxu0 0.0
    %1711 = vmatprep.subr.mxu0 0.0
    %1712 = vmatpush1.msra.mxu0 0.0
    %1713 = vmatprep.subr.mxu0 0.0
    %1714 = vmatpush1.msra.mxu0 0.0
    %1715 = vmatprep.subr.mxu0 0.0
    %1716 = vmatpush1.msra.mxu0 0.0
    %1717 = vmatprep.subr.mxu0 0.0
    %1718 = vmatpush1.msra.mxu0 0.0
    %1719 = vmatprep.subr.mxu0 0.0
    %1720 = vmatpush1.msra.mxu0 0.0
    %1721 = vmatprep.subr.mxu0 0.0
    %1722 = vmatpush1.msra.mxu0 0.0
    %1723 = vmatprep.subr.mxu0 0.0
    %1724 = vmatpush1.msra.mxu0 0.0
    %1725 = vmatprep.subr.mxu0 0.0
    %1726 = vmatpush1.msra.mxu0 0.0
    %1727 = vmatprep.subr.mxu0 0.0
    %1728 = vmatpush1.msra.mxu0 0.0
    %1729 = vmatprep.subr.mxu0 0.0
    %1730 = vmatpush1.msra.mxu0 0.0
    %1731 = vmatprep.subr.mxu0 0.0
    %1732 = vmatpush1.msra.mxu0 0.0
    %1733 = vmatprep.subr.mxu0 0.0
    %1734 = vmatpush1.msra.mxu0 0.0
    %1735 = vmatprep.subr.mxu0 0.0
    %1736 = vmatpush1.msra.mxu0 0.0
    %1737 = vmatprep.subr.mxu0 0.0
    %1738 = vmatpush1.msra.mxu0 0.0
    %1739 = vmatprep.mubr.f32.mxu0 0.0
    %1740 = vmatmul.mubr.f32.gmra.mrb[0].mxu0 %v1610
    %v1741 = vpop.f32.mrb[0].mxu0
    %v1742 = vadd.f32 0.0, %v1741
    %v1743 = vpop.f32.mrb[0].mxu0
    %v1744 = vadd.f32 0.0, %v1743
    %1745 = vdwg.mxu0
    %1746 = vmatprep.subr.mxu0 %v1614
    %1747 = vmatpush1.msra.mxu0 %v1613
    %1748 = vmatprep.subr.mxu0 %v1618
    %1749 = vmatpush1.msra.mxu0 %v1617
    %1750 = vmatprep.subr.mxu0 %v1622
    %1751 = vmatpush1.msra.mxu0 %v1621
    %1752 = vmatprep.subr.mxu0 %v1626
    %1753 = vmatpush1.msra.mxu0 %v1625
    %1754 = vmatprep.subr.mxu0 %v1630
    %1755 = vmatpush1.msra.mxu0 %v1629
    %1756 = vmatprep.subr.mxu0 %v1634
    %1757 = vmatpush1.msra.mxu0 %v1633
    %1758 = vmatprep.subr.mxu0 %v1638
    %1759 = vmatpush1.msra.mxu0 %v1637
    %1760 = vmatprep.subr.mxu0 %v1642
    %1761 = vmatpush1.msra.mxu0 %v1641
    %1762 = vmatprep.subr.mxu0 %v1646
    %1763 = vmatpush1.msra.mxu0 %v1645
    %1764 = vmatprep.subr.mxu0 %v1650
    %1765 = vmatpush1.msra.mxu0 %v1649
    %1766 = vmatprep.subr.mxu0 %v1654
    %1767 = vmatpush1.msra.mxu0 %v1653
    %1768 = vmatprep.subr.mxu0 %v1658
    %1769 = vmatpush1.msra.mxu0 %v1657
    %1770 = vmatprep.subr.mxu0 %v1662
    %1771 = vmatpush1.msra.mxu0 %v1661
    %1772 = vmatprep.subr.mxu0 %v1666
    %1773 = vmatpush1.msra.mxu0 %v1665
    %1774 = vmatprep.subr.mxu0 %v1670
    %1775 = vmatpush1.msra.mxu0 %v1669
    %1776 = vmatprep.subr.mxu0 %v1674
    %1777 = vmatpush1.msra.mxu0 %v1673
    %1778 = vmatprep.subr.mxu0 0.0
    %1779 = vmatpush1.msra.mxu0 0.0
    %1780 = vmatprep.subr.mxu0 0.0
    %1781 = vmatpush1.msra.mxu0 0.0
    %1782 = vmatprep.subr.mxu0 0.0
    %1783 = vmatpush1.msra.mxu0 0.0
    %1784 = vmatprep.subr.mxu0 0.0
    %1785 = vmatpush1.msra.mxu0 0.0
    %1786 = vmatprep.subr.mxu0 0.0
    %1787 = vmatpush1.msra.mxu0 0.0
    %1788 = vmatprep.subr.mxu0 0.0
    %1789 = vmatpush1.msra.mxu0 0.0
    %1790 = vmatprep.subr.mxu0 0.0
    %1791 = vmatpush1.msra.mxu0 0.0
    %1792 = vmatprep.subr.mxu0 0.0
    %1793 = vmatpush1.msra.mxu0 0.0
    %1794 = vmatprep.subr.mxu0 0.0
    %1795 = vmatpush1.msra.mxu0 0.0
    %1796 = vmatprep.subr.mxu0 0.0
    %1797 = vmatpush1.msra.mxu0 0.0
    %1798 = vmatprep.subr.mxu0 0.0
    %1799 = vmatpush1.msra.mxu0 0.0
    %1800 = vmatprep.subr.mxu0 0.0
    %1801 = vmatpush1.msra.mxu0 0.0
    %1802 = vmatprep.subr.mxu0 0.0
    %1803 = vmatpush1.msra.mxu0 0.0
    %1804 = vmatprep.subr.mxu0 0.0
    %1805 = vmatpush1.msra.mxu0 0.0
    %1806 = vmatprep.subr.mxu0 0.0
    %1807 = vmatpush1.msra.mxu0 0.0
    %1808 = vmatprep.subr.mxu0 0.0
    %1809 = vmatpush1.msra.mxu0 0.0
    %1810 = vmatprep.mubr.f32.mxu0 0.0
    %1811 = vmatmul.mubr.f32.gmra.mrb[0].mxu0 %v1610
    %v1812 = vpop.f32.mrb[0].mxu0
    %v1813 = vadd.f32 0.0, %v1812
    %v1814 = vpop.f32.mrb[0].mxu0
    %v1815 = vadd.f32 0.0, %v1814
    %1816 = vdwg.mxu0
    %v1817 = vadd.f32 %v1606, %v1742
    %v1818 = vadd.f32 %v1607, %v1744
    %v1819 = vadd.f32 %v1608, %v1813
    %v1820 = vadd.f32 %v1609, %v1815
    %v1821 = vxor.u32 %v1817, 2147483648
    %v1822 = vmul.f32 %v1821, 1.442695
    %v1823 = vpow.pop %v1822
    %v1824 = vadd.f32 %v1823, 1.0
    %v1825 = vrcp.pop %v1824
    %v1826 = vmul.f32 1.0, %v1825
    %v1827 = vxor.u32 %v1818, 2147483648
    %v1828 = vmul.f32 %v1827, 1.442695
    %v1829 = vpow.pop %v1828
    %v1830 = vadd.f32 %v1829, 1.0
    %v1831 = vrcp.pop %v1830
    %v1832 = vmul.f32 1.0, %v1831
    %v1833 = vtanh.pop %v1819
    %v1834 = vxor.u32 %v1820, 2147483648
    %v1835 = vmul.f32 %v1834, 1.442695
    %v1836 = vpow.pop %v1835
    %v1837 = vadd.f32 %v1836, 1.0
    %v1838 = vrcp.pop %v1837
    %v1839 = vmul.f32 1.0, %v1838
    %v1840 = vld [vmem:[#allocation5] sm:$0xff]
    %v1841 = vmul.f32 %v1832, %v1840
    %v1842 = vmul.f32 %v1826, %v1833
    %v1843 = vadd.f32 %v1841, %v1842
    %v1844 = vtanh.pop %v1843
    %v1845 = vmul.f32 %v1839, %v1844
    %1846 = vst [vmem:[#allocation5] sm:$0xff] %v1843
    %1847 = vst [vmem:[#allocation4] sm:$0xff] %v1845
    %s1848 = scalar_lea.vmem [#allocation3], 40
    %1849 = vst [vmem:[%s1848] sm:$0xff] %v1845
    %s1850 = smul.u32 6, 4
    %s1851 = smul.addr %s1850, 8
    %s1852 = scalar_lea.vmem [#allocation2], %s1851
    %v1853 = vld [vmem:[%s1852] sm:$0xff]
    %v1854 = vld [vmem:[%s1852 + $0x8] sm:$0xff]
    %v1855 = vld [vmem:[%s1852 + $0x10] sm:$0xff]
    %v1856 = vld [vmem:[%s1852 + $0x18] sm:$0xff]
    %v1857 = vld [vmem:[#allocation4] sm:$0xff]
    %v1858 = vld [vmem:[#allocation7] sm:$0xff]
    %v1859 = vld [vmem:[#allocation7 + $0x8] sm:$0xff]
    %v1860 = vld [vmem:[#allocation7 + $0x10] sm:$0xff]
    %v1861 = vld [vmem:[#allocation7 + $0x18] sm:$0xff]
    %v1862 = vld [vmem:[#allocation7 + $0x20] sm:$0xff]
    %v1863 = vld [vmem:[#allocation7 + $0x28] sm:$0xff]
    %v1864 = vld [vmem:[#allocation7 + $0x30] sm:$0xff]
    %v1865 = vld [vmem:[#allocation7 + $0x38] sm:$0xff]
    %v1866 = vld [vmem:[#allocation7 + $0x40] sm:$0xff]
    %v1867 = vld [vmem:[#allocation7 + $0x48] sm:$0xff]
    %v1868 = vld [vmem:[#allocation7 + $0x50] sm:$0xff]
    %v1869 = vld [vmem:[#allocation7 + $0x58] sm:$0xff]
    %v1870 = vld [vmem:[#allocation7 + $0x60] sm:$0xff]
    %v1871 = vld [vmem:[#allocation7 + $0x68] sm:$0xff]
    %v1872 = vld [vmem:[#allocation7 + $0x70] sm:$0xff]
    %v1873 = vld [vmem:[#allocation7 + $0x78] sm:$0xff]
    %v1874 = vld [vmem:[#allocation7 + $0x80] sm:$0xff]
    %v1875 = vld [vmem:[#allocation7 + $0x88] sm:$0xff]
    %v1876 = vld [vmem:[#allocation7 + $0x90] sm:$0xff]
    %v1877 = vld [vmem:[#allocation7 + $0x98] sm:$0xff]
    %v1878 = vld [vmem:[#allocation7 + $0xa0] sm:$0xff]
    %v1879 = vld [vmem:[#allocation7 + $0xa8] sm:$0xff]
    %v1880 = vld [vmem:[#allocation7 + $0xb0] sm:$0xff]
    %v1881 = vld [vmem:[#allocation7 + $0xb8] sm:$0xff]
    %v1882 = vld [vmem:[#allocation7 + $0xc0] sm:$0xff]
    %v1883 = vld [vmem:[#allocation7 + $0xc8] sm:$0xff]
    %v1884 = vld [vmem:[#allocation7 + $0xd0] sm:$0xff]
    %v1885 = vld [vmem:[#allocation7 + $0xd8] sm:$0xff]
    %v1886 = vld [vmem:[#allocation7 + $0xe0] sm:$0xff]
    %v1887 = vld [vmem:[#allocation7 + $0xe8] sm:$0xff]
    %v1888 = vld [vmem:[#allocation7 + $0xf0] sm:$0xff]
    %v1889 = vld [vmem:[#allocation7 + $0xf8] sm:$0xff]
    %v1890 = vld [vmem:[#allocation7 + $0x100] sm:$0xff]
    %v1891 = vld [vmem:[#allocation7 + $0x108] sm:$0xff]
    %v1892 = vld [vmem:[#allocation7 + $0x110] sm:$0xff]
    %v1893 = vld [vmem:[#allocation7 + $0x118] sm:$0xff]
    %v1894 = vld [vmem:[#allocation7 + $0x120] sm:$0xff]
    %v1895 = vld [vmem:[#allocation7 + $0x128] sm:$0xff]
    %v1896 = vld [vmem:[#allocation7 + $0x130] sm:$0xff]
    %v1897 = vld [vmem:[#allocation7 + $0x138] sm:$0xff]
    %v1898 = vld [vmem:[#allocation7 + $0x140] sm:$0xff]
    %v1899 = vld [vmem:[#allocation7 + $0x148] sm:$0xff]
    %v1900 = vld [vmem:[#allocation7 + $0x150] sm:$0xff]
    %v1901 = vld [vmem:[#allocation7 + $0x158] sm:$0xff]
    %v1902 = vld [vmem:[#allocation7 + $0x160] sm:$0xff]
    %v1903 = vld [vmem:[#allocation7 + $0x168] sm:$0xff]
    %v1904 = vld [vmem:[#allocation7 + $0x170] sm:$0xff]
    %v1905 = vld [vmem:[#allocation7 + $0x178] sm:$0xff]
    %v1906 = vld [vmem:[#allocation7 + $0x180] sm:$0xff]
    %v1907 = vld [vmem:[#allocation7 + $0x188] sm:$0xff]
    %v1908 = vld [vmem:[#allocation7 + $0x190] sm:$0xff]
    %v1909 = vld [vmem:[#allocation7 + $0x198] sm:$0xff]
    %v1910 = vld [vmem:[#allocation7 + $0x1a0] sm:$0xff]
    %v1911 = vld [vmem:[#allocation7 + $0x1a8] sm:$0xff]
    %v1912 = vld [vmem:[#allocation7 + $0x1b0] sm:$0xff]
    %v1913 = vld [vmem:[#allocation7 + $0x1b8] sm:$0xff]
    %v1914 = vld [vmem:[#allocation7 + $0x1c0] sm:$0xff]
    %v1915 = vld [vmem:[#allocation7 + $0x1c8] sm:$0xff]
    %v1916 = vld [vmem:[#allocation7 + $0x1d0] sm:$0xff]
    %v1917 = vld [vmem:[#allocation7 + $0x1d8] sm:$0xff]
    %v1918 = vld [vmem:[#allocation7 + $0x1e0] sm:$0xff]
    %v1919 = vld [vmem:[#allocation7 + $0x1e8] sm:$0xff]
    %v1920 = vld [vmem:[#allocation7 + $0x1f0] sm:$0xff]
    %v1921 = vld [vmem:[#allocation7 + $0x1f8] sm:$0xff]
    %1922 = vmatprep.subr.mxu0 %v1859
    %1923 = vmatpush1.msra.mxu0 %v1858
    %1924 = vmatprep.subr.mxu0 %v1863
    %1925 = vmatpush1.msra.mxu0 %v1862
    %1926 = vmatprep.subr.mxu0 %v1867
    %1927 = vmatpush1.msra.mxu0 %v1866
    %1928 = vmatprep.subr.mxu0 %v1871
    %1929 = vmatpush1.msra.mxu0 %v1870
    %1930 = vmatprep.subr.mxu0 %v1875
    %1931 = vmatpush1.msra.mxu0 %v1874
    %1932 = vmatprep.subr.mxu0 %v1879
    %1933 = vmatpush1.msra.mxu0 %v1878
    %1934 = vmatprep.subr.mxu0 %v1883
    %1935 = vmatpush1.msra.mxu0 %v1882
    %1936 = vmatprep.subr.mxu0 %v1887
    %1937 = vmatpush1.msra.mxu0 %v1886
    %1938 = vmatprep.subr.mxu0 %v1891
    %1939 = vmatpush1.msra.mxu0 %v1890
    %1940 = vmatprep.subr.mxu0 %v1895
    %1941 = vmatpush1.msra.mxu0 %v1894
    %1942 = vmatprep.subr.mxu0 %v1899
    %1943 = vmatpush1.msra.mxu0 %v1898
    %1944 = vmatprep.subr.mxu0 %v1903
    %1945 = vmatpush1.msra.mxu0 %v1902
    %1946 = vmatprep.subr.mxu0 %v1907
    %1947 = vmatpush1.msra.mxu0 %v1906
    %1948 = vmatprep.subr.mxu0 %v1911
    %1949 = vmatpush1.msra.mxu0 %v1910
    %1950 = vmatprep.subr.mxu0 %v1915
    %1951 = vmatpush1.msra.mxu0 %v1914
    %1952 = vmatprep.subr.mxu0 %v1919
    %1953 = vmatpush1.msra.mxu0 %v1918
    %1954 = vmatprep.subr.mxu0 0.0
    %1955 = vmatpush1.msra.mxu0 0.0
    %1956 = vmatprep.subr.mxu0 0.0
    %1957 = vmatpush1.msra.mxu0 0.0
    %1958 = vmatprep.subr.mxu0 0.0
    %1959 = vmatpush1.msra.mxu0 0.0
    %1960 = vmatprep.subr.mxu0 0.0
    %1961 = vmatpush1.msra.mxu0 0.0
    %1962 = vmatprep.subr.mxu0 0.0
    %1963 = vmatpush1.msra.mxu0 0.0
    %1964 = vmatprep.subr.mxu0 0.0
    %1965 = vmatpush1.msra.mxu0 0.0
    %1966 = vmatprep.subr.mxu0 0.0
    %1967 = vmatpush1.msra.mxu0 0.0
    %1968 = vmatprep.subr.mxu0 0.0
    %1969 = vmatpush1.msra.mxu0 0.0
    %1970 = vmatprep.subr.mxu0 0.0
    %1971 = vmatpush1.msra.mxu0 0.0
    %1972 = vmatprep.subr.mxu0 0.0
    %1973 = vmatpush1.msra.mxu0 0.0
    %1974 = vmatprep.subr.mxu0 0.0
    %1975 = vmatpush1.msra.mxu0 0.0
    %1976 = vmatprep.subr.mxu0 0.0
    %1977 = vmatpush1.msra.mxu0 0.0
    %1978 = vmatprep.subr.mxu0 0.0
    %1979 = vmatpush1.msra.mxu0 0.0
    %1980 = vmatprep.subr.mxu0 0.0
    %1981 = vmatpush1.msra.mxu0 0.0
    %1982 = vmatprep.subr.mxu0 0.0
    %1983 = vmatpush1.msra.mxu0 0.0
    %1984 = vmatprep.subr.mxu0 0.0
    %1985 = vmatpush1.msra.mxu0 0.0
    %1986 = vmatprep.mubr.f32.mxu0 0.0
    %1987 = vmatmul.mubr.f32.gmra.mrb[0].mxu0 %v1857
    %v1988 = vpop.f32.mrb[0].mxu0
    %v1989 = vadd.f32 0.0, %v1988
    %v1990 = vpop.f32.mrb[0].mxu0
    %v1991 = vadd.f32 0.0, %v1990
    %1992 = vdwg.mxu0
    %1993 = vmatprep.subr.mxu0 %v1861
    %1994 = vmatpush1.msra.mxu0 %v1860
    %1995 = vmatprep.subr.mxu0 %v1865
    %1996 = vmatpush1.msra.mxu0 %v1864
    %1997 = vmatprep.subr.mxu0 %v1869
    %1998 = vmatpush1.msra.mxu0 %v1868
    %1999 = vmatprep.subr.mxu0 %v1873
    %2000 = vmatpush1.msra.mxu0 %v1872
    %2001 = vmatprep.subr.mxu0 %v1877
    %2002 = vmatpush1.msra.mxu0 %v1876
    %2003 = vmatprep.subr.mxu0 %v1881
    %2004 = vmatpush1.msra.mxu0 %v1880
    %2005 = vmatprep.subr.mxu0 %v1885
    %2006 = vmatpush1.msra.mxu0 %v1884
    %2007 = vmatprep.subr.mxu0 %v1889
    %2008 = vmatpush1.msra.mxu0 %v1888
    %2009 = vmatprep.subr.mxu0 %v1893
    %2010 = vmatpush1.msra.mxu0 %v1892
    %2011 = vmatprep.subr.mxu0 %v1897
    %2012 = vmatpush1.msra.mxu0 %v1896
    %2013 = vmatprep.subr.mxu0 %v1901
    %2014 = vmatpush1.msra.mxu0 %v1900
    %2015 = vmatprep.subr.mxu0 %v1905
    %2016 = vmatpush1.msra.mxu0 %v1904
    %2017 = vmatprep.subr.mxu0 %v1909
    %2018 = vmatpush1.msra.mxu0 %v1908
    %2019 = vmatprep.subr.mxu0 %v1913
    %2020 = vmatpush1.msra.mxu0 %v1912
    %2021 = vmatprep.subr.mxu0 %v1917
    %2022 = vmatpush1.msra.mxu0 %v1916
    %2023 = vmatprep.subr.mxu0 %v1921
    %2024 = vmatpush1.msra.mxu0 %v1920
    %2025 = vmatprep.subr.mxu0 0.0
    %2026 = vmatpush1.msra.mxu0 0.0
    %2027 = vmatprep.subr.mxu0 0.0
    %2028 = vmatpush1.msra.mxu0 0.0
    %2029 = vmatprep.subr.mxu0 0.0
    %2030 = vmatpush1.msra.mxu0 0.0
    %2031 = vmatprep.subr.mxu0 0.0
    %2032 = vmatpush1.msra.mxu0 0.0
    %2033 = vmatprep.subr.mxu0 0.0
    %2034 = vmatpush1.msra.mxu0 0.0
    %2035 = vmatprep.subr.mxu0 0.0
    %2036 = vmatpush1.msra.mxu0 0.0
    %2037 = vmatprep.subr.mxu0 0.0
    %2038 = vmatpush1.msra.mxu0 0.0
    %2039 = vmatprep.subr.mxu0 0.0
    %2040 = vmatpush1.msra.mxu0 0.0
    %2041 = vmatprep.subr.mxu0 0.0
    %2042 = vmatpush1.msra.mxu0 0.0
    %2043 = vmatprep.subr.mxu0 0.0
    %2044 = vmatpush1.msra.mxu0 0.0
    %2045 = vmatprep.subr.mxu0 0.0
    %2046 = vmatpush1.msra.mxu0 0.0
    %2047 = vmatprep.subr.mxu0 0.0
    %2048 = vmatpush1.msra.mxu0 0.0
    %2049 = vmatprep.subr.mxu0 0.0
    %2050 = vmatpush1.msra.mxu0 0.0
    %2051 = vmatprep.subr.mxu0 0.0
    %2052 = vmatpush1.msra.mxu0 0.0
    %2053 = vmatprep.subr.mxu0 0.0
    %2054 = vmatpush1.msra.mxu0 0.0
    %2055 = vmatprep.subr.mxu0 0.0
    %2056 = vmatpush1.msra.mxu0 0.0
    %2057 = vmatprep.mubr.f32.mxu0 0.0
    %2058 = vmatmul.mubr.f32.gmra.mrb[0].mxu0 %v1857
    %v2059 = vpop.f32.mrb[0].mxu0
    %v2060 = vadd.f32 0.0, %v2059
    %v2061 = vpop.f32.mrb[0].mxu0
    %v2062 = vadd.f32 0.0, %v2061
    %2063 = vdwg.mxu0
    %v2064 = vadd.f32 %v1853, %v1989
    %v2065 = vadd.f32 %v1854, %v1991
    %v2066 = vadd.f32 %v1855, %v2060
    %v2067 = vadd.f32 %v1856, %v2062
    %v2068 = vxor.u32 %v2064, 2147483648
    %v2069 = vmul.f32 %v2068, 1.442695
    %v2070 = vpow.pop %v2069
    %v2071 = vadd.f32 %v2070, 1.0
    %v2072 = vrcp.pop %v2071
    %v2073 = vmul.f32 1.0, %v2072
    %v2074 = vxor.u32 %v2065, 2147483648
    %v2075 = vmul.f32 %v2074, 1.442695
    %v2076 = vpow.pop %v2075
    %v2077 = vadd.f32 %v2076, 1.0
    %v2078 = vrcp.pop %v2077
    %v2079 = vmul.f32 1.0, %v2078
    %v2080 = vtanh.pop %v2066
    %v2081 = vxor.u32 %v2067, 2147483648
    %v2082 = vmul.f32 %v2081, 1.442695
    %v2083 = vpow.pop %v2082
    %v2084 = vadd.f32 %v2083, 1.0
    %v2085 = vrcp.pop %v2084
    %v2086 = vmul.f32 1.0, %v2085
    %v2087 = vld [vmem:[#allocation5] sm:$0xff]
    %v2088 = vmul.f32 %v2079, %v2087
    %v2089 = vmul.f32 %v2073, %v2080
    %v2090 = vadd.f32 %v2088, %v2089
    %v2091 = vtanh.pop %v2090
    %v2092 = vmul.f32 %v2086, %v2091
    %2093 = vst [vmem:[#allocation5] sm:$0xff] %v2090
    %2094 = vst [vmem:[#allocation4] sm:$0xff] %v2092
    %s2095 = scalar_lea.vmem [#allocation3], 48
    %2096 = vst [vmem:[%s2095] sm:$0xff] %v2092
    %s2097 = smul.u32 7, 4
    %s2098 = smul.addr %s2097, 8
    %s2099 = scalar_lea.vmem [#allocation2], %s2098
    %v2100 = vld [vmem:[%s2099] sm:$0xff]
    %v2101 = vld [vmem:[%s2099 + $0x8] sm:$0xff]
    %v2102 = vld [vmem:[%s2099 + $0x10] sm:$0xff]
    %v2103 = vld [vmem:[%s2099 + $0x18] sm:$0xff]
    %v2104 = vld [vmem:[#allocation4] sm:$0xff]
    %v2105 = vld [vmem:[#allocation7] sm:$0xff]
    %v2106 = vld [vmem:[#allocation7 + $0x8] sm:$0xff]
    %v2107 = vld [vmem:[#allocation7 + $0x10] sm:$0xff]
    %v2108 = vld [vmem:[#allocation7 + $0x18] sm:$0xff]
    %v2109 = vld [vmem:[#allocation7 + $0x20] sm:$0xff]
    %v2110 = vld [vmem:[#allocation7 + $0x28] sm:$0xff]
    %v2111 = vld [vmem:[#allocation7 + $0x30] sm:$0xff]
    %v2112 = vld [vmem:[#allocation7 + $0x38] sm:$0xff]
    %v2113 = vld [vmem:[#allocation7 + $0x40] sm:$0xff]
    %v2114 = vld [vmem:[#allocation7 + $0x48] sm:$0xff]
    %v2115 = vld [vmem:[#allocation7 + $0x50] sm:$0xff]
    %v2116 = vld [vmem:[#allocation7 + $0x58] sm:$0xff]
    %v2117 = vld [vmem:[#allocation7 + $0x60] sm:$0xff]
    %v2118 = vld [vmem:[#allocation7 + $0x68] sm:$0xff]
    %v2119 = vld [vmem:[#allocation7 + $0x70] sm:$0xff]
    %v2120 = vld [vmem:[#allocation7 + $0x78] sm:$0xff]
    %v2121 = vld [vmem:[#allocation7 + $0x80] sm:$0xff]
    %v2122 = vld [vmem:[#allocation7 + $0x88] sm:$0xff]
    %v2123 = vld [vmem:[#allocation7 + $0x90] sm:$0xff]
    %v2124 = vld [vmem:[#allocation7 + $0x98] sm:$0xff]
    %v2125 = vld [vmem:[#allocation7 + $0xa0] sm:$0xff]
    %v2126 = vld [vmem:[#allocation7 + $0xa8] sm:$0xff]
    %v2127 = vld [vmem:[#allocation7 + $0xb0] sm:$0xff]
    %v2128 = vld [vmem:[#allocation7 + $0xb8] sm:$0xff]
    %v2129 = vld [vmem:[#allocation7 + $0xc0] sm:$0xff]
    %v2130 = vld [vmem:[#allocation7 + $0xc8] sm:$0xff]
    %v2131 = vld [vmem:[#allocation7 + $0xd0] sm:$0xff]
    %v2132 = vld [vmem:[#allocation7 + $0xd8] sm:$0xff]
    %v2133 = vld [vmem:[#allocation7 + $0xe0] sm:$0xff]
    %v2134 = vld [vmem:[#allocation7 + $0xe8] sm:$0xff]
    %v2135 = vld [vmem:[#allocation7 + $0xf0] sm:$0xff]
    %v2136 = vld [vmem:[#allocation7 + $0xf8] sm:$0xff]
    %v2137 = vld [vmem:[#allocation7 + $0x100] sm:$0xff]
    %v2138 = vld [vmem:[#allocation7 + $0x108] sm:$0xff]
    %v2139 = vld [vmem:[#allocation7 + $0x110] sm:$0xff]
    %v2140 = vld [vmem:[#allocation7 + $0x118] sm:$0xff]
    %v2141 = vld [vmem:[#allocation7 + $0x120] sm:$0xff]
    %v2142 = vld [vmem:[#allocation7 + $0x128] sm:$0xff]
    %v2143 = vld [vmem:[#allocation7 + $0x130] sm:$0xff]
    %v2144 = vld [vmem:[#allocation7 + $0x138] sm:$0xff]
    %v2145 = vld [vmem:[#allocation7 + $0x140] sm:$0xff]
    %v2146 = vld [vmem:[#allocation7 + $0x148] sm:$0xff]
    %v2147 = vld [vmem:[#allocation7 + $0x150] sm:$0xff]
    %v2148 = vld [vmem:[#allocation7 + $0x158] sm:$0xff]
    %v2149 = vld [vmem:[#allocation7 + $0x160] sm:$0xff]
    %v2150 = vld [vmem:[#allocation7 + $0x168] sm:$0xff]
    %v2151 = vld [vmem:[#allocation7 + $0x170] sm:$0xff]
    %v2152 = vld [vmem:[#allocation7 + $0x178] sm:$0xff]
    %v2153 = vld [vmem:[#allocation7 + $0x180] sm:$0xff]
    %v2154 = vld [vmem:[#allocation7 + $0x188] sm:$0xff]
    %v2155 = vld [vmem:[#allocation7 + $0x190] sm:$0xff]
    %v2156 = vld [vmem:[#allocation7 + $0x198] sm:$0xff]
    %v2157 = vld [vmem:[#allocation7 + $0x1a0] sm:$0xff]
    %v2158 = vld [vmem:[#allocation7 + $0x1a8] sm:$0xff]
    %v2159 = vld [vmem:[#allocation7 + $0x1b0] sm:$0xff]
    %v2160 = vld [vmem:[#allocation7 + $0x1b8] sm:$0xff]
    %v2161 = vld [vmem:[#allocation7 + $0x1c0] sm:$0xff]
    %v2162 = vld [vmem:[#allocation7 + $0x1c8] sm:$0xff]
    %v2163 = vld [vmem:[#allocation7 + $0x1d0] sm:$0xff]
    %v2164 = vld [vmem:[#allocation7 + $0x1d8] sm:$0xff]
    %v2165 = vld [vmem:[#allocation7 + $0x1e0] sm:$0xff]
    %v2166 = vld [vmem:[#allocation7 + $0x1e8] sm:$0xff]
    %v2167 = vld [vmem:[#allocation7 + $0x1f0] sm:$0xff]
    %v2168 = vld [vmem:[#allocation7 + $0x1f8] sm:$0xff]
    %2169 = vmatprep.subr.mxu0 %v2106
    %2170 = vmatpush1.msra.mxu0 %v2105
    %2171 = vmatprep.subr.mxu0 %v2110
    %2172 = vmatpush1.msra.mxu0 %v2109
    %2173 = vmatprep.subr.mxu0 %v2114
    %2174 = vmatpush1.msra.mxu0 %v2113
    %2175 = vmatprep.subr.mxu0 %v2118
    %2176 = vmatpush1.msra.mxu0 %v2117
    %2177 = vmatprep.subr.mxu0 %v2122
    %2178 = vmatpush1.msra.mxu0 %v2121
    %2179 = vmatprep.subr.mxu0 %v2126
    %2180 = vmatpush1.msra.mxu0 %v2125
    %2181 = vmatprep.subr.mxu0 %v2130
    %2182 = vmatpush1.msra.mxu0 %v2129
    %2183 = vmatprep.subr.mxu0 %v2134
    %2184 = vmatpush1.msra.mxu0 %v2133
    %2185 = vmatprep.subr.mxu0 %v2138
    %2186 = vmatpush1.msra.mxu0 %v2137
    %2187 = vmatprep.subr.mxu0 %v2142
    %2188 = vmatpush1.msra.mxu0 %v2141
    %2189 = vmatprep.subr.mxu0 %v2146
    %2190 = vmatpush1.msra.mxu0 %v2145
    %2191 = vmatprep.subr.mxu0 %v2150
    %2192 = vmatpush1.msra.mxu0 %v2149
    %2193 = vmatprep.subr.mxu0 %v2154
    %2194 = vmatpush1.msra.mxu0 %v2153
    %2195 = vmatprep.subr.mxu0 %v2158
    %2196 = vmatpush1.msra.mxu0 %v2157
    %2197 = vmatprep.subr.mxu0 %v2162
    %2198 = vmatpush1.msra.mxu0 %v2161
    %2199 = vmatprep.subr.mxu0 %v2166
    %2200 = vmatpush1.msra.mxu0 %v2165
    %2201 = vmatprep.subr.mxu0 0.0
    %2202 = vmatpush1.msra.mxu0 0.0
    %2203 = vmatprep.subr.mxu0 0.0
    %2204 = vmatpush1.msra.mxu0 0.0
    %2205 = vmatprep.subr.mxu0 0.0
    %2206 = vmatpush1.msra.mxu0 0.0
    %2207 = vmatprep.subr.mxu0 0.0
    %2208 = vmatpush1.msra.mxu0 0.0
    %2209 = vmatprep.subr.mxu0 0.0
    %2210 = vmatpush1.msra.mxu0 0.0
    %2211 = vmatprep.subr.mxu0 0.0
    %2212 = vmatpush1.msra.mxu0 0.0
    %2213 = vmatprep.subr.mxu0 0.0
    %2214 = vmatpush1.msra.mxu0 0.0
    %2215 = vmatprep.subr.mxu0 0.0
    %2216 = vmatpush1.msra.mxu0 0.0
    %2217 = vmatprep.subr.mxu0 0.0
    %2218 = vmatpush1.msra.mxu0 0.0
    %2219 = vmatprep.subr.mxu0 0.0
    %2220 = vmatpush1.msra.mxu0 0.0
    %2221 = vmatprep.subr.mxu0 0.0
    %2222 = vmatpush1.msra.mxu0 0.0
    %2223 = vmatprep.subr.mxu0 0.0
    %2224 = vmatpush1.msra.mxu0 0.0
    %2225 = vmatprep.subr.mxu0 0.0
    %2226 = vmatpush1.msra.mxu0 0.0
    %2227 = vmatprep.subr.mxu0 0.0
    %2228 = vmatpush1.msra.mxu0 0.0
    %2229 = vmatprep.subr.mxu0 0.0
    %2230 = vmatpush1.msra.mxu0 0.0
    %2231 = vmatprep.subr.mxu0 0.0
    %2232 = vmatpush1.msra.mxu0 0.0
    %2233 = vmatprep.mubr.f32.mxu0 0.0
    %2234 = vmatmul.mubr.f32.gmra.mrb[0].mxu0 %v2104
    %v2235 = vpop.f32.mrb[0].mxu0
    %v2236 = vadd.f32 0.0, %v2235
    %v2237 = vpop.f32.mrb[0].mxu0
    %v2238 = vadd.f32 0.0, %v2237
    %2239 = vdwg.mxu0
    %2240 = vmatprep.subr.mxu0 %v2108
    %2241 = vmatpush1.msra.mxu0 %v2107
    %2242 = vmatprep.subr.mxu0 %v2112
    %2243 = vmatpush1.msra.mxu0 %v2111
    %2244 = vmatprep.subr.mxu0 %v2116
    %2245 = vmatpush1.msra.mxu0 %v2115
    %2246 = vmatprep.subr.mxu0 %v2120
    %2247 = vmatpush1.msra.mxu0 %v2119
    %2248 = vmatprep.subr.mxu0 %v2124
    %2249 = vmatpush1.msra.mxu0 %v2123
    %2250 = vmatprep.subr.mxu0 %v2128
    %2251 = vmatpush1.msra.mxu0 %v2127
    %2252 = vmatprep.subr.mxu0 %v2132
    %2253 = vmatpush1.msra.mxu0 %v2131
    %2254 = vmatprep.subr.mxu0 %v2136
    %2255 = vmatpush1.msra.mxu0 %v2135
    %2256 = vmatprep.subr.mxu0 %v2140
    %2257 = vmatpush1.msra.mxu0 %v2139
    %2258 = vmatprep.subr.mxu0 %v2144
    %2259 = vmatpush1.msra.mxu0 %v2143
    %2260 = vmatprep.subr.mxu0 %v2148
    %2261 = vmatpush1.msra.mxu0 %v2147
    %2262 = vmatprep.subr.mxu0 %v2152
    %2263 = vmatpush1.msra.mxu0 %v2151
    %2264 = vmatprep.subr.mxu0 %v2156
    %2265 = vmatpush1.msra.mxu0 %v2155
    %2266 = vmatprep.subr.mxu0 %v2160
    %2267 = vmatpush1.msra.mxu0 %v2159
    %2268 = vmatprep.subr.mxu0 %v2164
    %2269 = vmatpush1.msra.mxu0 %v2163
    %2270 = vmatprep.subr.mxu0 %v2168
    %2271 = vmatpush1.msra.mxu0 %v2167
    %2272 = vmatprep.subr.mxu0 0.0
    %2273 = vmatpush1.msra.mxu0 0.0
    %2274 = vmatprep.subr.mxu0 0.0
    %2275 = vmatpush1.msra.mxu0 0.0
    %2276 = vmatprep.subr.mxu0 0.0
    %2277 = vmatpush1.msra.mxu0 0.0
    %2278 = vmatprep.subr.mxu0 0.0
    %2279 = vmatpush1.msra.mxu0 0.0
    %2280 = vmatprep.subr.mxu0 0.0
    %2281 = vmatpush1.msra.mxu0 0.0
    %2282 = vmatprep.subr.mxu0 0.0
    %2283 = vmatpush1.msra.mxu0 0.0
    %2284 = vmatprep.subr.mxu0 0.0
    %2285 = vmatpush1.msra.mxu0 0.0
    %2286 = vmatprep.subr.mxu0 0.0
    %2287 = vmatpush1.msra.mxu0 0.0
    %2288 = vmatprep.subr.mxu0 0.0
    %2289 = vmatpush1.msra.mxu0 0.0
    %2290 = vmatprep.subr.mxu0 0.0
    %2291 = vmatpush1.msra.mxu0 0.0
    %2292 = vmatprep.subr.mxu0 0.0
    %2293 = vmatpush1.msra.mxu0 0.0
    %2294 = vmatprep.subr.mxu0 0.0
    %2295 = vmatpush1.msra.mxu0 0.0
    %2296 = vmatprep.subr.mxu0 0.0
    %2297 = vmatpush1.msra.mxu0 0.0
    %2298 = vmatprep.subr.mxu0 0.0
    %2299 = vmatpush1.msra.mxu0 0.0
    %2300 = vmatprep.subr.mxu0 0.0
    %2301 = vmatpush1.msra.mxu0 0.0
    %2302 = vmatprep.subr.mxu0 0.0
    %2303 = vmatpush1.msra.mxu0 0.0
    %2304 = vmatprep.mubr.f32.mxu0 0.0
    %2305 = vmatmul.mubr.f32.gmra.mrb[0].mxu0 %v2104
    %v2306 = vpop.f32.mrb[0].mxu0
    %v2307 = vadd.f32 0.0, %v2306
    %v2308 = vpop.f32.mrb[0].mxu0
    %v2309 = vadd.f32 0.0, %v2308
    %2310 = vdwg.mxu0
    %v2311 = vadd.f32 %v2100, %v2236
    %v2312 = vadd.f32 %v2101, %v2238
    %v2313 = vadd.f32 %v2102, %v2307
    %v2314 = vadd.f32 %v2103, %v2309
    %v2315 = vxor.u32 %v2311, 2147483648
    %v2316 = vmul.f32 %v2315, 1.442695
    %v2317 = vpow.pop %v2316
    %v2318 = vadd.f32 %v2317, 1.0
    %v2319 = vrcp.pop %v2318
    %v2320 = vmul.f32 1.0, %v2319
    %v2321 = vxor.u32 %v2312, 2147483648
    %v2322 = vmul.f32 %v2321, 1.442695
    %v2323 = vpow.pop %v2322
    %v2324 = vadd.f32 %v2323, 1.0
    %v2325 = vrcp.pop %v2324
    %v2326 = vmul.f32 1.0, %v2325
    %v2327 = vtanh.pop %v2313
    %v2328 = vxor.u32 %v2314, 2147483648
    %v2329 = vmul.f32 %v2328, 1.442695
    %v2330 = vpow.pop %v2329
    %v2331 = vadd.f32 %v2330, 1.0
    %v2332 = vrcp.pop %v2331
    %v2333 = vmul.f32 1.0, %v2332
    %v2334 = vld [vmem:[#allocation5] sm:$0xff]
    %v2335 = vmul.f32 %v2326, %v2334
    %v2336 = vmul.f32 %v2320, %v2327
    %v2337 = vadd.f32 %v2335, %v2336
    %v2338 = vtanh.pop %v2337
    %v2339 = vmul.f32 %v2333, %v2338
    %2340 = vst [vmem:[#allocation5] sm:$0xff] %v2337
    %2341 = vst [vmem:[#allocation4] sm:$0xff] %v2339
    %s2342 = scalar_lea.vmem [#allocation3], 56
    %2343 = vst [vmem:[%s2342] sm:$0xff] %v2339
    %v2344 = vld [vmem:[#allocation3] sm:$0xff]
    %v2345 = vld [vmem:[#allocation3 + $0x8] sm:$0xff]
    %v2346 = vld [vmem:[#allocation3 + $0x10] sm:$0xff]
    %v2347 = vld [vmem:[#allocation3 + $0x18] sm:$0xff]
    %v2348 = vld [vmem:[#allocation3 + $0x20] sm:$0xff]
    %v2349 = vld [vmem:[#allocation3 + $0x28] sm:$0xff]
    %v2350 = vld [vmem:[#allocation3 + $0x30] sm:$0xff]
    %v2351 = vld [vmem:[#allocation3 + $0x38] sm:$0xff]
    %v2352 = vld [vmem:[%s4] sm:$0x1]
    %v2354 = vlaneseq
    %v2355 = vshrl.u32 %v2354, 7
    %v2356 = vsub.s32 0, %v2355
    %v2357 = vrot.slane %v2352, %v2356
    %v2359 = vmul.f32 %v2344, %v2357
    %v2360 = vmul.f32 %v2345, %v2357
    %v2361 = vmul.f32 %v2346, %v2357
    %v2362 = vmul.f32 %v2347, %v2357
    %v2363 = vmul.f32 %v2348, %v2357
    %v2364 = vmul.f32 %v2349, %v2357
    %v2365 = vmul.f32 %v2350, %v2357
    %v2366 = vmul.f32 %v2351, %v2357
    %2367 = vadd.xlane.f32.xlu0 %v2359
    %v2368 = vpop.xlane.xlu0 %2367
    %2369 = vadd.xlane.f32.xlu0 %v2360
    %v2370 = vpop.xlane.xlu0 %2369
    %2371 = vadd.xlane.f32.xlu0 %v2361
    %v2372 = vpop.xlane.xlu0 %2371
    %2373 = vadd.xlane.f32.xlu0 %v2362
    %v2374 = vpop.xlane.xlu0 %2373
    %2375 = vadd.xlane.f32.xlu0 %v2363
    %v2376 = vpop.xlane.xlu0 %2375
    %2377 = vadd.xlane.f32.xlu0 %v2364
    %v2378 = vpop.xlane.xlu0 %2377
    %2379 = vadd.xlane.f32.xlu0 %v2365
    %v2380 = vpop.xlane.xlu0 %2379
    %2381 = vadd.xlane.f32.xlu0 %v2366
    %v2382 = vpop.xlane.xlu0 %2381
    %s2383 = sld [smem:[#allocation6]]
    %v2384 = vstv %s2383
    %v2385 = vadd.f32 %v2368, %v2384
    %v2386 = vadd.f32 %v2370, %v2384
    %v2387 = vadd.f32 %v2372, %v2384
    %v2388 = vadd.f32 %v2374, %v2384
    %v2389 = vadd.f32 %v2376, %v2384
    %v2390 = vadd.f32 %v2378, %v2384
    %v2391 = vadd.f32 %v2380, %v2384
    %v2392 = vadd.f32 %v2382, %v2384
    %v2393 = vxor.u32 %v2385, 2147483648
    %v2394 = vxor.u32 %v2386, 2147483648
    %v2395 = vxor.u32 %v2387, 2147483648
    %v2396 = vxor.u32 %v2388, 2147483648
    %v2397 = vxor.u32 %v2389, 2147483648
    %v2398 = vxor.u32 %v2390, 2147483648
    %v2399 = vxor.u32 %v2391, 2147483648
    %v2400 = vxor.u32 %v2392, 2147483648
    %v2401 = vmul.f32 %v2393, 1.442695
    %v2402 = vpow.pop %v2401
    %v2403 = vmul.f32 %v2394, 1.442695
    %v2404 = vpow.pop %v2403
    %v2405 = vmul.f32 %v2395, 1.442695
    %v2406 = vpow.pop %v2405
    %v2407 = vmul.f32 %v2396, 1.442695
    %v2408 = vpow.pop %v2407
    %v2409 = vmul.f32 %v2397, 1.442695
    %v2410 = vpow.pop %v2409
    %v2411 = vmul.f32 %v2398, 1.442695
    %v2412 = vpow.pop %v2411
    %v2413 = vmul.f32 %v2399, 1.442695
    %v2414 = vpow.pop %v2413
    %v2415 = vmul.f32 %v2400, 1.442695
    %v2416 = vpow.pop %v2415
    %v2417 = vadd.f32 %v2402, 1.0
    %v2418 = vadd.f32 %v2404, 1.0
    %v2419 = vadd.f32 %v2406, 1.0
    %v2420 = vadd.f32 %v2408, 1.0
    %v2421 = vadd.f32 %v2410, 1.0
    %v2422 = vadd.f32 %v2412, 1.0
    %v2423 = vadd.f32 %v2414, 1.0
    %v2424 = vadd.f32 %v2416, 1.0
    %v2425 = vrcp.pop %v2417
    %v2426 = vmul.f32 1.0, %v2425
    %v2427 = vrcp.pop %v2418
    %v2428 = vmul.f32 1.0, %v2427
    %v2429 = vrcp.pop %v2419
    %v2430 = vmul.f32 1.0, %v2429
    %v2431 = vrcp.pop %v2420
    %v2432 = vmul.f32 1.0, %v2431
    %v2433 = vrcp.pop %v2421
    %v2434 = vmul.f32 1.0, %v2433
    %v2435 = vrcp.pop %v2422
    %v2436 = vmul.f32 1.0, %v2435
    %v2437 = vrcp.pop %v2423
    %v2438 = vmul.f32 1.0, %v2437
    %v2439 = vrcp.pop %v2424
    %v2440 = vmul.f32 1.0, %v2439
    %v2449 = vlaneseq
    %v2450 = vand.u32 %v2449, 127
    %v2451 = vlaneseq
    %v2452 = vshrl.u32 %v2451, 7
    %v2453 = vsub.s32 %v2450, %v2452
    %v2454 = vrot.slane %v2426, %v2453
    %v2455 = vlaneseq
    %v2456 = vshrl.u32 %v2455, 7
    %v2457 = vsub.s32 %v2450, %v2456
    %v2458 = vrot.slane %v2428, %v2457
    %v2459 = vlaneseq
    %v2460 = vshrl.u32 %v2459, 7
    %v2461 = vsub.s32 %v2450, %v2460
    %v2462 = vrot.slane %v2430, %v2461
    %v2463 = vlaneseq
    %v2464 = vshrl.u32 %v2463, 7
    %v2465 = vsub.s32 %v2450, %v2464
    %v2466 = vrot.slane %v2432, %v2465
    %v2467 = vlaneseq
    %v2468 = vshrl.u32 %v2467, 7
    %v2469 = vsub.s32 %v2450, %v2468
    %v2470 = vrot.slane %v2434, %v2469
    %v2471 = vlaneseq
    %v2472 = vshrl.u32 %v2471, 7
    %v2473 = vsub.s32 %v2450, %v2472
    %v2474 = vrot.slane %v2436, %v2473
    %v2475 = vlaneseq
    %v2476 = vshrl.u32 %v2475, 7
    %v2477 = vsub.s32 %v2450, %v2476
    %v2478 = vrot.slane %v2438, %v2477
    %v2479 = vlaneseq
    %v2480 = vshrl.u32 %v2479, 7
    %v2481 = vsub.s32 %v2450, %v2480
    %v2482 = vrot.slane %v2440, %v2481
    %vm2483 = vcmask 1041409
    %v2484 = vsel %vm2483, %v2458, %v2454
    %vm2485 = vcmask 1042434
    %v2486 = vsel %vm2485, %v2462, %v2484
    %vm2487 = vcmask 1043459
    %v2488 = vsel %vm2487, %v2466, %v2486
    %vm2489 = vcmask 1044484
    %v2490 = vsel %vm2489, %v2470, %v2488
    %vm2491 = vcmask 1045509
    %v2492 = vsel %vm2491, %v2474, %v2490
    %vm2493 = vcmask 1046534
    %v2494 = vsel %vm2493, %v2478, %v2492
    %vm2495 = vcmask 1047559
    %v2496 = vsel %vm2495, %v2482, %v2494
    %vm2498 = vcmask 64512
    %2499 = vst.msk [vmem:[#allocation10] sm:$0xff] %vm2498, %v2496
    // Predicated region
    $region30: #{tpu_custom_call.1} parent=1 // pred_check
      _
    $region31: #{tpu_custom_call.1} parent=1 // pred_check_branch
      %2501 = sbr.rel (0) target = $region33
    $region32: #{tpu_custom_call.1} parent=1 // pred_region
      %s2503 = ssub.s32 128, 128
      %2504 = vsyncadd [#allocation9], %s2503
      %s2506 = sshll.u32 [#allocation10], 4
      %s2507 = int_to_ptr.vmem [resolvable:$true] %s2506
      %2509 = dma.vmem_to_hbm [thread:$0]  %s2507, 128, %s6, [#allocation9]
    $region33: #{tpu_custom_call.1} parent=1 // pred_fallthru
      _
    // Predicated region
    $region34: #{tpu_custom_call.1} parent=1 // pred_check
      _
    $region35: #{tpu_custom_call.1} parent=1 // pred_check_branch
      %2511 = sbr.rel (0) target = $region37
    $region36: #{tpu_custom_call.1} parent=1 // pred_region
      %2512 = dma.done [#allocation9], 128
    $region37: #{tpu_custom_call.1} parent=1 // pred_fallthru
      _
    %2513 = vsyncpa [#allocation8], 1
    %2514 = vsyncpa [#allocation9], 1

</llo_original>
